<compile_context>
chip_gen: v6e
topology: v6e:2x2x1
jax: 0.10.0
libtpu: 0.0.40
codegen_flags: <defaults>
</compile_context>

<pallas_src>
import numpy as np
import jax
import jax.numpy as jnp
from jax import lax
from jax.experimental import pallas as pl
from jax.experimental.pallas import tpu as pltpu


def _round_up(x, m):
    return ((x + m - 1) // m) * m


# ---------------------------------------------------------------------------
# Kernel: streamed, skewed 2-layer LSTM recurrence + MLP head.
# ---------------------------------------------------------------------------
def network_kernel(x_ref,                 # (Tt, Bt, E)  chunk of embedded tokens (time-major, f32)
                   wih1_ref,              # (E, 4*Up)    bf16, gate blocks lane-128 padded
                   whh1_ref,              # (Up, 4*Up)   bf16
                   b1_ref,                # (1, 4*Up)    f32, b_ih + b_hh
                   wih2_ref,              # (Up, 4*H2)   bf16
                   whh2_ref,              # (H2, 4*H2)   bf16
                   b2_ref,                # (1, 4*H2)    f32
                   fc1w_ref, fc1b_ref,    # (H2, F1p), (1, F1p)   f32
                   fc2w_ref, fc2b_ref,    # (F1p, Cp), (1, Cp)    f32
                   out_ref,               # (Bt, Cp)
                   h1_ref, c1_ref, h2_ref, c2_ref,   # carried LSTM state (VMEM scratch)
                   xw_ref):               # (Tt, Bt, 4*Up) precomputed input projection
    Tt, Bt, E = x_ref.shape
    Up = whh1_ref.shape[0]          # padded lstm1 hidden (128-aligned)
    H2 = whh2_ref.shape[0]          # lstm2 hidden (128)
    t_idx = pl.program_id(1)        # time-chunk index (innermost, "arbitrary")

    # ---- init carried state on the first sequence chunk of this batch tile ---
    @pl.when(t_idx == 0)
    def _():
        h1_ref[...] = jnp.zeros_like(h1_ref)
        c1_ref[...] = jnp.zeros_like(c1_ref)
        h2_ref[...] = jnp.zeros_like(h2_ref)
        c2_ref[...] = jnp.zeros_like(c2_ref)

    # ---- LSTM1 input projection for the whole chunk: one MXU matmul ----------
    x_flat = x_ref[...].reshape(Tt * Bt, E).astype(jnp.bfloat16)
    xw = jnp.dot(x_flat, wih1_ref[...], preferred_element_type=jnp.float32) + b1_ref[...]
    xw_ref[...] = xw.reshape(Tt, Bt, 4 * Up)

    # ---- hoisted loop invariants (no per-step broadcasts / weight reloads) ---
    whh1 = whh1_ref[...]
    wih2 = wih2_ref[...]
    whh2 = whh2_ref[...]
    b2b = jnp.broadcast_to(b2_ref[...], (Bt, 4 * H2))

    def gate_split(g, H):
        # PyTorch gate order i, f, g, o; H is lane-128 aligned -> free slices.
        i = jax.nn.sigmoid(g[:, 0 * H:1 * H])
        f = jax.nn.sigmoid(g[:, 1 * H:2 * H])
        gg = jnp.tanh(g[:, 2 * H:3 * H])
        o = jax.nn.sigmoid(g[:, 3 * H:4 * H])
        return i, f, gg, o

    def lstm2_step(h1_in, h2, c2):
        # Two dots (no concat): h1 @ Wih2 + h2 @ Whh2 + b2.
        g2 = (jnp.dot(h1_in.astype(jnp.bfloat16), wih2, preferred_element_type=jnp.float32)
              + jnp.dot(h2.astype(jnp.bfloat16), whh2, preferred_element_type=jnp.float32)
              + b2b)
        i2, f2, gg2, o2 = gate_split(g2, H2)
        c2n = f2 * c2 + i2 * gg2
        h2n = o2 * jnp.tanh(c2n)
        return h2n, c2n

    def step(t, carry):
        # Skewed schedule: this iteration computes LSTM1(t) and LSTM2(t-1);
        # both depend only on h1[t-1] / h2[t-2], so their chains overlap.
        h1, c1, h2, c2 = carry
        # LSTM1(t): input projection precomputed -> only the recurrent matmul.
        g1 = xw_ref[t] + jnp.dot(h1.astype(jnp.bfloat16), whh1,
                                 preferred_element_type=jnp.float32)
        i1, f1, gg1, o1 = gate_split(g1, Up)
        c1n = f1 * c1 + i1 * gg1
        h1n = o1 * jnp.tanh(c1n)
        # LSTM2(t-1): consumes h1 of the previous step.  The very first global
        # step has no previous h1, so its (bogus) update is discarded.
        h2c, c2c = lstm2_step(h1, h2, c2)
        is_global_first = (t_idx == 0) & (t == 0)
        h2n = jnp.where(is_global_first, h2, h2c)
        c2n = jnp.where(is_global_first, c2, c2c)
        return (h1n, c1n, h2n, c2n)

    init = (h1_ref[...], c1_ref[...], h2_ref[...], c2_ref[...])
    h1, c1, h2, c2 = lax.fori_loop(0, Tt, step, init, unroll=min(Tt, 8))
    h1_ref[...] = h1
    c1_ref[...] = c1
    h2_ref[...] = h2
    c2_ref[...] = c2

    # ---- last chunk: catch-up LSTM2 step for the final timestep, then head ---
    @pl.when(t_idx == pl.num_programs(1) - 1)
    def _():
        h2f, _ = lstm2_step(h1, h2, c2)      # h2 at the final timestep
        # fc1 -> dropout(p=0.5, eval mode => identity) -> relu -> fc2
        z = jnp.dot(h2f, fc1w_ref[...], preferred_element_type=jnp.float32) + fc1b_ref[...]
        z = jnp.maximum(z, 0.0)
        out_ref[...] = (jnp.dot(z, fc2w_ref[...], preferred_element_type=jnp.float32)
                        + fc2b_ref[...])


# ---------------------------------------------------------------------------
# Parameter construction (deterministic, PyTorch-default-style init) and
# kernel-layout preparation (transposed, padded, bf16 matmul operands).
# ---------------------------------------------------------------------------
def init_raw_params(key, total_words, embedding_len, units, num_class):
    H2 = 128
    keys = jax.random.split(key, 16)
    k = iter(keys)

    def unif(rng, shape, bound):
        return jax.random.uniform(rng, shape, jnp.float32, -bound, bound)

    p = {}
    p["embedding"] = jax.random.normal(next(k), (total_words, embedding_len), jnp.float32)
    # Weights stored pre-transposed (in_features, 4*hidden); biases summed b_ih + b_hh.
    s1 = 1.0 / np.sqrt(units)
    p["wih1"] = unif(next(k), (embedding_len, 4 * units), s1)
    p["whh1"] = unif(next(k), (units, 4 * units), s1)
    p["b1"] = unif(next(k), (1, 4 * units), s1) + unif(next(k), (1, 4 * units), s1)
    s2 = 1.0 / np.sqrt(H2)
    p["wih2"] = unif(next(k), (units, 4 * H2), s2)
    p["whh2"] = unif(next(k), (H2, 4 * H2), s2)
    p["b2"] = unif(next(k), (1, 4 * H2), s2) + unif(next(k), (1, 4 * H2), s2)
    p["fc1w"] = unif(next(k), (H2, 64), s2)
    p["fc1b"] = unif(next(k), (1, 64), s2)
    sf2 = 1.0 / np.sqrt(64)
    p["fc2w"] = unif(next(k), (64, num_class), sf2)
    p["fc2b"] = unif(next(k), (1, num_class), sf2)
    return p


def _pad_gate_cols(w, H, Hp):
    # (in, 4H) -> (in, 4*Hp): pad each gate block i/f/g/o from H to Hp columns.
    if H == Hp:
        return w
    blocks = [jnp.pad(w[:, g * H:(g + 1) * H], ((0, 0), (0, Hp - H))) for g in range(4)]
    return jnp.concatenate(blocks, axis=1)


def prepare_kernel_params(raw, units):
    H2 = raw["whh2"].shape[0]            # 128
    U = units
    Up = _round_up(U, 128)               # lane-128-aligned gate blocks
    C = raw["fc2w"].shape[1]
    Cp = _round_up(C, 128)               # lane-dense output slab
    F1 = raw["fc1w"].shape[1]            # 64
    F1p = _round_up(F1, 128)             # lane-dense fc1 activations

    bf16 = jnp.bfloat16
    kp = {}
    kp["embedding"] = raw["embedding"]
    # LSTM1: pad gates U->Up and recurrent input U->Up (padded hidden units
    # provably stay exactly zero, so numerics are unchanged). bf16 operands.
    kp["wih1"] = _pad_gate_cols(raw["wih1"], U, Up).astype(bf16)          # (E, 4Up)
    whh1 = jnp.pad(raw["whh1"], ((0, Up - U), (0, 0)))
    kp["whh1"] = _pad_gate_cols(whh1, U, Up).astype(bf16)                 # (Up, 4Up)
    kp["b1"] = _pad_gate_cols(raw["b1"], U, Up)                           # (1, 4Up) f32
    # LSTM2: keep the two matrices separate (no per-step concat in the kernel).
    kp["wih2"] = jnp.pad(raw["wih2"], ((0, Up - U), (0, 0))).astype(bf16)  # (Up, 4H2)
    kp["whh2"] = raw["whh2"].astype(bf16)                                  # (H2, 4H2)
    kp["b2"] = raw["b2"]                                                   # (1, 4H2) f32
    # Head stays f32 (runs once); fc1 width padded 64 -> 128 for lane-dense z.
    kp["fc1w"] = jnp.pad(raw["fc1w"], ((0, 0), (0, F1p - F1)))             # (H2, F1p)
    kp["fc1b"] = jnp.pad(raw["fc1b"], ((0, 0), (0, F1p - F1)))             # (1, F1p)
    kp["fc2w"] = jnp.pad(raw["fc2w"], ((0, F1p - F1), (0, Cp - C)))        # (F1p, Cp)
    kp["fc2b"] = jnp.pad(raw["fc2b"], ((0, 0), (0, Cp - C)))               # (1, Cp)
    kp["num_class"] = C
    kp["units_pad"] = Up
    return kp


# ---------------------------------------------------------------------------
# chunk_t selection: largest divisor of T whose per-chunk VMEM footprint
# (xw scratch + double-buffered x chunk) fits a conservative budget that
# works across v5e / v6e / v7x.
# ---------------------------------------------------------------------------
def _pick_chunk_t(T, Bt, E, Up, budget_bytes=16 << 20, max_chunk=256):
    def bytes_for(ct):
        return ct * Bt * (4 * Up) * 4 + 2 * ct * Bt * E * 4
    best = 1
    for ct in range(1, min(T, max_chunk) + 1):
        if T % ct == 0 and bytes_for(ct) <= budget_bytes:
            best = ct
    return best


# ---------------------------------------------------------------------------
# Wrapper: time-major embedding gather + gridded pallas_call.
# ---------------------------------------------------------------------------
def network_forward(tokens, kparams, *, chunk_t=None):
    B, T = tokens.shape
    emb = kparams["embedding"]
    E = emb.shape[1]
    Up = kparams["units_pad"]
    H2 = kparams["whh2"].shape[0]
    C = kparams["num_class"]
    Cp = kparams["fc2w"].shape[1]

    # TODO(synk): embedding lookup is an XLA gather outside the kernel; gather
    # straight into time-major layout by transposing the tiny int token matrix.
    x = jnp.take(emb, tokens.T, axis=0).astype(jnp.float32)        # (T, B, E)

    # Pad batch to the f32 sublane multiple (8) so (B, .) tiles are dense.
    Bp = max(8, _round_up(B, 8))
    if Bp != B:
        x = jnp.pad(x, ((0, 0), (0, Bp - B), (0, 0)))

    # Batch tiling for the leading "parallel" grid axis (v7x: 2 TensorCores).
    if Bp >= 16 and (Bp // 2) % 8 == 0:
        Bt = Bp // 2
    else:
        Bt = Bp
    n_btiles = Bp // Bt

    # Stream the sequence over the innermost ("arbitrary") grid axis in chunks;
    # LSTM state is carried in VMEM scratch.  Never fall back to "whole T in
    # VMEM": pick the largest divisor of T that fits the VMEM budget.
    if chunk_t is None or T % chunk_t != 0:
        chunk_t = _pick_chunk_t(T, Bt, E, Up)
    assert T % chunk_t == 0
    n_chunks = T // chunk_t

    # Explicit VMEM limit derived from the actual footprint (lifts the 16/32
    # MiB scoped defaults while staying under v7x's 64 MiB physical VMEM).
    weight_keys = ("wih1", "whh1", "b1", "wih2", "whh2", "b2",
                   "fc1w", "fc1b", "fc2w", "fc2b")
    weight_bytes = sum(int(np.prod(kparams[k].shape)) * kparams[k].dtype.itemsize
                       for k in weight_keys)
    x_chunk_bytes = chunk_t * Bt * E * 4
    xw_bytes = chunk_t * Bt * 4 * Up * 4
    state_bytes = (2 * Bt * Up + 2 * Bt * H2) * 4
    out_bytes = Bt * Cp * 4
    needed = 2 * x_chunk_bytes + 2 * weight_bytes + xw_bytes + state_bytes + 2 * out_bytes
    vmem_limit = int(min(max(needed * 1.25 + (4 << 20), 16 << 20), 56 << 20))

    def weight_spec(shape):
        return pl.BlockSpec(shape, lambda b, t: (0,) * len(shape))

    grid_spec = pltpu.PrefetchScalarGridSpec(
        num_scalar_prefetch=0,
        grid=(n_btiles, n_chunks),
        in_specs=[
            pl.BlockSpec((chunk_t, Bt, E), lambda b, t: (t, b, 0)),   # x chunks
            weight_spec(kparams["wih1"].shape),
            weight_spec(kparams["whh1"].shape),
            weight_spec(kparams["b1"].shape),
            weight_spec(kparams["wih2"].shape),
            weight_spec(kparams["whh2"].shape),
            weight_spec(kparams["b2"].shape),
            weight_spec(kparams["fc1w"].shape),
            weight_spec(kparams["fc1b"].shape),
            weight_spec(kparams["fc2w"].shape),
            weight_spec(kparams["fc2b"].shape),
        ],
        out_specs=pl.BlockSpec((Bt, Cp), lambda b, t: (b, 0)),
        scratch_shapes=[
            pltpu.VMEM((Bt, Up), jnp.float32),                 # h1
            pltpu.VMEM((Bt, Up), jnp.float32),                 # c1
            pltpu.VMEM((Bt, H2), jnp.float32),                 # h2
            pltpu.VMEM((Bt, H2), jnp.float32),                 # c2
            pltpu.VMEM((chunk_t, Bt, 4 * Up), jnp.float32),    # precomputed x@Wih1 + b1
        ],
    )

    out = pl.pallas_call(
        network_kernel,
        out_shape=jax.ShapeDtypeStruct((Bp, Cp), jnp.float32),
        grid_spec=grid_spec,
        compiler_params=pltpu.CompilerParams(
            dimension_semantics=("parallel", "arbitrary"),   # batch tiles || ; time carries state
            vmem_limit_bytes=vmem_limit),
    )(x,
      kparams["wih1"], kparams["whh1"], kparams["b1"],
      kparams["wih2"], kparams["whh2"], kparams["b2"],
      kparams["fc1w"], kparams["fc1b"], kparams["fc2w"], kparams["fc2b"])

    # Match PyTorch output shape: h is (num_layers=1, B, 128) -> (1, B, num_class).
    return out[:B, :C][None, :, :]


# ---------------------------------------------------------------------------
# Pure-JAX reference of the PyTorch forward pass (unpadded, high precision).
# ---------------------------------------------------------------------------
def reference_forward(tokens, raw):
    P = lax.Precision.HIGHEST
    x = jnp.take(raw["embedding"], tokens.T, axis=0).astype(jnp.float32)   # (T, B, E)
    T, B, _ = x.shape
    U = raw["whh1"].shape[0]
    H2 = raw["whh2"].shape[0]

    def cell(x_t, h, c, wih, whh, b, H):
        g = jnp.dot(x_t, wih, precision=P) + jnp.dot(h, whh, precision=P) + b
        i = jax.nn.sigmoid(g[:, :H])
        f = jax.nn.sigmoid(g[:, H:2 * H])
        gg = jnp.tanh(g[:, 2 * H:3 * H])
        o = jax.nn.sigmoid(g[:, 3 * H:])
        c = f * c + i * gg
        h = o * jnp.tanh(c)
        return h, c

    h1 = jnp.zeros((B, U), jnp.float32); c1 = jnp.zeros((B, U), jnp.float32)
    h2 = jnp.zeros((B, H2), jnp.float32); c2 = jnp.zeros((B, H2), jnp.float32)
    for t in range(T):
        h1, c1 = cell(x[t], h1, c1, raw["wih1"], raw["whh1"], raw["b1"], U)
        h2, c2 = cell(h1, h2, c2, raw["wih2"], raw["whh2"], raw["b2"], H2)
    z = jnp.maximum(jnp.dot(h2, raw["fc1w"], precision=P) + raw["fc1b"], 0.0)
    out = jnp.dot(z, raw["fc2w"], precision=P) + raw["fc2b"]
    return out[None, :, :]


if __name__ == "__main__":
    # Small, module-consistent shapes.
    total_words, embedding_len, units, num_class = 100, 32, 64, 4
    B, T = 4, 8

    key = jax.random.PRNGKey(0)
    k_tok, k_par = jax.random.split(key)
    tokens = jax.random.randint(k_tok, (B, T), 0, total_words, dtype=jnp.int32)
    raw = init_raw_params(k_par, total_words, embedding_len, units, num_class)
    kparams = prepare_kernel_params(raw, units)

    # chunk_t=4 -> 2 grid steps, exercising the carried-state / skewed-layer
    # streaming path across a chunk boundary.
    out_f32 = network_forward(tokens, kparams, chunk_t=4)
    out_f32 = jax.block_until_ready(out_f32)

    # Correctness check against the pure-JAX float32 reference.  Tolerance is
    # loosened vs. pure-f32 because the recurrent matmul operands are bf16
    # (f32 accumulation); observed error is O(1e-3), well inside 3e-2.
    ref = jax.block_until_ready(reference_forward(tokens, raw))
    assert out_f32.shape == (1, B, num_class)
    assert np.allclose(np.asarray(out_f32), np.asarray(ref), atol=3e-2, rtol=3e-2), (
        float(np.max(np.abs(np.asarray(out_f32) - np.asarray(ref)))))

    # TODO(synk): the module's final `.type(torch.float64)` is done on host with
    # numpy (TPU has no native float64 compute); values match the f32 compute.
    out_f64 = np.asarray(out_f32, dtype=np.float64)
    assert out_f64.shape == (1, B, num_class) and out_f64.dtype == np.float64

    print("KERNEL_OK")
</pallas_src>

<mosaic_0001>
module attributes {stable_mosaic.version = 11 : i64} {
  func.func @network_kernel(%arg0: i32, %arg1: i32, %arg2: memref<4x8x32xf32, #tpu.memory_space<vmem>>, %arg3: memref<32x512xbf16, #tpu.memory_space<vmem>>, %arg4: memref<128x512xbf16, #tpu.memory_space<vmem>>, %arg5: memref<1x512xf32, #tpu.memory_space<vmem>>, %arg6: memref<128x512xbf16, #tpu.memory_space<vmem>>, %arg7: memref<128x512xbf16, #tpu.memory_space<vmem>>, %arg8: memref<1x512xf32, #tpu.memory_space<vmem>>, %arg9: memref<128x128xf32, #tpu.memory_space<vmem>>, %arg10: memref<1x128xf32, #tpu.memory_space<vmem>>, %arg11: memref<128x128xf32, #tpu.memory_space<vmem>>, %arg12: memref<1x128xf32, #tpu.memory_space<vmem>>, %arg13: memref<8x128xf32, #tpu.memory_space<vmem>>, %arg14: memref<8x128xf32, #tpu.memory_space<vmem>>, %arg15: memref<8x128xf32, #tpu.memory_space<vmem>>, %arg16: memref<8x128xf32, #tpu.memory_space<vmem>>, %arg17: memref<8x128xf32, #tpu.memory_space<vmem>>, %arg18: memref<4x8x512xf32, #tpu.memory_space<vmem>>) attributes {dimension_semantics = [#tpu.dimension_semantics<parallel>, #tpu.dimension_semantics<arbitrary>], iteration_bounds = array<i64: 1, 2>, scalar_prefetch = 0 : i64, scratch_operands = 5 : i64, tpu.core_type = #tpu.core_type<tc>, window_params = [{transform_indices = @transform_0, window_bounds = array<i64: 4, 8, 32>}, {pipeline_mode = #tpu.pipeline_mode<synchronous>, transform_indices = @transform_1, window_bounds = array<i64: 32, 512>}, {pipeline_mode = #tpu.pipeline_mode<synchronous>, transform_indices = @transform_2, window_bounds = array<i64: 128, 512>}, {pipeline_mode = #tpu.pipeline_mode<synchronous>, transform_indices = @transform_3, window_bounds = array<i64: 1, 512>}, {pipeline_mode = #tpu.pipeline_mode<synchronous>, transform_indices = @transform_4, window_bounds = array<i64: 128, 512>}, {pipeline_mode = #tpu.pipeline_mode<synchronous>, transform_indices = @transform_5, window_bounds = array<i64: 128, 512>}, {pipeline_mode = #tpu.pipeline_mode<synchronous>, transform_indices = @transform_6, window_bounds = array<i64: 1, 512>}, {pipeline_mode = #tpu.pipeline_mode<synchronous>, transform_indices = @transform_7, window_bounds = array<i64: 128, 128>}, {pipeline_mode = #tpu.pipeline_mode<synchronous>, transform_indices = @transform_8, window_bounds = array<i64: 1, 128>}, {pipeline_mode = #tpu.pipeline_mode<synchronous>, transform_indices = @transform_9, window_bounds = array<i64: 128, 128>}, {pipeline_mode = #tpu.pipeline_mode<synchronous>, transform_indices = @transform_10, window_bounds = array<i64: 1, 128>}, {transform_indices = @transform_11, window_bounds = array<i64: 8, 128>}]} {
    %c0_i32 = arith.constant 0 : i32
    %0 = arith.cmpi eq, %arg1, %c0_i32 : i32
    %1 = arith.extui %0 : i1 to i32
    %c0_i32_0 = arith.constant 0 : i32
    %2 = arith.cmpi ne, %1, %c0_i32_0 : i32
    scf.if %2 {
      %cst_89 = arith.constant 0.000000e+00 : f32
      %298 = vector.broadcast %cst_89 : f32 to vector<8x128xf32>
      %c0_90 = arith.constant 0 : index
      %c0_91 = arith.constant 0 : index
      %299 = vector.load %arg14[%c0_90, %c0_91] : memref<8x128xf32, #tpu.memory_space<vmem>>, vector<8x128xf32>
      tpu.vector_store %arg14[%c0_90, %c0_91], %298 {strides = array<i32>} : memref<8x128xf32, #tpu.memory_space<vmem>>, vector<8x128xf32>,
      %cst_92 = arith.constant 0.000000e+00 : f32
      %300 = vector.broadcast %cst_92 : f32 to vector<8x128xf32>
      %c0_93 = arith.constant 0 : index
      %c0_94 = arith.constant 0 : index
      %301 = vector.load %arg15[%c0_93, %c0_94] : memref<8x128xf32, #tpu.memory_space<vmem>>, vector<8x128xf32>
      tpu.vector_store %arg15[%c0_93, %c0_94], %300 {strides = array<i32>} : memref<8x128xf32, #tpu.memory_space<vmem>>, vector<8x128xf32>,
      %cst_95 = arith.constant 0.000000e+00 : f32
      %302 = vector.broadcast %cst_95 : f32 to vector<8x128xf32>
      %c0_96 = arith.constant 0 : index
      %c0_97 = arith.constant 0 : index
      %303 = vector.load %arg16[%c0_96, %c0_97] : memref<8x128xf32, #tpu.memory_space<vmem>>, vector<8x128xf32>
      tpu.vector_store %arg16[%c0_96, %c0_97], %302 {strides = array<i32>} : memref<8x128xf32, #tpu.memory_space<vmem>>, vector<8x128xf32>,
      %cst_98 = arith.constant 0.000000e+00 : f32
      %304 = vector.broadcast %cst_98 : f32 to vector<8x128xf32>
      %c0_99 = arith.constant 0 : index
      %c0_100 = arith.constant 0 : index
      %305 = vector.load %arg17[%c0_99, %c0_100] : memref<8x128xf32, #tpu.memory_space<vmem>>, vector<8x128xf32>
      tpu.vector_store %arg17[%c0_99, %c0_100], %304 {strides = array<i32>} : memref<8x128xf32, #tpu.memory_space<vmem>>, vector<8x128xf32>,
    } else {
    }
    %c0 = arith.constant 0 : index
    %c0_1 = arith.constant 0 : index
    %c0_2 = arith.constant 0 : index
    %3 = vector.load %arg2[%c0, %c0_1, %c0_2] : memref<4x8x32xf32, #tpu.memory_space<vmem>>, vector<4x8x32xf32>
    %4 = vector.shape_cast %3 : vector<4x8x32xf32> to vector<32x32xf32>
    %5 = arith.truncf %4 : vector<32x32xf32> to vector<32x32xbf16>
    %c0_3 = arith.constant 0 : index
    %c0_4 = arith.constant 0 : index
    %6 = vector.load %arg3[%c0_3, %c0_4] : memref<32x512xbf16, #tpu.memory_space<vmem>>, vector<32x512xbf16>
    %cst = arith.constant dense<0.000000e+00> : vector<32x512xf32>
    %7 = tpu.matmul %5, %6, %cst {dimension_numbers = #tpu.dot_dimension_numbers<[1], [0], [0], [1], [0, 0, 1, 1], [], []>} : vector<32x32xbf16>, vector<32x512xbf16>, vector<32x512xf32> -> vector<32x512xf32>
    %c0_5 = arith.constant 0 : index
    %c0_6 = arith.constant 0 : index
    %8 = vector.load %arg5[%c0_5, %c0_6] : memref<1x512xf32, #tpu.memory_space<vmem>>, vector<1x512xf32>
    %9 = vector.broadcast %8 : vector<1x512xf32> to vector<32x512xf32>
    %10 = arith.addf %7, %9 : vector<32x512xf32>
    %11 = vector.shape_cast %10 : vector<32x512xf32> to vector<4x8x512xf32>
    %c0_7 = arith.constant 0 : index
    %c0_8 = arith.constant 0 : index
    %c0_9 = arith.constant 0 : index
    %12 = vector.load %arg18[%c0_7, %c0_8, %c0_9] : memref<4x8x512xf32, #tpu.memory_space<vmem>>, vector<4x8x512xf32>
    tpu.vector_store %arg18[%c0_7, %c0_8, %c0_9], %11 {strides = array<i32>} : memref<4x8x512xf32, #tpu.memory_space<vmem>>, vector<4x8x512xf32>,
    %c0_10 = arith.constant 0 : index
    %c0_11 = arith.constant 0 : index
    %13 = vector.load %arg4[%c0_10, %c0_11] : memref<128x512xbf16, #tpu.memory_space<vmem>>, vector<128x512xbf16>
    %c0_12 = arith.constant 0 : index
    %c0_13 = arith.constant 0 : index
    %14 = vector.load %arg6[%c0_12, %c0_13] : memref<128x512xbf16, #tpu.memory_space<vmem>>, vector<128x512xbf16>
    %c0_14 = arith.constant 0 : index
    %c0_15 = arith.constant 0 : index
    %15 = vector.load %arg7[%c0_14, %c0_15] : memref<128x512xbf16, #tpu.memory_space<vmem>>, vector<128x512xbf16>
    %c0_16 = arith.constant 0 : index
    %c0_17 = arith.constant 0 : index
    %16 = vector.load %arg8[%c0_16, %c0_17] : memref<1x512xf32, #tpu.memory_space<vmem>>, vector<1x512xf32>
    %17 = vector.shape_cast %16 : vector<1x512xf32> to vector<1x512xf32>
    %18 = vector.broadcast %17 : vector<1x512xf32> to vector<8x512xf32>
    %c0_18 = arith.constant 0 : index
    %c0_19 = arith.constant 0 : index
    %19 = vector.load %arg14[%c0_18, %c0_19] : memref<8x128xf32, #tpu.memory_space<vmem>>, vector<8x128xf32>
    %c0_20 = arith.constant 0 : index
    %c0_21 = arith.constant 0 : index
    %20 = vector.load %arg15[%c0_20, %c0_21] : memref<8x128xf32, #tpu.memory_space<vmem>>, vector<8x128xf32>
    %c0_22 = arith.constant 0 : index
    %c0_23 = arith.constant 0 : index
    %21 = vector.load %arg16[%c0_22, %c0_23] : memref<8x128xf32, #tpu.memory_space<vmem>>, vector<8x128xf32>
    %c0_24 = arith.constant 0 : index
    %c0_25 = arith.constant 0 : index
    %22 = vector.load %arg17[%c0_24, %c0_25] : memref<8x128xf32, #tpu.memory_space<vmem>>, vector<8x128xf32>
    %c0_i32_26 = arith.constant 0 : i32
    %23 = arith.index_cast %c0_i32_26 : i32 to index
    %c0_27 = arith.constant 0 : index
    %c0_28 = arith.constant 0 : index
    %24 = vector.load %arg18[%23, %c0_27, %c0_28] : memref<4x8x512xf32, #tpu.memory_space<vmem>>, vector<1x8x512xf32>
    %25 = vector.shape_cast %24 : vector<1x8x512xf32> to vector<8x512xf32>
    %26 = arith.truncf %19 : vector<8x128xf32> to vector<8x128xbf16>
    %cst_29 = arith.constant dense<0.000000e+00> : vector<8x512xf32>
    %27 = tpu.matmul %26, %13, %cst_29 {dimension_numbers = #tpu.dot_dimension_numbers<[1], [0], [0], [1], [0, 0, 1, 1], [], []>} : vector<8x128xbf16>, vector<128x512xbf16>, vector<8x512xf32> -> vector<8x512xf32>
    %28 = arith.addf %25, %27 : vector<8x512xf32>
    %29 = vector.extract_strided_slice %28 {offsets = [0, 0], sizes = [8, 128], strides = [1, 1]} : vector<8x512xf32> to vector<8x128xf32>
    %30 = arith.negf %29 : vector<8x128xf32>
    %31 = math.exp %30 : vector<8x128xf32>
    %cst_30 = arith.constant 1.000000e+00 : f32
    %32 = vector.broadcast %cst_30 : f32 to vector<8x128xf32>
    %33 = arith.addf %32, %31 : vector<8x128xf32>
    %34 = arith.divf %32, %33 : vector<8x128xf32>
    %35 = vector.extract_strided_slice %28 {offsets = [0, 128], sizes = [8, 128], strides = [1, 1]} : vector<8x512xf32> to vector<8x128xf32>
    %36 = arith.negf %35 : vector<8x128xf32>
    %37 = math.exp %36 : vector<8x128xf32>
    %cst_31 = arith.constant 1.000000e+00 : f32
    %38 = vector.broadcast %cst_31 : f32 to vector<8x128xf32>
    %39 = arith.addf %38, %37 : vector<8x128xf32>
    %40 = arith.divf %38, %39 : vector<8x128xf32>
    %41 = vector.extract_strided_slice %28 {offsets = [0, 256], sizes = [8, 128], strides = [1, 1]} : vector<8x512xf32> to vector<8x128xf32>
    %42 = math.tanh %41 : vector<8x128xf32>
    %43 = vector.extract_strided_slice %28 {offsets = [0, 384], sizes = [8, 128], strides = [1, 1]} : vector<8x512xf32> to vector<8x128xf32>
    %44 = arith.negf %43 : vector<8x128xf32>
    %45 = math.exp %44 : vector<8x128xf32>
    %cst_32 = arith.constant 1.000000e+00 : f32
    %46 = vector.broadcast %cst_32 : f32 to vector<8x128xf32>
    %47 = arith.addf %46, %45 : vector<8x128xf32>
    %48 = arith.divf %46, %47 : vector<8x128xf32>
    %49 = arith.mulf %40, %20 : vector<8x128xf32>
    %50 = arith.mulf %34, %42 : vector<8x128xf32>
    %51 = arith.addf %49, %50 : vector<8x128xf32>
    %52 = math.tanh %51 : vector<8x128xf32>
    %53 = arith.mulf %48, %52 : vector<8x128xf32>
    %54 = arith.truncf %19 : vector<8x128xf32> to vector<8x128xbf16>
    %cst_33 = arith.constant dense<0.000000e+00> : vector<8x512xf32>
    %55 = tpu.matmul %54, %14, %cst_33 {dimension_numbers = #tpu.dot_dimension_numbers<[1], [0], [0], [1], [0, 0, 1, 1], [], []>} : vector<8x128xbf16>, vector<128x512xbf16>, vector<8x512xf32> -> vector<8x512xf32>
    %56 = arith.truncf %21 : vector<8x128xf32> to vector<8x128xbf16>
    %cst_34 = arith.constant dense<0.000000e+00> : vector<8x512xf32>
    %57 = tpu.matmul %56, %15, %cst_34 {dimension_numbers = #tpu.dot_dimension_numbers<[1], [0], [0], [1], [0, 0, 1, 1], [], []>} : vector<8x128xbf16>, vector<128x512xbf16>, vector<8x512xf32> -> vector<8x512xf32>
    %58 = arith.addf %55, %57 : vector<8x512xf32>
    %59 = arith.addf %58, %18 : vector<8x512xf32>
    %60 = vector.extract_strided_slice %59 {offsets = [0, 0], sizes = [8, 128], strides = [1, 1]} : vector<8x512xf32> to vector<8x128xf32>
    %61 = arith.negf %60 : vector<8x128xf32>
    %62 = math.exp %61 : vector<8x128xf32>
    %cst_35 = arith.constant 1.000000e+00 : f32
    %63 = vector.broadcast %cst_35 : f32 to vector<8x128xf32>
    %64 = arith.addf %63, %62 : vector<8x128xf32>
    %65 = arith.divf %63, %64 : vector<8x128xf32>
    %66 = vector.extract_strided_slice %59 {offsets = [0, 128], sizes = [8, 128], strides = [1, 1]} : vector<8x512xf32> to vector<8x128xf32>
    %67 = arith.negf %66 : vector<8x128xf32>
    %68 = math.exp %67 : vector<8x128xf32>
    %cst_36 = arith.constant 1.000000e+00 : f32
    %69 = vector.broadcast %cst_36 : f32 to vector<8x128xf32>
    %70 = arith.addf %69, %68 : vector<8x128xf32>
    %71 = arith.divf %69, %70 : vector<8x128xf32>
    %72 = vector.extract_strided_slice %59 {offsets = [0, 256], sizes = [8, 128], strides = [1, 1]} : vector<8x512xf32> to vector<8x128xf32>
    %73 = math.tanh %72 : vector<8x128xf32>
    %74 = vector.extract_strided_slice %59 {offsets = [0, 384], sizes = [8, 128], strides = [1, 1]} : vector<8x512xf32> to vector<8x128xf32>
    %75 = arith.negf %74 : vector<8x128xf32>
    %76 = math.exp %75 : vector<8x128xf32>
    %cst_37 = arith.constant 1.000000e+00 : f32
    %77 = vector.broadcast %cst_37 : f32 to vector<8x128xf32>
    %78 = arith.addf %77, %76 : vector<8x128xf32>
    %79 = arith.divf %77, %78 : vector<8x128xf32>
    %80 = arith.mulf %71, %22 : vector<8x128xf32>
    %81 = arith.mulf %65, %73 : vector<8x128xf32>
    %82 = arith.addf %80, %81 : vector<8x128xf32>
    %83 = math.tanh %82 : vector<8x128xf32>
    %84 = arith.mulf %79, %83 : vector<8x128xf32>
    %c0_i32_38 = arith.constant 0 : i32
    %85 = arith.cmpi eq, %arg1, %c0_i32_38 : i32
    %c0_i32_39 = arith.constant 0 : i32
    %86 = arith.cmpi eq, %c0_i32_26, %c0_i32_39 : i32
    %87 = arith.andi %85, %86 : i1
    %88 = arith.select %87, %21, %84 : vector<8x128xf32>
    %89 = arith.select %87, %22, %82 : vector<8x128xf32>
    %c1_i32 = arith.constant 1 : i32
    %90 = arith.index_cast %c1_i32 : i32 to index
    %c0_40 = arith.constant 0 : index
    %c0_41 = arith.constant 0 : index
    %91 = vector.load %arg18[%90, %c0_40, %c0_41] : memref<4x8x512xf32, #tpu.memory_space<vmem>>, vector<1x8x512xf32>
    %92 = vector.shape_cast %91 : vector<1x8x512xf32> to vector<8x512xf32>
    %93 = arith.truncf %53 : vector<8x128xf32> to vector<8x128xbf16>
    %cst_42 = arith.constant dense<0.000000e+00> : vector<8x512xf32>
    %94 = tpu.matmul %93, %13, %cst_42 {dimension_numbers = #tpu.dot_dimension_numbers<[1], [0], [0], [1], [0, 0, 1, 1], [], []>} : vector<8x128xbf16>, vector<128x512xbf16>, vector<8x512xf32> -> vector<8x512xf32>
    %95 = arith.addf %92, %94 : vector<8x512xf32>
    %96 = vector.extract_strided_slice %95 {offsets = [0, 0], sizes = [8, 128], strides = [1, 1]} : vector<8x512xf32> to vector<8x128xf32>
    %97 = arith.negf %96 : vector<8x128xf32>
    %98 = math.exp %97 : vector<8x128xf32>
    %cst_43 = arith.constant 1.000000e+00 : f32
    %99 = vector.broadcast %cst_43 : f32 to vector<8x128xf32>
    %100 = arith.addf %99, %98 : vector<8x128xf32>
    %101 = arith.divf %99, %100 : vector<8x128xf32>
    %102 = vector.extract_strided_slice %95 {offsets = [0, 128], sizes = [8, 128], strides = [1, 1]} : vector<8x512xf32> to vector<8x128xf32>
    %103 = arith.negf %102 : vector<8x128xf32>
    %104 = math.exp %103 : vector<8x128xf32>
    %cst_44 = arith.constant 1.000000e+00 : f32
    %105 = vector.broadcast %cst_44 : f32 to vector<8x128xf32>
    %106 = arith.addf %105, %104 : vector<8x128xf32>
    %107 = arith.divf %105, %106 : vector<8x128xf32>
    %108 = vector.extract_strided_slice %95 {offsets = [0, 256], sizes = [8, 128], strides = [1, 1]} : vector<8x512xf32> to vector<8x128xf32>
    %109 = math.tanh %108 : vector<8x128xf32>
    %110 = vector.extract_strided_slice %95 {offsets = [0, 384], sizes = [8, 128], strides = [1, 1]} : vector<8x512xf32> to vector<8x128xf32>
    %111 = arith.negf %110 : vector<8x128xf32>
    %112 = math.exp %111 : vector<8x128xf32>
    %cst_45 = arith.constant 1.000000e+00 : f32
    %113 = vector.broadcast %cst_45 : f32 to vector<8x128xf32>
    %114 = arith.addf %113, %112 : vector<8x128xf32>
    %115 = arith.divf %113, %114 : vector<8x128xf32>
    %116 = arith.mulf %107, %51 : vector<8x128xf32>
    %117 = arith.mulf %101, %109 : vector<8x128xf32>
    %118 = arith.addf %116, %117 : vector<8x128xf32>
    %119 = math.tanh %118 : vector<8x128xf32>
    %120 = arith.mulf %115, %119 : vector<8x128xf32>
    %121 = arith.truncf %53 : vector<8x128xf32> to vector<8x128xbf16>
    %cst_46 = arith.constant dense<0.000000e+00> : vector<8x512xf32>
    %122 = tpu.matmul %121, %14, %cst_46 {dimension_numbers = #tpu.dot_dimension_numbers<[1], [0], [0], [1], [0, 0, 1, 1], [], []>} : vector<8x128xbf16>, vector<128x512xbf16>, vector<8x512xf32> -> vector<8x512xf32>
    %123 = arith.truncf %88 : vector<8x128xf32> to vector<8x128xbf16>
    %cst_47 = arith.constant dense<0.000000e+00> : vector<8x512xf32>
    %124 = tpu.matmul %123, %15, %cst_47 {dimension_numbers = #tpu.dot_dimension_numbers<[1], [0], [0], [1], [0, 0, 1, 1], [], []>} : vector<8x128xbf16>, vector<128x512xbf16>, vector<8x512xf32> -> vector<8x512xf32>
    %125 = arith.addf %122, %124 : vector<8x512xf32>
    %126 = arith.addf %125, %18 : vector<8x512xf32>
    %127 = vector.extract_strided_slice %126 {offsets = [0, 0], sizes = [8, 128], strides = [1, 1]} : vector<8x512xf32> to vector<8x128xf32>
    %128 = arith.negf %127 : vector<8x128xf32>
    %129 = math.exp %128 : vector<8x128xf32>
    %cst_48 = arith.constant 1.000000e+00 : f32
    %130 = vector.broadcast %cst_48 : f32 to vector<8x128xf32>
    %131 = arith.addf %130, %129 : vector<8x128xf32>
    %132 = arith.divf %130, %131 : vector<8x128xf32>
    %133 = vector.extract_strided_slice %126 {offsets = [0, 128], sizes = [8, 128], strides = [1, 1]} : vector<8x512xf32> to vector<8x128xf32>
    %134 = arith.negf %133 : vector<8x128xf32>
    %135 = math.exp %134 : vector<8x128xf32>
    %cst_49 = arith.constant 1.000000e+00 : f32
    %136 = vector.broadcast %cst_49 : f32 to vector<8x128xf32>
    %137 = arith.addf %136, %135 : vector<8x128xf32>
    %138 = arith.divf %136, %137 : vector<8x128xf32>
    %139 = vector.extract_strided_slice %126 {offsets = [0, 256], sizes = [8, 128], strides = [1, 1]} : vector<8x512xf32> to vector<8x128xf32>
    %140 = math.tanh %139 : vector<8x128xf32>
    %141 = vector.extract_strided_slice %126 {offsets = [0, 384], sizes = [8, 128], strides = [1, 1]} : vector<8x512xf32> to vector<8x128xf32>
    %142 = arith.negf %141 : vector<8x128xf32>
    %143 = math.exp %142 : vector<8x128xf32>
    %cst_50 = arith.constant 1.000000e+00 : f32
    %144 = vector.broadcast %cst_50 : f32 to vector<8x128xf32>
    %145 = arith.addf %144, %143 : vector<8x128xf32>
    %146 = arith.divf %144, %145 : vector<8x128xf32>
    %147 = arith.mulf %138, %89 : vector<8x128xf32>
    %148 = arith.mulf %132, %140 : vector<8x128xf32>
    %149 = arith.addf %147, %148 : vector<8x128xf32>
    %150 = math.tanh %149 : vector<8x128xf32>
    %151 = arith.mulf %146, %150 : vector<8x128xf32>
    %c0_i32_51 = arith.constant 0 : i32
    %152 = arith.cmpi eq, %arg1, %c0_i32_51 : i32
    %c0_i32_52 = arith.constant 0 : i32
    %153 = arith.cmpi eq, %c1_i32, %c0_i32_52 : i32
    %154 = arith.andi %152, %153 : i1
    %155 = arith.select %154, %88, %151 : vector<8x128xf32>
    %156 = arith.select %154, %89, %149 : vector<8x128xf32>
    %c2_i32 = arith.constant 2 : i32
    %157 = arith.index_cast %c2_i32 : i32 to index
    %c0_53 = arith.constant 0 : index
    %c0_54 = arith.constant 0 : index
    %158 = vector.load %arg18[%157, %c0_53, %c0_54] : memref<4x8x512xf32, #tpu.memory_space<vmem>>, vector<1x8x512xf32>
    %159 = vector.shape_cast %158 : vector<1x8x512xf32> to vector<8x512xf32>
    %160 = arith.truncf %120 : vector<8x128xf32> to vector<8x128xbf16>
    %cst_55 = arith.constant dense<0.000000e+00> : vector<8x512xf32>
    %161 = tpu.matmul %160, %13, %cst_55 {dimension_numbers = #tpu.dot_dimension_numbers<[1], [0], [0], [1], [0, 0, 1, 1], [], []>} : vector<8x128xbf16>, vector<128x512xbf16>, vector<8x512xf32> -> vector<8x512xf32>
    %162 = arith.addf %159, %161 : vector<8x512xf32>
    %163 = vector.extract_strided_slice %162 {offsets = [0, 0], sizes = [8, 128], strides = [1, 1]} : vector<8x512xf32> to vector<8x128xf32>
    %164 = arith.negf %163 : vector<8x128xf32>
    %165 = math.exp %164 : vector<8x128xf32>
    %cst_56 = arith.constant 1.000000e+00 : f32
    %166 = vector.broadcast %cst_56 : f32 to vector<8x128xf32>
    %167 = arith.addf %166, %165 : vector<8x128xf32>
    %168 = arith.divf %166, %167 : vector<8x128xf32>
    %169 = vector.extract_strided_slice %162 {offsets = [0, 128], sizes = [8, 128], strides = [1, 1]} : vector<8x512xf32> to vector<8x128xf32>
    %170 = arith.negf %169 : vector<8x128xf32>
    %171 = math.exp %170 : vector<8x128xf32>
    %cst_57 = arith.constant 1.000000e+00 : f32
    %172 = vector.broadcast %cst_57 : f32 to vector<8x128xf32>
    %173 = arith.addf %172, %171 : vector<8x128xf32>
    %174 = arith.divf %172, %173 : vector<8x128xf32>
    %175 = vector.extract_strided_slice %162 {offsets = [0, 256], sizes = [8, 128], strides = [1, 1]} : vector<8x512xf32> to vector<8x128xf32>
    %176 = math.tanh %175 : vector<8x128xf32>
    %177 = vector.extract_strided_slice %162 {offsets = [0, 384], sizes = [8, 128], strides = [1, 1]} : vector<8x512xf32> to vector<8x128xf32>
    %178 = arith.negf %177 : vector<8x128xf32>
    %179 = math.exp %178 : vector<8x128xf32>
    %cst_58 = arith.constant 1.000000e+00 : f32
    %180 = vector.broadcast %cst_58 : f32 to vector<8x128xf32>
    %181 = arith.addf %180, %179 : vector<8x128xf32>
    %182 = arith.divf %180, %181 : vector<8x128xf32>
    %183 = arith.mulf %174, %118 : vector<8x128xf32>
    %184 = arith.mulf %168, %176 : vector<8x128xf32>
    %185 = arith.addf %183, %184 : vector<8x128xf32>
    %186 = math.tanh %185 : vector<8x128xf32>
    %187 = arith.mulf %182, %186 : vector<8x128xf32>
    %188 = arith.truncf %120 : vector<8x128xf32> to vector<8x128xbf16>
    %cst_59 = arith.constant dense<0.000000e+00> : vector<8x512xf32>
    %189 = tpu.matmul %188, %14, %cst_59 {dimension_numbers = #tpu.dot_dimension_numbers<[1], [0], [0], [1], [0, 0, 1, 1], [], []>} : vector<8x128xbf16>, vector<128x512xbf16>, vector<8x512xf32> -> vector<8x512xf32>
    %190 = arith.truncf %155 : vector<8x128xf32> to vector<8x128xbf16>
    %cst_60 = arith.constant dense<0.000000e+00> : vector<8x512xf32>
    %191 = tpu.matmul %190, %15, %cst_60 {dimension_numbers = #tpu.dot_dimension_numbers<[1], [0], [0], [1], [0, 0, 1, 1], [], []>} : vector<8x128xbf16>, vector<128x512xbf16>, vector<8x512xf32> -> vector<8x512xf32>
    %192 = arith.addf %189, %191 : vector<8x512xf32>
    %193 = arith.addf %192, %18 : vector<8x512xf32>
    %194 = vector.extract_strided_slice %193 {offsets = [0, 0], sizes = [8, 128], strides = [1, 1]} : vector<8x512xf32> to vector<8x128xf32>
    %195 = arith.negf %194 : vector<8x128xf32>
    %196 = math.exp %195 : vector<8x128xf32>
    %cst_61 = arith.constant 1.000000e+00 : f32
    %197 = vector.broadcast %cst_61 : f32 to vector<8x128xf32>
    %198 = arith.addf %197, %196 : vector<8x128xf32>
    %199 = arith.divf %197, %198 : vector<8x128xf32>
    %200 = vector.extract_strided_slice %193 {offsets = [0, 128], sizes = [8, 128], strides = [1, 1]} : vector<8x512xf32> to vector<8x128xf32>
    %201 = arith.negf %200 : vector<8x128xf32>
    %202 = math.exp %201 : vector<8x128xf32>
    %cst_62 = arith.constant 1.000000e+00 : f32
    %203 = vector.broadcast %cst_62 : f32 to vector<8x128xf32>
    %204 = arith.addf %203, %202 : vector<8x128xf32>
    %205 = arith.divf %203, %204 : vector<8x128xf32>
    %206 = vector.extract_strided_slice %193 {offsets = [0, 256], sizes = [8, 128], strides = [1, 1]} : vector<8x512xf32> to vector<8x128xf32>
    %207 = math.tanh %206 : vector<8x128xf32>
    %208 = vector.extract_strided_slice %193 {offsets = [0, 384], sizes = [8, 128], strides = [1, 1]} : vector<8x512xf32> to vector<8x128xf32>
    %209 = arith.negf %208 : vector<8x128xf32>
    %210 = math.exp %209 : vector<8x128xf32>
    %cst_63 = arith.constant 1.000000e+00 : f32
    %211 = vector.broadcast %cst_63 : f32 to vector<8x128xf32>
    %212 = arith.addf %211, %210 : vector<8x128xf32>
    %213 = arith.divf %211, %212 : vector<8x128xf32>
    %214 = arith.mulf %205, %156 : vector<8x128xf32>
    %215 = arith.mulf %199, %207 : vector<8x128xf32>
    %216 = arith.addf %214, %215 : vector<8x128xf32>
    %217 = math.tanh %216 : vector<8x128xf32>
    %218 = arith.mulf %213, %217 : vector<8x128xf32>
    %c0_i32_64 = arith.constant 0 : i32
    %219 = arith.cmpi eq, %arg1, %c0_i32_64 : i32
    %c0_i32_65 = arith.constant 0 : i32
    %220 = arith.cmpi eq, %c2_i32, %c0_i32_65 : i32
    %221 = arith.andi %219, %220 : i1
    %222 = arith.select %221, %155, %218 : vector<8x128xf32>
    %223 = arith.select %221, %156, %216 : vector<8x128xf32>
    %c3_i32 = arith.constant 3 : i32
    %224 = arith.index_cast %c3_i32 : i32 to index
    %c0_66 = arith.constant 0 : index
    %c0_67 = arith.constant 0 : index
    %225 = vector.load %arg18[%224, %c0_66, %c0_67] : memref<4x8x512xf32, #tpu.memory_space<vmem>>, vector<1x8x512xf32>
    %226 = vector.shape_cast %225 : vector<1x8x512xf32> to vector<8x512xf32>
    %227 = arith.truncf %187 : vector<8x128xf32> to vector<8x128xbf16>
    %cst_68 = arith.constant dense<0.000000e+00> : vector<8x512xf32>
    %228 = tpu.matmul %227, %13, %cst_68 {dimension_numbers = #tpu.dot_dimension_numbers<[1], [0], [0], [1], [0, 0, 1, 1], [], []>} : vector<8x128xbf16>, vector<128x512xbf16>, vector<8x512xf32> -> vector<8x512xf32>
    %229 = arith.addf %226, %228 : vector<8x512xf32>
    %230 = vector.extract_strided_slice %229 {offsets = [0, 0], sizes = [8, 128], strides = [1, 1]} : vector<8x512xf32> to vector<8x128xf32>
    %231 = arith.negf %230 : vector<8x128xf32>
    %232 = math.exp %231 : vector<8x128xf32>
    %cst_69 = arith.constant 1.000000e+00 : f32
    %233 = vector.broadcast %cst_69 : f32 to vector<8x128xf32>
    %234 = arith.addf %233, %232 : vector<8x128xf32>
    %235 = arith.divf %233, %234 : vector<8x128xf32>
    %236 = vector.extract_strided_slice %229 {offsets = [0, 128], sizes = [8, 128], strides = [1, 1]} : vector<8x512xf32> to vector<8x128xf32>
    %237 = arith.negf %236 : vector<8x128xf32>
    %238 = math.exp %237 : vector<8x128xf32>
    %cst_70 = arith.constant 1.000000e+00 : f32
    %239 = vector.broadcast %cst_70 : f32 to vector<8x128xf32>
    %240 = arith.addf %239, %238 : vector<8x128xf32>
    %241 = arith.divf %239, %240 : vector<8x128xf32>
    %242 = vector.extract_strided_slice %229 {offsets = [0, 256], sizes = [8, 128], strides = [1, 1]} : vector<8x512xf32> to vector<8x128xf32>
    %243 = math.tanh %242 : vector<8x128xf32>
    %244 = vector.extract_strided_slice %229 {offsets = [0, 384], sizes = [8, 128], strides = [1, 1]} : vector<8x512xf32> to vector<8x128xf32>
    %245 = arith.negf %244 : vector<8x128xf32>
    %246 = math.exp %245 : vector<8x128xf32>
    %cst_71 = arith.constant 1.000000e+00 : f32
    %247 = vector.broadcast %cst_71 : f32 to vector<8x128xf32>
    %248 = arith.addf %247, %246 : vector<8x128xf32>
    %249 = arith.divf %247, %248 : vector<8x128xf32>
    %250 = arith.mulf %241, %185 : vector<8x128xf32>
    %251 = arith.mulf %235, %243 : vector<8x128xf32>
    %252 = arith.addf %250, %251 : vector<8x128xf32>
    %253 = math.tanh %252 : vector<8x128xf32>
    %254 = arith.mulf %249, %253 : vector<8x128xf32>
    %255 = arith.truncf %187 : vector<8x128xf32> to vector<8x128xbf16>
    %cst_72 = arith.constant dense<0.000000e+00> : vector<8x512xf32>
    %256 = tpu.matmul %255, %14, %cst_72 {dimension_numbers = #tpu.dot_dimension_numbers<[1], [0], [0], [1], [0, 0, 1, 1], [], []>} : vector<8x128xbf16>, vector<128x512xbf16>, vector<8x512xf32> -> vector<8x512xf32>
    %257 = arith.truncf %222 : vector<8x128xf32> to vector<8x128xbf16>
    %cst_73 = arith.constant dense<0.000000e+00> : vector<8x512xf32>
    %258 = tpu.matmul %257, %15, %cst_73 {dimension_numbers = #tpu.dot_dimension_numbers<[1], [0], [0], [1], [0, 0, 1, 1], [], []>} : vector<8x128xbf16>, vector<128x512xbf16>, vector<8x512xf32> -> vector<8x512xf32>
    %259 = arith.addf %256, %258 : vector<8x512xf32>
    %260 = arith.addf %259, %18 : vector<8x512xf32>
    %261 = vector.extract_strided_slice %260 {offsets = [0, 0], sizes = [8, 128], strides = [1, 1]} : vector<8x512xf32> to vector<8x128xf32>
    %262 = arith.negf %261 : vector<8x128xf32>
    %263 = math.exp %262 : vector<8x128xf32>
    %cst_74 = arith.constant 1.000000e+00 : f32
    %264 = vector.broadcast %cst_74 : f32 to vector<8x128xf32>
    %265 = arith.addf %264, %263 : vector<8x128xf32>
    %266 = arith.divf %264, %265 : vector<8x128xf32>
    %267 = vector.extract_strided_slice %260 {offsets = [0, 128], sizes = [8, 128], strides = [1, 1]} : vector<8x512xf32> to vector<8x128xf32>
    %268 = arith.negf %267 : vector<8x128xf32>
    %269 = math.exp %268 : vector<8x128xf32>
    %cst_75 = arith.constant 1.000000e+00 : f32
    %270 = vector.broadcast %cst_75 : f32 to vector<8x128xf32>
    %271 = arith.addf %270, %269 : vector<8x128xf32>
    %272 = arith.divf %270, %271 : vector<8x128xf32>
    %273 = vector.extract_strided_slice %260 {offsets = [0, 256], sizes = [8, 128], strides = [1, 1]} : vector<8x512xf32> to vector<8x128xf32>
    %274 = math.tanh %273 : vector<8x128xf32>
    %275 = vector.extract_strided_slice %260 {offsets = [0, 384], sizes = [8, 128], strides = [1, 1]} : vector<8x512xf32> to vector<8x128xf32>
    %276 = arith.negf %275 : vector<8x128xf32>
    %277 = math.exp %276 : vector<8x128xf32>
    %cst_76 = arith.constant 1.000000e+00 : f32
    %278 = vector.broadcast %cst_76 : f32 to vector<8x128xf32>
    %279 = arith.addf %278, %277 : vector<8x128xf32>
    %280 = arith.divf %278, %279 : vector<8x128xf32>
    %281 = arith.mulf %272, %223 : vector<8x128xf32>
    %282 = arith.mulf %266, %274 : vector<8x128xf32>
    %283 = arith.addf %281, %282 : vector<8x128xf32>
    %284 = math.tanh %283 : vector<8x128xf32>
    %285 = arith.mulf %280, %284 : vector<8x128xf32>
    %c0_i32_77 = arith.constant 0 : i32
    %286 = arith.cmpi eq, %arg1, %c0_i32_77 : i32
    %c0_i32_78 = arith.constant 0 : i32
    %287 = arith.cmpi eq, %c3_i32, %c0_i32_78 : i32
    %288 = arith.andi %286, %287 : i1
    %289 = arith.select %288, %222, %285 : vector<8x128xf32>
    %290 = arith.select %288, %223, %283 : vector<8x128xf32>
    %c4_i32 = arith.constant 4 : i32
    %c0_79 = arith.constant 0 : index
    %c0_80 = arith.constant 0 : index
    %291 = vector.load %arg14[%c0_79, %c0_80] : memref<8x128xf32, #tpu.memory_space<vmem>>, vector<8x128xf32>
    tpu.vector_store %arg14[%c0_79, %c0_80], %254 {strides = array<i32>} : memref<8x128xf32, #tpu.memory_space<vmem>>, vector<8x128xf32>,
    %c0_81 = arith.constant 0 : index
    %c0_82 = arith.constant 0 : index
    %292 = vector.load %arg15[%c0_81, %c0_82] : memref<8x128xf32, #tpu.memory_space<vmem>>, vector<8x128xf32>
    tpu.vector_store %arg15[%c0_81, %c0_82], %252 {strides = array<i32>} : memref<8x128xf32, #tpu.memory_space<vmem>>, vector<8x128xf32>,
    %c0_83 = arith.constant 0 : index
    %c0_84 = arith.constant 0 : index
    %293 = vector.load %arg16[%c0_83, %c0_84] : memref<8x128xf32, #tpu.memory_space<vmem>>, vector<8x128xf32>
    tpu.vector_store %arg16[%c0_83, %c0_84], %289 {strides = array<i32>} : memref<8x128xf32, #tpu.memory_space<vmem>>, vector<8x128xf32>,
    %c0_85 = arith.constant 0 : index
    %c0_86 = arith.constant 0 : index
    %294 = vector.load %arg17[%c0_85, %c0_86] : memref<8x128xf32, #tpu.memory_space<vmem>>, vector<8x128xf32>
    tpu.vector_store %arg17[%c0_85, %c0_86], %290 {strides = array<i32>} : memref<8x128xf32, #tpu.memory_space<vmem>>, vector<8x128xf32>,
    %c1_i32_87 = arith.constant 1 : i32
    %295 = arith.cmpi eq, %arg1, %c1_i32_87 : i32
    %296 = arith.extui %295 : i1 to i32
    %c0_i32_88 = arith.constant 0 : i32
    %297 = arith.cmpi ne, %296, %c0_i32_88 : i32
    scf.if %297 {
      %298 = arith.truncf %254 : vector<8x128xf32> to vector<8x128xbf16>
      %cst_89 = arith.constant dense<0.000000e+00> : vector<8x512xf32>
      %299 = tpu.matmul %298, %14, %cst_89 {dimension_numbers = #tpu.dot_dimension_numbers<[1], [0], [0], [1], [0, 0, 1, 1], [], []>} : vector<8x128xbf16>, vector<128x512xbf16>, vector<8x512xf32> -> vector<8x512xf32>
      %300 = arith.truncf %289 : vector<8x128xf32> to vector<8x128xbf16>
      %cst_90 = arith.constant dense<0.000000e+00> : vector<8x512xf32>
      %301 = tpu.matmul %300, %15, %cst_90 {dimension_numbers = #tpu.dot_dimension_numbers<[1], [0], [0], [1], [0, 0, 1, 1], [], []>} : vector<8x128xbf16>, vector<128x512xbf16>, vector<8x512xf32> -> vector<8x512xf32>
      %302 = arith.addf %299, %301 : vector<8x512xf32>
      %303 = arith.addf %302, %18 : vector<8x512xf32>
      %304 = vector.extract_strided_slice %303 {offsets = [0, 0], sizes = [8, 128], strides = [1, 1]} : vector<8x512xf32> to vector<8x128xf32>
      %305 = arith.negf %304 : vector<8x128xf32>
      %306 = math.exp %305 : vector<8x128xf32>
      %cst_91 = arith.constant 1.000000e+00 : f32
      %307 = vector.broadcast %cst_91 : f32 to vector<8x128xf32>
      %308 = arith.addf %307, %306 : vector<8x128xf32>
      %309 = arith.divf %307, %308 : vector<8x128xf32>
      %310 = vector.extract_strided_slice %303 {offsets = [0, 128], sizes = [8, 128], strides = [1, 1]} : vector<8x512xf32> to vector<8x128xf32>
      %311 = arith.negf %310 : vector<8x128xf32>
      %312 = math.exp %311 : vector<8x128xf32>
      %cst_92 = arith.constant 1.000000e+00 : f32
      %313 = vector.broadcast %cst_92 : f32 to vector<8x128xf32>
      %314 = arith.addf %313, %312 : vector<8x128xf32>
      %315 = arith.divf %313, %314 : vector<8x128xf32>
      %316 = vector.extract_strided_slice %303 {offsets = [0, 256], sizes = [8, 128], strides = [1, 1]} : vector<8x512xf32> to vector<8x128xf32>
      %317 = math.tanh %316 : vector<8x128xf32>
      %318 = vector.extract_strided_slice %303 {offsets = [0, 384], sizes = [8, 128], strides = [1, 1]} : vector<8x512xf32> to vector<8x128xf32>
      %319 = arith.negf %318 : vector<8x128xf32>
      %320 = math.exp %319 : vector<8x128xf32>
      %cst_93 = arith.constant 1.000000e+00 : f32
      %321 = vector.broadcast %cst_93 : f32 to vector<8x128xf32>
      %322 = arith.addf %321, %320 : vector<8x128xf32>
      %323 = arith.divf %321, %322 : vector<8x128xf32>
      %324 = arith.mulf %315, %290 : vector<8x128xf32>
      %325 = arith.mulf %309, %317 : vector<8x128xf32>
      %326 = arith.addf %324, %325 : vector<8x128xf32>
      %327 = math.tanh %326 : vector<8x128xf32>
      %328 = arith.mulf %323, %327 : vector<8x128xf32>
      %c0_94 = arith.constant 0 : index
      %c0_95 = arith.constant 0 : index
      %329 = vector.load %arg9[%c0_94, %c0_95] : memref<128x128xf32, #tpu.memory_space<vmem>>, vector<128x128xf32>
      %cst_96 = arith.constant dense<0.000000e+00> : vector<8x128xf32>
      %330 = tpu.matmul %328, %329, %cst_96 {dimension_numbers = #tpu.dot_dimension_numbers<[1], [0], [0], [1], [0, 0, 1, 1], [], []>} : vector<8x128xf32>, vector<128x128xf32>, vector<8x128xf32> -> vector<8x128xf32>
      %c0_97 = arith.constant 0 : index
      %c0_98 = arith.constant 0 : index
      %331 = vector.load %arg10[%c0_97, %c0_98] : memref<1x128xf32, #tpu.memory_space<vmem>>, vector<1x128xf32>
      %332 = vector.broadcast %331 : vector<1x128xf32> to vector<8x128xf32>
      %333 = arith.addf %330, %332 : vector<8x128xf32>
      %cst_99 = arith.constant 0.000000e+00 : f32
      %334 = vector.broadcast %cst_99 : f32 to vector<8x128xf32>
      %335 = arith.maximumf %333, %334 : vector<8x128xf32>
      %c0_100 = arith.constant 0 : index
      %c0_101 = arith.constant 0 : index
      %336 = vector.load %arg11[%c0_100, %c0_101] : memref<128x128xf32, #tpu.memory_space<vmem>>, vector<128x128xf32>
      %cst_102 = arith.constant dense<0.000000e+00> : vector<8x128xf32>
      %337 = tpu.matmul %335, %336, %cst_102 {dimension_numbers = #tpu.dot_dimension_numbers<[1], [0], [0], [1], [0, 0, 1, 1], [], []>} : vector<8x128xf32>, vector<128x128xf32>, vector<8x128xf32> -> vector<8x128xf32>
      %c0_103 = arith.constant 0 : index
      %c0_104 = arith.constant 0 : index
      %338 = vector.load %arg12[%c0_103, %c0_104] : memref<1x128xf32, #tpu.memory_space<vmem>>, vector<1x128xf32>
      %339 = vector.broadcast %338 : vector<1x128xf32> to vector<8x128xf32>
      %340 = arith.addf %337, %339 : vector<8x128xf32>
      %c0_105 = arith.constant 0 : index
      %c0_106 = arith.constant 0 : index
      %341 = vector.load %arg13[%c0_105, %c0_106] : memref<8x128xf32, #tpu.memory_space<vmem>>, vector<8x128xf32>
      tpu.vector_store %arg13[%c0_105, %c0_106], %340 {strides = array<i32>} : memref<8x128xf32, #tpu.memory_space<vmem>>, vector<8x128xf32>,
    } else {
    }
    return
  }
  func.func @transform_0(%arg0: i32, %arg1: i32) -> (i32, i32, i32) {
    %c0_i32 = arith.constant 0 : i32
    %c0_i32_0 = arith.constant 0 : i32
    return %arg1, %arg0, %c0_i32 : i32, i32, i32
  }
  func.func @transform_1(%arg0: i32, %arg1: i32) -> (i32, i32) {
    %c0_i32 = arith.constant 0 : i32
    %c0_i32_0 = arith.constant 0 : i32
    %c0_i32_1 = arith.constant 0 : i32
    return %c0_i32, %c0_i32_0 : i32, i32
  }
  func.func @transform_2(%arg0: i32, %arg1: i32) -> (i32, i32) {
    %c0_i32 = arith.constant 0 : i32
    %c0_i32_0 = arith.constant 0 : i32
    %c0_i32_1 = arith.constant 0 : i32
    return %c0_i32, %c0_i32_0 : i32, i32
  }
  func.func @transform_3(%arg0: i32, %arg1: i32) -> (i32, i32) {
    %c0_i32 = arith.constant 0 : i32
    %c0_i32_0 = arith.constant 0 : i32
    %c0_i32_1 = arith.constant 0 : i32
    return %c0_i32, %c0_i32_0 : i32, i32
  }
  func.func @transform_4(%arg0: i32, %arg1: i32) -> (i32, i32) {
    %c0_i32 = arith.constant 0 : i32
    %c0_i32_0 = arith.constant 0 : i32
    %c0_i32_1 = arith.constant 0 : i32
    return %c0_i32, %c0_i32_0 : i32, i32
  }
  func.func @transform_5(%arg0: i32, %arg1: i32) -> (i32, i32) {
    %c0_i32 = arith.constant 0 : i32
    %c0_i32_0 = arith.constant 0 : i32
    %c0_i32_1 = arith.constant 0 : i32
    return %c0_i32, %c0_i32_0 : i32, i32
  }
  func.func @transform_6(%arg0: i32, %arg1: i32) -> (i32, i32) {
    %c0_i32 = arith.constant 0 : i32
    %c0_i32_0 = arith.constant 0 : i32
    %c0_i32_1 = arith.constant 0 : i32
    return %c0_i32, %c0_i32_0 : i32, i32
  }
  func.func @transform_7(%arg0: i32, %arg1: i32) -> (i32, i32) {
    %c0_i32 = arith.constant 0 : i32
    %c0_i32_0 = arith.constant 0 : i32
    %c0_i32_1 = arith.constant 0 : i32
    return %c0_i32, %c0_i32_0 : i32, i32
  }
  func.func @transform_8(%arg0: i32, %arg1: i32) -> (i32, i32) {
    %c0_i32 = arith.constant 0 : i32
    %c0_i32_0 = arith.constant 0 : i32
    %c0_i32_1 = arith.constant 0 : i32
    return %c0_i32, %c0_i32_0 : i32, i32
  }
  func.func @transform_9(%arg0: i32, %arg1: i32) -> (i32, i32) {
    %c0_i32 = arith.constant 0 : i32
    %c0_i32_0 = arith.constant 0 : i32
    %c0_i32_1 = arith.constant 0 : i32
    return %c0_i32, %c0_i32_0 : i32, i32
  }
  func.func @transform_10(%arg0: i32, %arg1: i32) -> (i32, i32) {
    %c0_i32 = arith.constant 0 : i32
    %c0_i32_0 = arith.constant 0 : i32
    %c0_i32_1 = arith.constant 0 : i32
    return %c0_i32, %c0_i32_0 : i32, i32
  }
  func.func @transform_11(%arg0: i32, %arg1: i32) -> (i32, i32) {
    %c0_i32 = arith.constant 0 : i32
    %c0_i32_0 = arith.constant 0 : i32
    return %arg0, %c0_i32 : i32, i32
  }
}

</mosaic_0001>

<llo_original>
// kernel: tpu_custom_call.1
$region0: #{tpu_custom_call.1}
  #allocation0 [shape = 'u32[]', space=smem, size = 0x4, offset = 0x4, fixed_abs, tag = 'smem constant byte address 0x4 - core index']
  #allocation1 [shape = 'u32[144,128]{1,0:T(1,128)}', space=vmem, size = 0x12000, scoped, tag = 'internal scratch']
  #allocation2 [shape = 'f32[8,128]{1,0:T(8,128)}', space=vmem, size = 0x1000, scoped, tag = 'scratch operand']
  #allocation3 [shape = 'f32[8,128]{1,0:T(8,128)}', space=vmem, size = 0x1000, scoped, tag = 'scratch operand']
  #allocation4 [shape = 'f32[8,128]{1,0:T(8,128)}', space=vmem, size = 0x1000, scoped, tag = 'scratch operand']
  #allocation5 [shape = 'f32[8,128]{1,0:T(8,128)}', space=vmem, size = 0x1000, scoped, tag = 'scratch operand']
  #allocation6 [shape = 'f32[4,8,512]{2,1,0:T(8,128)}', space=vmem, size = 0x10000, scoped, tag = 'scratch operand']
  %s0 = inlined_call_operand.hbm [shape: f32[8,8,32], index: 0, kind: input, shape index: {}]
  %s1 = inlined_call_operand.hbm [shape: bf16[32,512], index: 1, kind: input, shape index: {}]
  %s2 = inlined_call_operand.hbm [shape: bf16[128,512], index: 2, kind: input, shape index: {}]
  %s3 = inlined_call_operand.vmem [shape: f32[1,512], index: 3, kind: input, shape index: {}]
  %s4 = inlined_call_operand.hbm [shape: bf16[128,512], index: 4, kind: input, shape index: {}]
  %s5 = inlined_call_operand.hbm [shape: bf16[128,512], index: 5, kind: input, shape index: {}]
  %s6 = inlined_call_operand.vmem [shape: f32[1,512], index: 6, kind: input, shape index: {}]
  %s7 = inlined_call_operand.hbm [shape: f32[128,128], index: 7, kind: input, shape index: {}]
  %s8 = inlined_call_operand.vmem [shape: f32[1,128], index: 8, kind: input, shape index: {}]
  %s9 = inlined_call_operand.hbm [shape: f32[128,128], index: 9, kind: input, shape index: {}]
  %s10 = inlined_call_operand.vmem [shape: f32[1,128], index: 10, kind: input, shape index: {}]
  %s11 = inlined_call_operand.hbm [shape: f32[8,128], index: 11, kind: output, shape index: {}]
  %s12 = sld [smem:[#allocation0]]
  $region113: #{tpu_custom_call.1} parent=0
    _
  %s14 = ssub.s32 1, %s12
  %s15 = scalar_select 0, %s14, %s12
  $region1: #{tpu_custom_call.1} parent=0
    #allocation7 [shape = 'u8[32768]{0}', space=vmem, size = 0x8000, scoped, tag = 'input window, operand 0']
    #allocation8 [shape = 's32[2]{0}', space=sflag, size = 0x8, scoped, tag = 'scoped memory for tpu_custom_call.1']
    #allocation9 [shape = 's32[2]{0}', space=sflag, size = 0x8, scoped, tag = 'scoped memory for tpu_custom_call.1']
    #allocation10 [shape = 'u8[32768]{0}', space=vmem, size = 0x8000, scoped, tag = 'input window, operand 1, single buffered']
    #allocation11 [shape = 's32[1]{0}', space=sflag, size = 0x4, scoped, tag = 'scoped memory for tpu_custom_call.1']
    #allocation12 [shape = 'u8[131072]{0}', space=vmem, size = 0x20000, scoped, tag = 'input window, operand 2, single buffered']
    #allocation13 [shape = 'u8[131072]{0}', space=vmem, size = 0x20000, scoped, tag = 'input window, operand 4, single buffered']
    #allocation14 [shape = 's32[1]{0}', space=sflag, size = 0x4, scoped, tag = 'scoped memory for tpu_custom_call.1']
    #allocation15 [shape = 'u8[131072]{0}', space=vmem, size = 0x20000, scoped, tag = 'input window, operand 5, single buffered']
    #allocation16 [shape = 'u8[65536]{0}', space=vmem, size = 0x10000, scoped, tag = 'input window, operand 7, single buffered']
    #allocation17 [shape = 's32[1]{0}', space=sflag, size = 0x4, scoped, tag = 'scoped memory for tpu_custom_call.1']
    #allocation18 [shape = 'u8[65536]{0}', space=vmem, size = 0x10000, scoped, tag = 'input window, operand 9, single buffered']
    #allocation19 [shape = 'u8[4096]{0}', space=vmem, size = 0x1000, scoped, tag = 'output window, operand 0, single buffered']
    %16 = vsyncpa [#allocation8], 0
    %s17 = scalar_lea.sflag [#allocation8], 1
    %18 = vsyncpa %s17, 0
    %19 = vsyncpa [#allocation11], 0
    %20 = vsyncpa [#allocation14], 0
    %21 = vsyncpa [#allocation17], 0
    %22 = vsyncpa [#allocation9], 0
    loop: start=0, step=1, limit=4
    $region2: #{tpu_custom_call.1} parent=1 // loop_pre_header
      _
    $region3: #{tpu_custom_call.1} parent=1 // loop_header
      %s24 = sphi 0, %s28
      %p25 = scmp.ge.s32.totalorder %s24, 4
      %s31 = sphi 0, %s43
      %s32 = sphi 0, %s39
      %s33 = sphi 0, %s31
      %s34 = sphi 0, %s32
      %s35 = sphi 0, %s33
      %s36 = sphi 0, %s34
      %s48 = sphi 0, %s50
      %s51 = sphi 0, %s48
      %s52 = sphi 0, %s51
      %s68 = sphi 0, %s52
      %s72 = sphi 0, %s72
      %s74 = sphi 0, %s72
      %s75 = sphi 0, %s74
      %s89 = sphi 0, %s75
      %s93 = sphi 0, %s93
      %s95 = sphi 0, %s93
      %s96 = sphi 0, %s95
      %s110 = sphi 0, %s96
      %s114 = sphi 0, %s114
      %s116 = sphi 0, %s114
      %s117 = sphi 0, %s116
      %s131 = sphi 0, %s117
      %s135 = sphi 0, %s135
      %s137 = sphi 0, %s135
      %s138 = sphi 0, %s137
      %s152 = sphi 0, %s138
      %s156 = sphi 0, %s156
      %s158 = sphi 0, %s156
      %s159 = sphi 0, %s158
      %s173 = sphi 0, %s159
      %s177 = sphi 0, %s177
      %s179 = sphi 0, %s177
      %s180 = sphi 0, %s179
      %s194 = sphi 0, %s180
      %s198 = sphi 0, %s198
      %s200 = sphi 0, %s198
      %s201 = sphi 0, %s200
      %s215 = sphi 0, %s201
      %s219 = sphi 0, %s219
      %s221 = sphi 0, %s219
      %s222 = sphi 0, %s221
      %s236 = sphi 0, %s222
      %s240 = sphi 0, %s240
      %s242 = sphi 0, %s240
      %s243 = sphi 0, %s242
      %s257 = sphi 0, %s243
      %s261 = sphi 0, %s261
      %s263 = sphi 0, %s261
      %s264 = sphi 0, %s263
      %s278 = sphi 0, %s264
      %s284 = sphi 0, %s286
      %s287 = sphi 0, %s284
      %s288 = sphi 0, %s287
      %s304 = sphi 0, %s288
    $region4: #{tpu_custom_call.1} parent=1 // loop_header_branch
      %27 = sbr.rel (%p25) target = $region8
    $region5: #{tpu_custom_call.1} parent=1 // loop_body
      %s29 = ssub.s32 %s24, 1
      %s30 = ssub.s32 %s24, 2
      %s37 = sadd.s32 1, %s32
      %p38 = scmp.ge.s32.totalorder %s37, 2
      %s39 = scalar_select %p38, 0, %s37
      %s40 = sadd.s32 1, %s31
      %s41 = scalar_select %p38, %s40, %s31
      %p42 = scmp.ge.s32.totalorder %s41, 1
      %s43 = scalar_select %p42, 0, %s41
      %s44 = ssub.s32 %s32, %s39
      %s45 = ssub.s32 %s31, %s43
      %s46 = sor.u32 %s44, %s45
      %p47 = scmp.eq.s32.totalorder %s46, 0
      %s49 = sadd.s32 %s48, 1
      %s50 = scalar_select %p47, %s48, %s49
      %p53 = pneg %p47
      %p54 = scmp.eq.s32.totalorder %s24, 1
      %p55 = por %p53, %p54
      %p56 = scmp.ne.s32.totalorder %s48, %s51
      %p57 = scmp.eq.s32.totalorder %s24, 0
      %p58 = por %p56, %p57
      %p59 = scmp.ne.s32.totalorder %s48, %s51
      %p60 = scmp.eq.s32.totalorder %s29, 1
      %p61 = por %p59, %p60
      %p62 = scmp.ne.s32.totalorder %s51, %s52
      %p63 = scmp.eq.s32.totalorder %s29, 0
      %p64 = por %p62, %p63
      %p65 = scmp.ne.s32.totalorder %s51, %s52
      %p66 = scmp.eq.s32.totalorder %s30, 1
      %p67 = por %p65, %p66
      %p69 = scmp.ne.s32.totalorder %s52, %s68
      %p70 = scmp.eq.s32.totalorder %s30, 0
      %p71 = por %p69, %p70
      %s73 = sadd.s32 %s72, 1
      %p76 = scmp.eq.s32.totalorder %s24, 1
      %p77 = scmp.ne.s32.totalorder %s72, %s74
      %p78 = scmp.eq.s32.totalorder %s24, 0
      %p79 = por %p77, %p78
      %p80 = scmp.ne.s32.totalorder %s72, %s74
      %p81 = scmp.eq.s32.totalorder %s29, 1
      %p82 = por %p80, %p81
      %p83 = scmp.ne.s32.totalorder %s74, %s75
      %p84 = scmp.eq.s32.totalorder %s29, 0
      %p85 = por %p83, %p84
      %p86 = scmp.ne.s32.totalorder %s74, %s75
      %p87 = scmp.eq.s32.totalorder %s30, 1
      %p88 = por %p86, %p87
      %p90 = scmp.ne.s32.totalorder %s75, %s89
      %p91 = scmp.eq.s32.totalorder %s30, 0
      %p92 = por %p90, %p91
      %s94 = sadd.s32 %s93, 1
      %p97 = scmp.eq.s32.totalorder %s24, 1
      %p98 = scmp.ne.s32.totalorder %s93, %s95
      %p99 = scmp.eq.s32.totalorder %s24, 0
      %p100 = por %p98, %p99
      %p101 = scmp.ne.s32.totalorder %s93, %s95
      %p102 = scmp.eq.s32.totalorder %s29, 1
      %p103 = por %p101, %p102
      %p104 = scmp.ne.s32.totalorder %s95, %s96
      %p105 = scmp.eq.s32.totalorder %s29, 0
      %p106 = por %p104, %p105
      %p107 = scmp.ne.s32.totalorder %s95, %s96
      %p108 = scmp.eq.s32.totalorder %s30, 1
      %p109 = por %p107, %p108
      %p111 = scmp.ne.s32.totalorder %s96, %s110
      %p112 = scmp.eq.s32.totalorder %s30, 0
      %p113 = por %p111, %p112
      %s115 = sadd.s32 %s114, 1
      %p118 = scmp.eq.s32.totalorder %s24, 1
      %p119 = scmp.ne.s32.totalorder %s114, %s116
      %p120 = scmp.eq.s32.totalorder %s24, 0
      %p121 = por %p119, %p120
      %p122 = scmp.ne.s32.totalorder %s114, %s116
      %p123 = scmp.eq.s32.totalorder %s29, 1
      %p124 = por %p122, %p123
      %p125 = scmp.ne.s32.totalorder %s116, %s117
      %p126 = scmp.eq.s32.totalorder %s29, 0
      %p127 = por %p125, %p126
      %p128 = scmp.ne.s32.totalorder %s116, %s117
      %p129 = scmp.eq.s32.totalorder %s30, 1
      %p130 = por %p128, %p129
      %p132 = scmp.ne.s32.totalorder %s117, %s131
      %p133 = scmp.eq.s32.totalorder %s30, 0
      %p134 = por %p132, %p133
      %s136 = sadd.s32 %s135, 1
      %p139 = scmp.eq.s32.totalorder %s24, 1
      %p140 = scmp.ne.s32.totalorder %s135, %s137
      %p141 = scmp.eq.s32.totalorder %s24, 0
      %p142 = por %p140, %p141
      %p143 = scmp.ne.s32.totalorder %s135, %s137
      %p144 = scmp.eq.s32.totalorder %s29, 1
      %p145 = por %p143, %p144
      %p146 = scmp.ne.s32.totalorder %s137, %s138
      %p147 = scmp.eq.s32.totalorder %s29, 0
      %p148 = por %p146, %p147
      %p149 = scmp.ne.s32.totalorder %s137, %s138
      %p150 = scmp.eq.s32.totalorder %s30, 1
      %p151 = por %p149, %p150
      %p153 = scmp.ne.s32.totalorder %s138, %s152
      %p154 = scmp.eq.s32.totalorder %s30, 0
      %p155 = por %p153, %p154
      %s157 = sadd.s32 %s156, 1
      %p160 = scmp.eq.s32.totalorder %s24, 1
      %p161 = scmp.ne.s32.totalorder %s156, %s158
      %p162 = scmp.eq.s32.totalorder %s24, 0
      %p163 = por %p161, %p162
      %p164 = scmp.ne.s32.totalorder %s156, %s158
      %p165 = scmp.eq.s32.totalorder %s29, 1
      %p166 = por %p164, %p165
      %p167 = scmp.ne.s32.totalorder %s158, %s159
      %p168 = scmp.eq.s32.totalorder %s29, 0
      %p169 = por %p167, %p168
      %p170 = scmp.ne.s32.totalorder %s158, %s159
      %p171 = scmp.eq.s32.totalorder %s30, 1
      %p172 = por %p170, %p171
      %p174 = scmp.ne.s32.totalorder %s159, %s173
      %p175 = scmp.eq.s32.totalorder %s30, 0
      %p176 = por %p174, %p175
      %s178 = sadd.s32 %s177, 1
      %p181 = scmp.eq.s32.totalorder %s24, 1
      %p182 = scmp.ne.s32.totalorder %s177, %s179
      %p183 = scmp.eq.s32.totalorder %s24, 0
      %p184 = por %p182, %p183
      %p185 = scmp.ne.s32.totalorder %s177, %s179
      %p186 = scmp.eq.s32.totalorder %s29, 1
      %p187 = por %p185, %p186
      %p188 = scmp.ne.s32.totalorder %s179, %s180
      %p189 = scmp.eq.s32.totalorder %s29, 0
      %p190 = por %p188, %p189
      %p191 = scmp.ne.s32.totalorder %s179, %s180
      %p192 = scmp.eq.s32.totalorder %s30, 1
      %p193 = por %p191, %p192
      %p195 = scmp.ne.s32.totalorder %s180, %s194
      %p196 = scmp.eq.s32.totalorder %s30, 0
      %p197 = por %p195, %p196
      %s199 = sadd.s32 %s198, 1
      %p202 = scmp.eq.s32.totalorder %s24, 1
      %p203 = scmp.ne.s32.totalorder %s198, %s200
      %p204 = scmp.eq.s32.totalorder %s24, 0
      %p205 = por %p203, %p204
      %p206 = scmp.ne.s32.totalorder %s198, %s200
      %p207 = scmp.eq.s32.totalorder %s29, 1
      %p208 = por %p206, %p207
      %p209 = scmp.ne.s32.totalorder %s200, %s201
      %p210 = scmp.eq.s32.totalorder %s29, 0
      %p211 = por %p209, %p210
      %p212 = scmp.ne.s32.totalorder %s200, %s201
      %p213 = scmp.eq.s32.totalorder %s30, 1
      %p214 = por %p212, %p213
      %p216 = scmp.ne.s32.totalorder %s201, %s215
      %p217 = scmp.eq.s32.totalorder %s30, 0
      %p218 = por %p216, %p217
      %s220 = sadd.s32 %s219, 1
      %p223 = scmp.eq.s32.totalorder %s24, 1
      %p224 = scmp.ne.s32.totalorder %s219, %s221
      %p225 = scmp.eq.s32.totalorder %s24, 0
      %p226 = por %p224, %p225
      %p227 = scmp.ne.s32.totalorder %s219, %s221
      %p228 = scmp.eq.s32.totalorder %s29, 1
      %p229 = por %p227, %p228
      %p230 = scmp.ne.s32.totalorder %s221, %s222
      %p231 = scmp.eq.s32.totalorder %s29, 0
      %p232 = por %p230, %p231
      %p233 = scmp.ne.s32.totalorder %s221, %s222
      %p234 = scmp.eq.s32.totalorder %s30, 1
      %p235 = por %p233, %p234
      %p237 = scmp.ne.s32.totalorder %s222, %s236
      %p238 = scmp.eq.s32.totalorder %s30, 0
      %p239 = por %p237, %p238
      %s241 = sadd.s32 %s240, 1
      %p244 = scmp.eq.s32.totalorder %s24, 1
      %p245 = scmp.ne.s32.totalorder %s240, %s242
      %p246 = scmp.eq.s32.totalorder %s24, 0
      %p247 = por %p245, %p246
      %p248 = scmp.ne.s32.totalorder %s240, %s242
      %p249 = scmp.eq.s32.totalorder %s29, 1
      %p250 = por %p248, %p249
      %p251 = scmp.ne.s32.totalorder %s242, %s243
      %p252 = scmp.eq.s32.totalorder %s29, 0
      %p253 = por %p251, %p252
      %p254 = scmp.ne.s32.totalorder %s242, %s243
      %p255 = scmp.eq.s32.totalorder %s30, 1
      %p256 = por %p254, %p255
      %p258 = scmp.ne.s32.totalorder %s243, %s257
      %p259 = scmp.eq.s32.totalorder %s30, 0
      %p260 = por %p258, %p259
      %s262 = sadd.s32 %s261, 1
      %p265 = scmp.eq.s32.totalorder %s24, 1
      %p266 = scmp.ne.s32.totalorder %s261, %s263
      %p267 = scmp.eq.s32.totalorder %s24, 0
      %p268 = por %p266, %p267
      %p269 = scmp.ne.s32.totalorder %s261, %s263
      %p270 = scmp.eq.s32.totalorder %s29, 1
      %p271 = por %p269, %p270
      %p272 = scmp.ne.s32.totalorder %s263, %s264
      %p273 = scmp.eq.s32.totalorder %s29, 0
      %p274 = por %p272, %p273
      %p275 = scmp.ne.s32.totalorder %s263, %s264
      %p276 = scmp.eq.s32.totalorder %s30, 1
      %p277 = por %p275, %p276
      %p279 = scmp.ne.s32.totalorder %s264, %s278
      %p280 = scmp.eq.s32.totalorder %s30, 0
      %p281 = por %p279, %p280
      %s282 = ssub.s32 %s31, %s43
      %p283 = scmp.eq.s32.totalorder %s282, 0
      %s285 = sadd.s32 %s284, 1
      %s286 = scalar_select %p283, %s284, %s285
      %p289 = pneg %p283
      %p290 = scmp.eq.s32.totalorder %s24, 1
      %p291 = por %p289, %p290
      %p292 = scmp.ne.s32.totalorder %s284, %s287
      %p293 = scmp.eq.s32.totalorder %s24, 0
      %p294 = por %p292, %p293
      %p295 = scmp.ne.s32.totalorder %s284, %s287
      %p296 = scmp.eq.s32.totalorder %s29, 1
      %p297 = por %p295, %p296
      %p298 = scmp.ne.s32.totalorder %s287, %s288
      %p299 = scmp.eq.s32.totalorder %s29, 0
      %p300 = por %p298, %p299
      %p301 = scmp.ne.s32.totalorder %s287, %s288
      %p302 = scmp.eq.s32.totalorder %s30, 1
      %p303 = por %p301, %p302
      %p305 = scmp.ne.s32.totalorder %s288, %s304
      %p306 = scmp.eq.s32.totalorder %s30, 0
      %p307 = por %p305, %p306
      %p308 = scmp.le.s32.totalorder 1, %s24
      %p309 = scmp.lt.s32.totalorder %s24, 3
      %p310 = pnand %p308, %p309
      %p311 = pneg %p310
      // Predicated region
      $region9: #{tpu_custom_call.1} parent=5 // pred_check
        _
      $region10: #{tpu_custom_call.1} parent=5 // pred_check_branch
        %313 = sbr.rel (%p310) target = $region12
      $region11: #{tpu_custom_call.1} parent=5 // pred_region
        %s314 = ssub.s32 %s24, 1
        // Predicated region
        $region13: #{tpu_custom_call.1} parent=11 // pred_check
          %p315 = pneg %p85
        $region14: #{tpu_custom_call.1} parent=11 // pred_check_branch
          %317 = sbr.rel (%p315) target = $region16
        $region15: #{tpu_custom_call.1} parent=11 // pred_region
          %s319 = ssub.s32 1024, 1024
          %320 = vsyncadd [#allocation11], %s319
          %s321 = sshll.u32 [#allocation10], 4
          %s322 = int_to_ptr.vmem [resolvable:$true] %s321
          %327 = dma.hbm_to_vmem [thread:$0]  %s1, 1024, %s322, [#allocation11], 256, 256, 16
        $region16: #{tpu_custom_call.1} parent=11 // pred_fallthru
          _
        // Predicated region
        $region17: #{tpu_custom_call.1} parent=11 // pred_check
          %p328 = pneg %p106
        $region18: #{tpu_custom_call.1} parent=11 // pred_check_branch
          %330 = sbr.rel (%p328) target = $region20
        $region19: #{tpu_custom_call.1} parent=11 // pred_region
          %s332 = ssub.s32 4096, 4096
          %333 = vsyncadd [#allocation11], %s332
          %s334 = sshll.u32 [#allocation12], 4
          %s335 = int_to_ptr.vmem [resolvable:$true] %s334
          %340 = dma.hbm_to_vmem [thread:$0]  %s2, 4096, %s335, [#allocation11], 256, 256, 16
        $region20: #{tpu_custom_call.1} parent=11 // pred_fallthru
          _
        // Predicated region
        $region21: #{tpu_custom_call.1} parent=11 // pred_check
          %p341 = pneg %p127
        $region22: #{tpu_custom_call.1} parent=11 // pred_check_branch
          %343 = sbr.rel (%p341) target = $region24
        $region23: #{tpu_custom_call.1} parent=11 // pred_region
          _
        $region24: #{tpu_custom_call.1} parent=11 // pred_fallthru
          _
        // Predicated region
        $region25: #{tpu_custom_call.1} parent=11 // pred_check
          %p344 = pneg %p148
        $region26: #{tpu_custom_call.1} parent=11 // pred_check_branch
          %346 = sbr.rel (%p344) target = $region28
        $region27: #{tpu_custom_call.1} parent=11 // pred_region
          %s348 = ssub.s32 4096, 4096
          %349 = vsyncadd [#allocation14], %s348
          %s350 = sshll.u32 [#allocation13], 4
          %s351 = int_to_ptr.vmem [resolvable:$true] %s350
          %356 = dma.hbm_to_vmem [thread:$0]  %s4, 4096, %s351, [#allocation14], 256, 256, 16
        $region28: #{tpu_custom_call.1} parent=11 // pred_fallthru
          _
        // Predicated region
        $region29: #{tpu_custom_call.1} parent=11 // pred_check
          %p357 = pneg %p169
        $region30: #{tpu_custom_call.1} parent=11 // pred_check_branch
          %359 = sbr.rel (%p357) target = $region32
        $region31: #{tpu_custom_call.1} parent=11 // pred_region
          %s361 = ssub.s32 4096, 4096
          %362 = vsyncadd [#allocation14], %s361
          %s363 = sshll.u32 [#allocation15], 4
          %s364 = int_to_ptr.vmem [resolvable:$true] %s363
          %369 = dma.hbm_to_vmem [thread:$0]  %s5, 4096, %s364, [#allocation14], 256, 256, 16
        $region32: #{tpu_custom_call.1} parent=11 // pred_fallthru
          _
        // Predicated region
        $region33: #{tpu_custom_call.1} parent=11 // pred_check
          %p370 = pneg %p190
        $region34: #{tpu_custom_call.1} parent=11 // pred_check_branch
          %372 = sbr.rel (%p370) target = $region36
        $region35: #{tpu_custom_call.1} parent=11 // pred_region
          _
        $region36: #{tpu_custom_call.1} parent=11 // pred_fallthru
          _
        // Predicated region
        $region37: #{tpu_custom_call.1} parent=11 // pred_check
          %p373 = pneg %p211
        $region38: #{tpu_custom_call.1} parent=11 // pred_check_branch
          %375 = sbr.rel (%p373) target = $region40
        $region39: #{tpu_custom_call.1} parent=11 // pred_region
          %s377 = ssub.s32 2048, 2048
          %378 = vsyncadd [#allocation17], %s377
          %s379 = sshll.u32 [#allocation16], 4
          %s380 = int_to_ptr.vmem [resolvable:$true] %s379
          %385 = dma.hbm_to_vmem [thread:$0]  %s7, 2048, %s380, [#allocation17], 128, 128, 8
        $region40: #{tpu_custom_call.1} parent=11 // pred_fallthru
          _
        // Predicated region
        $region41: #{tpu_custom_call.1} parent=11 // pred_check
          %p386 = pneg %p232
        $region42: #{tpu_custom_call.1} parent=11 // pred_check_branch
          %388 = sbr.rel (%p386) target = $region44
        $region43: #{tpu_custom_call.1} parent=11 // pred_region
          _
        $region44: #{tpu_custom_call.1} parent=11 // pred_fallthru
          _
        // Predicated region
        $region45: #{tpu_custom_call.1} parent=11 // pred_check
          %p389 = pneg %p253
        $region46: #{tpu_custom_call.1} parent=11 // pred_check_branch
          %391 = sbr.rel (%p389) target = $region48
        $region47: #{tpu_custom_call.1} parent=11 // pred_region
          %s393 = ssub.s32 2048, 2048
          %394 = vsyncadd [#allocation17], %s393
          %s395 = sshll.u32 [#allocation18], 4
          %s396 = int_to_ptr.vmem [resolvable:$true] %s395
          %401 = dma.hbm_to_vmem [thread:$0]  %s9, 2048, %s396, [#allocation17], 128, 128, 8
        $region48: #{tpu_custom_call.1} parent=11 // pred_fallthru
          _
        // Predicated region
        $region49: #{tpu_custom_call.1} parent=11 // pred_check
          %p402 = pneg %p274
        $region50: #{tpu_custom_call.1} parent=11 // pred_check_branch
          %404 = sbr.rel (%p402) target = $region52
        $region51: #{tpu_custom_call.1} parent=11 // pred_region
          _
        $region52: #{tpu_custom_call.1} parent=11 // pred_fallthru
          _
      $region12: #{tpu_custom_call.1} parent=5 // pred_fallthru
        _
      %p405 = scmp.lt.s32.totalorder %s24, 2
      // Predicated region
      $region53: #{tpu_custom_call.1} parent=5 // pred_check
        %p406 = pneg %p405
      $region54: #{tpu_custom_call.1} parent=5 // pred_check_branch
        %408 = sbr.rel (%p406) target = $region56
      $region55: #{tpu_custom_call.1} parent=5 // pred_region
        // Predicated region
        $region57: #{tpu_custom_call.1} parent=55 // pred_check
          %p409 = pneg %p58
        $region58: #{tpu_custom_call.1} parent=55 // pred_check_branch
          %411 = sbr.rel (%p409) target = $region60
        $region59: #{tpu_custom_call.1} parent=55 // pred_region
          %s412 = sand.u32 %s48, 1
          %s413 = scalar_lea.sflag [#allocation8], %s412
          %s414 = sand.u32 %s48, 1
          %s415 = smul.addr %s414, 32
          %s416 = scalar_lea.vmem [#allocation7], %s415
          %s417 = smul.u32 4, %s32
          %s419 = ssub.s32 512, 512
          %420 = vsyncadd %s413, %s419
          %s421 = sadd.s32 %s31, %s417
          %s422 = smul.addr %s421, 128
          %s423 = scalar_lea.hbm %s0, %s422
          %s424 = sshll.u32 %s416, 4
          %s425 = int_to_ptr.vmem [resolvable:$true] %s424
          %430 = dma.hbm_to_vmem [thread:$0]  %s423, 512, %s425, %s413, 128, 128, 8
        $region60: #{tpu_custom_call.1} parent=55 // pred_fallthru
          _
      $region56: #{tpu_custom_call.1} parent=5 // pred_fallthru
        _
      %p431 = scmp.le.s32.totalorder 1, %s24
      %p432 = scmp.lt.s32.totalorder %s24, 3
      %p433 = pnand %p431, %p432
      %p434 = pneg %p433
      // Predicated region
      $region61: #{tpu_custom_call.1} parent=5 // pred_check
        _
      $region62: #{tpu_custom_call.1} parent=5 // pred_check_branch
        %436 = sbr.rel (%p433) target = $region64
      $region63: #{tpu_custom_call.1} parent=5 // pred_region
        %s437 = ssub.s32 %s24, 1
        %s438 = sand.u32 %s51, 1
        %s439 = scalar_lea.sflag [#allocation8], %s438
        %s440 = sand.u32 %s51, 1
        %s441 = smul.addr %s440, 32
        %s442 = scalar_lea.vmem [#allocation7], %s441
        // Predicated region
        $region65: #{tpu_custom_call.1} parent=63 // pred_check
          %p443 = pneg %p64
        $region66: #{tpu_custom_call.1} parent=63 // pred_check_branch
          %445 = sbr.rel (%p443) target = $region68
        $region67: #{tpu_custom_call.1} parent=63 // pred_region
          %446 = dma.done %s439, 512
        $region68: #{tpu_custom_call.1} parent=63 // pred_fallthru
          _
        // Predicated region
        $region69: #{tpu_custom_call.1} parent=63 // pred_check
          %p447 = pneg %p85
        $region70: #{tpu_custom_call.1} parent=63 // pred_check_branch
          %449 = sbr.rel (%p447) target = $region72
        $region71: #{tpu_custom_call.1} parent=63 // pred_region
          %450 = dma.done [#allocation11], 1024
        $region72: #{tpu_custom_call.1} parent=63 // pred_fallthru
          _
        // Predicated region
        $region73: #{tpu_custom_call.1} parent=63 // pred_check
          %p451 = pneg %p106
        $region74: #{tpu_custom_call.1} parent=63 // pred_check_branch
          %453 = sbr.rel (%p451) target = $region76
        $region75: #{tpu_custom_call.1} parent=63 // pred_region
          %454 = dma.done [#allocation11], 4096
        $region76: #{tpu_custom_call.1} parent=63 // pred_fallthru
          _
        // Predicated region
        $region77: #{tpu_custom_call.1} parent=63 // pred_check
          %p455 = pneg %p148
        $region78: #{tpu_custom_call.1} parent=63 // pred_check_branch
          %457 = sbr.rel (%p455) target = $region80
        $region79: #{tpu_custom_call.1} parent=63 // pred_region
          %458 = dma.done [#allocation14], 4096
        $region80: #{tpu_custom_call.1} parent=63 // pred_fallthru
          _
        // Predicated region
        $region81: #{tpu_custom_call.1} parent=63 // pred_check
          %p459 = pneg %p169
        $region82: #{tpu_custom_call.1} parent=63 // pred_check_branch
          %461 = sbr.rel (%p459) target = $region84
        $region83: #{tpu_custom_call.1} parent=63 // pred_region
          %462 = dma.done [#allocation14], 4096
        $region84: #{tpu_custom_call.1} parent=63 // pred_fallthru
          _
        // Predicated region
        $region85: #{tpu_custom_call.1} parent=63 // pred_check
          %p463 = pneg %p211
        $region86: #{tpu_custom_call.1} parent=63 // pred_check_branch
          %465 = sbr.rel (%p463) target = $region88
        $region87: #{tpu_custom_call.1} parent=63 // pred_region
          %466 = dma.done [#allocation17], 2048
        $region88: #{tpu_custom_call.1} parent=63 // pred_fallthru
          _
        // Predicated region
        $region89: #{tpu_custom_call.1} parent=63 // pred_check
          %p467 = pneg %p253
        $region90: #{tpu_custom_call.1} parent=63 // pred_check_branch
          %469 = sbr.rel (%p467) target = $region92
        $region91: #{tpu_custom_call.1} parent=63 // pred_region
          %470 = dma.done [#allocation17], 2048
        $region92: #{tpu_custom_call.1} parent=63 // pred_fallthru
          _
        %s471 = sand.u32 %s51, 1
        %s472 = scalar_lea.sflag [#allocation8], %s471
        %s473 = sand.u32 %s51, 1
        %s474 = smul.addr %s473, 32
        %s475 = scalar_lea.vmem [#allocation7], %s474
        %p476 = pneg %p64
        %p477 = pneg %p61
        %p478 = pneg %p85
        %p479 = pneg %p82
        %p480 = pneg %p106
        %p481 = pneg %p103
        %p482 = pneg %p127
        %p483 = pneg %p124
        %p484 = pneg %p148
        %p485 = pneg %p145
        %p486 = pneg %p169
        %p487 = pneg %p166
        %p488 = pneg %p190
        %p489 = pneg %p187
        %p490 = pneg %p211
        %p491 = pneg %p208
        %p492 = pneg %p232
        %p493 = pneg %p229
        %p494 = pneg %p253
        %p495 = pneg %p250
        %p496 = pneg %p274
        %p497 = pneg %p271
        %p498 = pneg %p300
        %p499 = pneg %p297
        %s500 = smul.u32 4, %s34
        %p502 = scmp.eq.s32.totalorder %s34, 0
        // Predicated region
        $region93: #{tpu_custom_call.1} parent=63 // pred_check
          %p503 = pneg %p502
        $region94: #{tpu_custom_call.1} parent=63 // pred_check_branch
          %505 = sbr.rel (%p503) target = $region96
        $region95: #{tpu_custom_call.1} parent=63 // pred_region
          %506 = vst [vmem:[#allocation2] sm:$0xff] 0.0
          %507 = vst [vmem:[#allocation3] sm:$0xff] 0.0
          %508 = vst [vmem:[#allocation4] sm:$0xff] 0.0
          %509 = vst [vmem:[#allocation5] sm:$0xff] 0.0
        $region96: #{tpu_custom_call.1} parent=63 // pred_fallthru
          _
        %v510 = vld [vmem:[%s442] sm:$0xff]
        %v511 = vld [vmem:[%s442 + $0x8] sm:$0xff]
        %v512 = vld [vmem:[%s442 + $0x10] sm:$0xff]
        %v513 = vld [vmem:[%s442 + $0x18] sm:$0xff]
        %v514 = vpack.c.bf16 %v511, %v510
        %v515 = vpack.c.bf16 %v513, %v512
        %v516 = vld [vmem:[#allocation10] sm:$0xff]
        %v517 = vld [vmem:[#allocation10 + $0x8] sm:$0xff]
        %v518 = vld [vmem:[#allocation10 + $0x10] sm:$0xff]
        %v519 = vld [vmem:[#allocation10 + $0x18] sm:$0xff]
        %v520 = vld [vmem:[#allocation10 + $0x20] sm:$0xff]
        %v521 = vld [vmem:[#allocation10 + $0x28] sm:$0xff]
        %v522 = vld [vmem:[#allocation10 + $0x30] sm:$0xff]
        %v523 = vld [vmem:[#allocation10 + $0x38] sm:$0xff]
        %v524 = vld [vmem:[%s3] sm:$0xf]
        %v526 = vlaneseq
        %v527 = vshrl.u32 %v526, 7
        %v528 = vsub.s32 0, %v527
        %v529 = vrot.slane %v524, %v528
        %v530 = vlaneseq
        %v531 = vshrl.u32 %v530, 7
        %v532 = vsub.s32 1, %v531
        %v533 = vrot.slane %v524, %v532
        %v534 = vlaneseq
        %v535 = vshrl.u32 %v534, 7
        %v536 = vsub.s32 2, %v535
        %v537 = vrot.slane %v524, %v536
        %v538 = vlaneseq
        %v539 = vshrl.u32 %v538, 7
        %v540 = vsub.s32 3, %v539
        %v541 = vrot.slane %v524, %v540
        %v554 = vunpack.c.l.b16 %v516
        %v555 = vunpack.c.h.b16 %v516
        %v556 = vunpack.c.l.b16 %v517
        %v557 = vunpack.c.h.b16 %v517
        %v558 = vunpack.c.l.b16 %v518
        %v559 = vunpack.c.h.b16 %v518
        %v560 = vunpack.c.l.b16 %v519
        %v561 = vunpack.c.h.b16 %v519
        %v562 = vunpack.c.l.b16 %v520
        %v563 = vunpack.c.h.b16 %v520
        %v564 = vunpack.c.l.b16 %v521
        %v565 = vunpack.c.h.b16 %v521
        %v566 = vunpack.c.l.b16 %v522
        %v567 = vunpack.c.h.b16 %v522
        %v568 = vunpack.c.l.b16 %v523
        %v569 = vunpack.c.h.b16 %v523
        %v570 = vpack.c.b16 %v558, %v554
        %v571 = vpack.c.b16 %v559, %v555
        %v572 = vpack.c.b16 %v560, %v556
        %v573 = vpack.c.b16 %v561, %v557
        %v574 = vpack.c.b16 %v566, %v562
        %v575 = vpack.c.b16 %v567, %v563
        %v576 = vpack.c.b16 %v568, %v564
        %v577 = vpack.c.b16 %v569, %v565
        %vm586 = vcmask 261120
        %v588 = vsel %vm586, %v514, 0
        %v591 = vsel %vm586, %v515, 0
        %593 = vmatprep.subr.bf16.mxu0 0
        %594 = vmatpush1.bf16.msra.mxu0 0
        %595 = vmatprep.subr.bf16.mxu0 0
        %596 = vmatpush1.bf16.msra.mxu0 0
        %597 = vmatprep.subr.bf16.mxu0 0
        %598 = vmatpush1.bf16.msra.mxu0 0
        %599 = vmatprep.subr.bf16.mxu0 0
        %600 = vmatpush1.bf16.msra.mxu0 0
        %601 = vmatprep.subr.bf16.mxu0 0
        %602 = vmatpush1.bf16.msra.mxu0 0
        %603 = vmatprep.subr.bf16.mxu0 0
        %604 = vmatpush1.bf16.msra.mxu0 0
        %605 = vmatprep.subr.bf16.mxu0 %v575
        %606 = vmatpush1.bf16.msra.mxu0 %v574
        %607 = vmatprep.subr.bf16.mxu0 %v571
        %608 = vmatpush1.bf16.msra.mxu0 %v570
        %609 = vmatprep.subr.bf16.mxu0 0
        %610 = vmatpush2.bf16.msra.mxu0 0
        %611 = vmatprep.subr.bf16.mxu0 0
        %612 = vmatpush2.bf16.msra.mxu0 0
        %613 = vmatprep.subr.bf16.mxu0 0
        %614 = vmatpush2.bf16.msra.mxu0 0
        %615 = vmatprep.subr.bf16.mxu0 0
        %616 = vmatpush2.bf16.msra.mxu0 0
        %617 = vmatprep.subr.bf16.mxu0 0
        %618 = vmatpush2.bf16.msra.mxu0 0
        %619 = vmatprep.subr.bf16.mxu0 0
        %620 = vmatpush2.bf16.msra.mxu0 0
        %621 = vmatprep.subr.bf16.mxu0 0
        %622 = vmatpush2.bf16.msra.mxu0 0
        %623 = vmatprep.subr.bf16.mxu0 0
        %624 = vmatpush2.bf16.msra.mxu0 0
        %625 = vmatprep.mubr.bf16.mxu0 0
        %626 = vmatmul.mubr.bf16.gmra.mxu0 %v588
        %v627 = vpop.f32.mrf.mxu0
        %v628 = vadd.f32 %v529, %v627
        %v629 = vpop.f32.mrf.mxu0
        %v630 = vadd.f32 %v533, %v629
        %v631 = vpop.f32.mrf.mxu0
        %v632 = vadd.f32 %v529, %v631
        %v633 = vpop.f32.mrf.mxu0
        %v634 = vadd.f32 %v533, %v633
        %635 = vmatprep.mubr.bf16.mxu0 0
        %636 = vmatmul.mubr.bf16.gmra.mxu0 %v591
        %v637 = vpop.f32.mrf.mxu0
        %v638 = vadd.f32 %v529, %v637
        %v639 = vpop.f32.mrf.mxu0
        %v640 = vadd.f32 %v533, %v639
        %v641 = vpop.f32.mrf.mxu0
        %v642 = vadd.f32 %v529, %v641
        %v643 = vpop.f32.mrf.mxu0
        %v644 = vadd.f32 %v533, %v643
        %645 = vdwg.mxu0
        %646 = vmatprep.subr.bf16.mxu0 0
        %647 = vmatpush1.bf16.msra.mxu0 0
        %648 = vmatprep.subr.bf16.mxu0 0
        %649 = vmatpush1.bf16.msra.mxu0 0
        %650 = vmatprep.subr.bf16.mxu0 0
        %651 = vmatpush1.bf16.msra.mxu0 0
        %652 = vmatprep.subr.bf16.mxu0 0
        %653 = vmatpush1.bf16.msra.mxu0 0
        %654 = vmatprep.subr.bf16.mxu0 0
        %655 = vmatpush1.bf16.msra.mxu0 0
        %656 = vmatprep.subr.bf16.mxu0 0
        %657 = vmatpush1.bf16.msra.mxu0 0
        %658 = vmatprep.subr.bf16.mxu0 %v577
        %659 = vmatpush1.bf16.msra.mxu0 %v576
        %660 = vmatprep.subr.bf16.mxu0 %v573
        %661 = vmatpush1.bf16.msra.mxu0 %v572
        %662 = vmatprep.subr.bf16.mxu0 0
        %663 = vmatpush2.bf16.msra.mxu0 0
        %664 = vmatprep.subr.bf16.mxu0 0
        %665 = vmatpush2.bf16.msra.mxu0 0
        %666 = vmatprep.subr.bf16.mxu0 0
        %667 = vmatpush2.bf16.msra.mxu0 0
        %668 = vmatprep.subr.bf16.mxu0 0
        %669 = vmatpush2.bf16.msra.mxu0 0
        %670 = vmatprep.subr.bf16.mxu0 0
        %671 = vmatpush2.bf16.msra.mxu0 0
        %672 = vmatprep.subr.bf16.mxu0 0
        %673 = vmatpush2.bf16.msra.mxu0 0
        %674 = vmatprep.subr.bf16.mxu0 0
        %675 = vmatpush2.bf16.msra.mxu0 0
        %676 = vmatprep.subr.bf16.mxu0 0
        %677 = vmatpush2.bf16.msra.mxu0 0
        %678 = vmatprep.mubr.bf16.mxu0 0
        %679 = vmatmul.mubr.bf16.gmra.mxu0 %v588
        %v680 = vpop.f32.mrf.mxu0
        %v681 = vadd.f32 %v537, %v680
        %v682 = vpop.f32.mrf.mxu0
        %v683 = vadd.f32 %v541, %v682
        %v684 = vpop.f32.mrf.mxu0
        %v685 = vadd.f32 %v537, %v684
        %v686 = vpop.f32.mrf.mxu0
        %v687 = vadd.f32 %v541, %v686
        %688 = vmatprep.mubr.bf16.mxu0 0
        %689 = vmatmul.mubr.bf16.gmra.mxu0 %v591
        %v690 = vpop.f32.mrf.mxu0
        %v691 = vadd.f32 %v537, %v690
        %v692 = vpop.f32.mrf.mxu0
        %v693 = vadd.f32 %v541, %v692
        %v694 = vpop.f32.mrf.mxu0
        %v695 = vadd.f32 %v537, %v694
        %v696 = vpop.f32.mrf.mxu0
        %v697 = vadd.f32 %v541, %v696
        %698 = vdwg.mxu0
        %699 = vst [vmem:[#allocation6] sm:$0xff] %v628
        %700 = vst [vmem:[#allocation6 + $0x8] sm:$0xff] %v630
        %701 = vst [vmem:[#allocation6 + $0x10] sm:$0xff] %v681
        %702 = vst [vmem:[#allocation6 + $0x18] sm:$0xff] %v683
        %703 = vst [vmem:[#allocation6 + $0x20] sm:$0xff] %v632
        %704 = vst [vmem:[#allocation6 + $0x28] sm:$0xff] %v634
        %705 = vst [vmem:[#allocation6 + $0x30] sm:$0xff] %v685
        %706 = vst [vmem:[#allocation6 + $0x38] sm:$0xff] %v687
        %707 = vst [vmem:[#allocation6 + $0x40] sm:$0xff] %v638
        %708 = vst [vmem:[#allocation6 + $0x48] sm:$0xff] %v640
        %709 = vst [vmem:[#allocation6 + $0x50] sm:$0xff] %v691
        %710 = vst [vmem:[#allocation6 + $0x58] sm:$0xff] %v693
        %711 = vst [vmem:[#allocation6 + $0x60] sm:$0xff] %v642
        %712 = vst [vmem:[#allocation6 + $0x68] sm:$0xff] %v644
        %713 = vst [vmem:[#allocation6 + $0x70] sm:$0xff] %v695
        %714 = vst [vmem:[#allocation6 + $0x78] sm:$0xff] %v697
        %v715 = vld [vmem:[#allocation12] sm:$0xff]
        %v716 = vld [vmem:[#allocation12 + $0x8] sm:$0xff]
        %v717 = vld [vmem:[#allocation12 + $0x10] sm:$0xff]
        %v718 = vld [vmem:[#allocation12 + $0x18] sm:$0xff]
        %v719 = vld [vmem:[#allocation12 + $0x20] sm:$0xff]
        %v720 = vld [vmem:[#allocation12 + $0x28] sm:$0xff]
        %v721 = vld [vmem:[#allocation12 + $0x30] sm:$0xff]
        %v722 = vld [vmem:[#allocation12 + $0x38] sm:$0xff]
        %v723 = vld [vmem:[#allocation12 + $0x40] sm:$0xff]
        %v724 = vld [vmem:[#allocation12 + $0x48] sm:$0xff]
        %v725 = vld [vmem:[#allocation12 + $0x50] sm:$0xff]
        %v726 = vld [vmem:[#allocation12 + $0x58] sm:$0xff]
        %v727 = vld [vmem:[#allocation12 + $0x60] sm:$0xff]
        %v728 = vld [vmem:[#allocation12 + $0x68] sm:$0xff]
        %v729 = vld [vmem:[#allocation12 + $0x70] sm:$0xff]
        %v730 = vld [vmem:[#allocation12 + $0x78] sm:$0xff]
        %v731 = vld [vmem:[#allocation12 + $0x80] sm:$0xff]
        %v732 = vld [vmem:[#allocation12 + $0x88] sm:$0xff]
        %v733 = vld [vmem:[#allocation12 + $0x90] sm:$0xff]
        %v734 = vld [vmem:[#allocation12 + $0x98] sm:$0xff]
        %v735 = vld [vmem:[#allocation12 + $0xa0] sm:$0xff]
        %v736 = vld [vmem:[#allocation12 + $0xa8] sm:$0xff]
        %v737 = vld [vmem:[#allocation12 + $0xb0] sm:$0xff]
        %v738 = vld [vmem:[#allocation12 + $0xb8] sm:$0xff]
        %v739 = vld [vmem:[#allocation12 + $0xc0] sm:$0xff]
        %v740 = vld [vmem:[#allocation12 + $0xc8] sm:$0xff]
        %v741 = vld [vmem:[#allocation12 + $0xd0] sm:$0xff]
        %v742 = vld [vmem:[#allocation12 + $0xd8] sm:$0xff]
        %v743 = vld [vmem:[#allocation12 + $0xe0] sm:$0xff]
        %v744 = vld [vmem:[#allocation12 + $0xe8] sm:$0xff]
        %v745 = vld [vmem:[#allocation12 + $0xf0] sm:$0xff]
        %v746 = vld [vmem:[#allocation12 + $0xf8] sm:$0xff]
        %v747 = vld [vmem:[#allocation13] sm:$0xff]
        %v748 = vld [vmem:[#allocation13 + $0x8] sm:$0xff]
        %v749 = vld [vmem:[#allocation13 + $0x10] sm:$0xff]
        %v750 = vld [vmem:[#allocation13 + $0x18] sm:$0xff]
        %v751 = vld [vmem:[#allocation13 + $0x20] sm:$0xff]
        %v752 = vld [vmem:[#allocation13 + $0x28] sm:$0xff]
        %v753 = vld [vmem:[#allocation13 + $0x30] sm:$0xff]
        %v754 = vld [vmem:[#allocation13 + $0x38] sm:$0xff]
        %v755 = vld [vmem:[#allocation13 + $0x40] sm:$0xff]
        %v756 = vld [vmem:[#allocation13 + $0x48] sm:$0xff]
        %v757 = vld [vmem:[#allocation13 + $0x50] sm:$0xff]
        %v758 = vld [vmem:[#allocation13 + $0x58] sm:$0xff]
        %v759 = vld [vmem:[#allocation13 + $0x60] sm:$0xff]
        %v760 = vld [vmem:[#allocation13 + $0x68] sm:$0xff]
        %v761 = vld [vmem:[#allocation13 + $0x70] sm:$0xff]
        %v762 = vld [vmem:[#allocation13 + $0x78] sm:$0xff]
        %v763 = vld [vmem:[#allocation13 + $0x80] sm:$0xff]
        %v764 = vld [vmem:[#allocation13 + $0x88] sm:$0xff]
        %v765 = vld [vmem:[#allocation13 + $0x90] sm:$0xff]
        %v766 = vld [vmem:[#allocation13 + $0x98] sm:$0xff]
        %v767 = vld [vmem:[#allocation13 + $0xa0] sm:$0xff]
        %v768 = vld [vmem:[#allocation13 + $0xa8] sm:$0xff]
        %v769 = vld [vmem:[#allocation13 + $0xb0] sm:$0xff]
        %v770 = vld [vmem:[#allocation13 + $0xb8] sm:$0xff]
        %v771 = vld [vmem:[#allocation13 + $0xc0] sm:$0xff]
        %v772 = vld [vmem:[#allocation13 + $0xc8] sm:$0xff]
        %v773 = vld [vmem:[#allocation13 + $0xd0] sm:$0xff]
        %v774 = vld [vmem:[#allocation13 + $0xd8] sm:$0xff]
        %v775 = vld [vmem:[#allocation13 + $0xe0] sm:$0xff]
        %v776 = vld [vmem:[#allocation13 + $0xe8] sm:$0xff]
        %v777 = vld [vmem:[#allocation13 + $0xf0] sm:$0xff]
        %v778 = vld [vmem:[#allocation13 + $0xf8] sm:$0xff]
        %v779 = vld [vmem:[#allocation15] sm:$0xff]
        %v780 = vld [vmem:[#allocation15 + $0x8] sm:$0xff]
        %v781 = vld [vmem:[#allocation15 + $0x10] sm:$0xff]
        %v782 = vld [vmem:[#allocation15 + $0x18] sm:$0xff]
        %v783 = vld [vmem:[#allocation15 + $0x20] sm:$0xff]
        %v784 = vld [vmem:[#allocation15 + $0x28] sm:$0xff]
        %v785 = vld [vmem:[#allocation15 + $0x30] sm:$0xff]
        %v786 = vld [vmem:[#allocation15 + $0x38] sm:$0xff]
        %v787 = vld [vmem:[#allocation15 + $0x40] sm:$0xff]
        %v788 = vld [vmem:[#allocation15 + $0x48] sm:$0xff]
        %v789 = vld [vmem:[#allocation15 + $0x50] sm:$0xff]
        %v790 = vld [vmem:[#allocation15 + $0x58] sm:$0xff]
        %v791 = vld [vmem:[#allocation15 + $0x60] sm:$0xff]
        %v792 = vld [vmem:[#allocation15 + $0x68] sm:$0xff]
        %v793 = vld [vmem:[#allocation15 + $0x70] sm:$0xff]
        %v794 = vld [vmem:[#allocation15 + $0x78] sm:$0xff]
        %v795 = vld [vmem:[#allocation15 + $0x80] sm:$0xff]
        %v796 = vld [vmem:[#allocation15 + $0x88] sm:$0xff]
        %v797 = vld [vmem:[#allocation15 + $0x90] sm:$0xff]
        %v798 = vld [vmem:[#allocation15 + $0x98] sm:$0xff]
        %v799 = vld [vmem:[#allocation15 + $0xa0] sm:$0xff]
        %v800 = vld [vmem:[#allocation15 + $0xa8] sm:$0xff]
        %v801 = vld [vmem:[#allocation15 + $0xb0] sm:$0xff]
        %v802 = vld [vmem:[#allocation15 + $0xb8] sm:$0xff]
        %v803 = vld [vmem:[#allocation15 + $0xc0] sm:$0xff]
        %v804 = vld [vmem:[#allocation15 + $0xc8] sm:$0xff]
        %v805 = vld [vmem:[#allocation15 + $0xd0] sm:$0xff]
        %v806 = vld [vmem:[#allocation15 + $0xd8] sm:$0xff]
        %v807 = vld [vmem:[#allocation15 + $0xe0] sm:$0xff]
        %v808 = vld [vmem:[#allocation15 + $0xe8] sm:$0xff]
        %v809 = vld [vmem:[#allocation15 + $0xf0] sm:$0xff]
        %v810 = vld [vmem:[#allocation15 + $0xf8] sm:$0xff]
        %v811 = vld [vmem:[%s6] sm:$0xf]
        %v813 = vlaneseq
        %v814 = vshrl.u32 %v813, 7
        %v815 = vsub.s32 0, %v814
        %v816 = vrot.slane %v811, %v815
        %v817 = vlaneseq
        %v818 = vshrl.u32 %v817, 7
        %v819 = vsub.s32 1, %v818
        %v820 = vrot.slane %v811, %v819
        %v821 = vlaneseq
        %v822 = vshrl.u32 %v821, 7
        %v823 = vsub.s32 2, %v822
        %v824 = vrot.slane %v811, %v823
        %v825 = vlaneseq
        %v826 = vshrl.u32 %v825, 7
        %v827 = vsub.s32 3, %v826
        %v828 = vrot.slane %v811, %v827
        %v833 = vld [vmem:[#allocation2] sm:$0xff]
        %v834 = vld [vmem:[#allocation3] sm:$0xff]
        %v835 = vld [vmem:[#allocation4] sm:$0xff]
        %v836 = vld [vmem:[#allocation5] sm:$0xff]
        %v837 = vld [vmem:[#allocation6] sm:$0xff]
        %v838 = vld [vmem:[#allocation6 + $0x8] sm:$0xff]
        %v839 = vld [vmem:[#allocation6 + $0x10] sm:$0xff]
        %v840 = vld [vmem:[#allocation6 + $0x18] sm:$0xff]
        %v841 = vpack.c.bf16 %v833, %v833
        %v874 = vunpack.c.l.b16 %v715
        %v875 = vunpack.c.h.b16 %v715
        %v876 = vunpack.c.l.b16 %v716
        %v877 = vunpack.c.h.b16 %v716
        %v878 = vunpack.c.l.b16 %v717
        %v879 = vunpack.c.h.b16 %v717
        %v880 = vunpack.c.l.b16 %v718
        %v881 = vunpack.c.h.b16 %v718
        %v882 = vunpack.c.l.b16 %v719
        %v883 = vunpack.c.h.b16 %v719
        %v884 = vunpack.c.l.b16 %v720
        %v885 = vunpack.c.h.b16 %v720
        %v886 = vunpack.c.l.b16 %v721
        %v887 = vunpack.c.h.b16 %v721
        %v888 = vunpack.c.l.b16 %v722
        %v889 = vunpack.c.h.b16 %v722
        %v890 = vunpack.c.l.b16 %v723
        %v891 = vunpack.c.h.b16 %v723
        %v892 = vunpack.c.l.b16 %v724
        %v893 = vunpack.c.h.b16 %v724
        %v894 = vunpack.c.l.b16 %v725
        %v895 = vunpack.c.h.b16 %v725
        %v896 = vunpack.c.l.b16 %v726
        %v897 = vunpack.c.h.b16 %v726
        %v898 = vunpack.c.l.b16 %v727
        %v899 = vunpack.c.h.b16 %v727
        %v900 = vunpack.c.l.b16 %v728
        %v901 = vunpack.c.h.b16 %v728
        %v902 = vunpack.c.l.b16 %v729
        %v903 = vunpack.c.h.b16 %v729
        %v904 = vunpack.c.l.b16 %v730
        %v905 = vunpack.c.h.b16 %v730
        %v906 = vunpack.c.l.b16 %v731
        %v907 = vunpack.c.h.b16 %v731
        %v908 = vunpack.c.l.b16 %v732
        %v909 = vunpack.c.h.b16 %v732
        %v910 = vunpack.c.l.b16 %v733
        %v911 = vunpack.c.h.b16 %v733
        %v912 = vunpack.c.l.b16 %v734
        %v913 = vunpack.c.h.b16 %v734
        %v914 = vunpack.c.l.b16 %v735
        %v915 = vunpack.c.h.b16 %v735
        %v916 = vunpack.c.l.b16 %v736
        %v917 = vunpack.c.h.b16 %v736
        %v918 = vunpack.c.l.b16 %v737
        %v919 = vunpack.c.h.b16 %v737
        %v920 = vunpack.c.l.b16 %v738
        %v921 = vunpack.c.h.b16 %v738
        %v922 = vunpack.c.l.b16 %v739
        %v923 = vunpack.c.h.b16 %v739
        %v924 = vunpack.c.l.b16 %v740
        %v925 = vunpack.c.h.b16 %v740
        %v926 = vunpack.c.l.b16 %v741
        %v927 = vunpack.c.h.b16 %v741
        %v928 = vunpack.c.l.b16 %v742
        %v929 = vunpack.c.h.b16 %v742
        %v930 = vunpack.c.l.b16 %v743
        %v931 = vunpack.c.h.b16 %v743
        %v932 = vunpack.c.l.b16 %v744
        %v933 = vunpack.c.h.b16 %v744
        %v934 = vunpack.c.l.b16 %v745
        %v935 = vunpack.c.h.b16 %v745
        %v936 = vunpack.c.l.b16 %v746
        %v937 = vunpack.c.h.b16 %v746
        %v938 = vpack.c.b16 %v878, %v874
        %v939 = vpack.c.b16 %v879, %v875
        %v940 = vpack.c.b16 %v880, %v876
        %v941 = vpack.c.b16 %v881, %v877
        %v942 = vpack.c.b16 %v886, %v882
        %v943 = vpack.c.b16 %v887, %v883
        %v944 = vpack.c.b16 %v888, %v884
        %v945 = vpack.c.b16 %v889, %v885
        %v946 = vpack.c.b16 %v894, %v890
        %v947 = vpack.c.b16 %v895, %v891
        %v948 = vpack.c.b16 %v896, %v892
        %v949 = vpack.c.b16 %v897, %v893
        %v950 = vpack.c.b16 %v902, %v898
        %v951 = vpack.c.b16 %v903, %v899
        %v952 = vpack.c.b16 %v904, %v900
        %v953 = vpack.c.b16 %v905, %v901
        %v954 = vpack.c.b16 %v910, %v906
        %v955 = vpack.c.b16 %v911, %v907
        %v956 = vpack.c.b16 %v912, %v908
        %v957 = vpack.c.b16 %v913, %v909
        %v958 = vpack.c.b16 %v918, %v914
        %v959 = vpack.c.b16 %v919, %v915
        %v960 = vpack.c.b16 %v920, %v916
        %v961 = vpack.c.b16 %v921, %v917
        %v962 = vpack.c.b16 %v926, %v922
        %v963 = vpack.c.b16 %v927, %v923
        %v964 = vpack.c.b16 %v928, %v924
        %v965 = vpack.c.b16 %v929, %v925
        %v966 = vpack.c.b16 %v934, %v930
        %v967 = vpack.c.b16 %v935, %v931
        %v968 = vpack.c.b16 %v936, %v932
        %v969 = vpack.c.b16 %v937, %v933
        %1002 = vmatprep.subr.bf16.mxu0 %v967
        %1003 = vmatpush1.bf16.msra.mxu0 %v966
        %1004 = vmatprep.subr.bf16.mxu0 %v963
        %1005 = vmatpush1.bf16.msra.mxu0 %v962
        %1006 = vmatprep.subr.bf16.mxu0 %v959
        %1007 = vmatpush1.bf16.msra.mxu0 %v958
        %1008 = vmatprep.subr.bf16.mxu0 %v955
        %1009 = vmatpush1.bf16.msra.mxu0 %v954
        %1010 = vmatprep.subr.bf16.mxu0 %v951
        %1011 = vmatpush1.bf16.msra.mxu0 %v950
        %1012 = vmatprep.subr.bf16.mxu0 %v947
        %1013 = vmatpush1.bf16.msra.mxu0 %v946
        %1014 = vmatprep.subr.bf16.mxu0 %v943
        %1015 = vmatpush1.bf16.msra.mxu0 %v942
        %1016 = vmatprep.subr.bf16.mxu0 %v939
        %1017 = vmatpush1.bf16.msra.mxu0 %v938
        %1018 = vmatprep.subr.bf16.mxu0 0
        %1019 = vmatpush2.bf16.msra.mxu0 0
        %1020 = vmatprep.subr.bf16.mxu0 0
        %1021 = vmatpush2.bf16.msra.mxu0 0
        %1022 = vmatprep.subr.bf16.mxu0 0
        %1023 = vmatpush2.bf16.msra.mxu0 0
        %1024 = vmatprep.subr.bf16.mxu0 0
        %1025 = vmatpush2.bf16.msra.mxu0 0
        %1026 = vmatprep.subr.bf16.mxu0 0
        %1027 = vmatpush2.bf16.msra.mxu0 0
        %1028 = vmatprep.subr.bf16.mxu0 0
        %1029 = vmatpush2.bf16.msra.mxu0 0
        %1030 = vmatprep.subr.bf16.mxu0 0
        %1031 = vmatpush2.bf16.msra.mxu0 0
        %1032 = vmatprep.subr.bf16.mxu0 0
        %1033 = vmatpush2.bf16.msra.mxu0 0
        %1034 = vmatprep.mubr.bf16.mxu0 0
        %1035 = vmatmul.mubr.bf16.gmra.mxu0 %v841
        %v1036 = vpop.f32.mrf.mxu0
        %v1037 = vadd.f32 0.0, %v1036
        %v1038 = vpop.f32.mrf.mxu0
        %v1039 = vadd.f32 0.0, %v1038
        %v1040 = vpop.f32.mrf.mxu0
        %v1041 = vpop.f32.mrf.mxu0
        %1042 = vdwg.mxu0
        %1043 = vmatprep.subr.bf16.mxu0 %v969
        %1044 = vmatpush1.bf16.msra.mxu0 %v968
        %1045 = vmatprep.subr.bf16.mxu0 %v965
        %1046 = vmatpush1.bf16.msra.mxu0 %v964
        %1047 = vmatprep.subr.bf16.mxu0 %v961
        %1048 = vmatpush1.bf16.msra.mxu0 %v960
        %1049 = vmatprep.subr.bf16.mxu0 %v957
        %1050 = vmatpush1.bf16.msra.mxu0 %v956
        %1051 = vmatprep.subr.bf16.mxu0 %v953
        %1052 = vmatpush1.bf16.msra.mxu0 %v952
        %1053 = vmatprep.subr.bf16.mxu0 %v949
        %1054 = vmatpush1.bf16.msra.mxu0 %v948
        %1055 = vmatprep.subr.bf16.mxu0 %v945
        %1056 = vmatpush1.bf16.msra.mxu0 %v944
        %1057 = vmatprep.subr.bf16.mxu0 %v941
        %1058 = vmatpush1.bf16.msra.mxu0 %v940
        %1059 = vmatprep.subr.bf16.mxu0 0
        %1060 = vmatpush2.bf16.msra.mxu0 0
        %1061 = vmatprep.subr.bf16.mxu0 0
        %1062 = vmatpush2.bf16.msra.mxu0 0
        %1063 = vmatprep.subr.bf16.mxu0 0
        %1064 = vmatpush2.bf16.msra.mxu0 0
        %1065 = vmatprep.subr.bf16.mxu0 0
        %1066 = vmatpush2.bf16.msra.mxu0 0
        %1067 = vmatprep.subr.bf16.mxu0 0
        %1068 = vmatpush2.bf16.msra.mxu0 0
        %1069 = vmatprep.subr.bf16.mxu0 0
        %1070 = vmatpush2.bf16.msra.mxu0 0
        %1071 = vmatprep.subr.bf16.mxu0 0
        %1072 = vmatpush2.bf16.msra.mxu0 0
        %1073 = vmatprep.subr.bf16.mxu0 0
        %1074 = vmatpush2.bf16.msra.mxu0 0
        %1075 = vmatprep.mubr.bf16.mxu0 0
        %1076 = vmatmul.mubr.bf16.gmra.mxu0 %v841
        %v1077 = vpop.f32.mrf.mxu0
        %v1078 = vadd.f32 0.0, %v1077
        %v1079 = vpop.f32.mrf.mxu0
        %v1080 = vadd.f32 0.0, %v1079
        %v1081 = vpop.f32.mrf.mxu0
        %v1082 = vpop.f32.mrf.mxu0
        %1083 = vdwg.mxu0
        %v1084 = vadd.f32 %v837, %v1037
        %v1085 = vadd.f32 %v838, %v1039
        %v1086 = vadd.f32 %v839, %v1078
        %v1087 = vadd.f32 %v840, %v1080
        %v1088 = vxor.u32 %v1084, 2147483648
        %v1089 = vmul.f32 %v1088, 1.442695
        %v1090 = vpow.pop %v1089
        %v1091 = vadd.f32 %v1090, 1.0
        %v1092 = vrcp.pop %v1091
        %v1093 = vmul.f32 1.0, %v1092
        %v1094 = vxor.u32 %v1085, 2147483648
        %v1095 = vmul.f32 %v1094, 1.442695
        %v1096 = vpow.pop %v1095
        %v1097 = vadd.f32 %v1096, 1.0
        %v1098 = vrcp.pop %v1097
        %v1099 = vmul.f32 1.0, %v1098
        %v1100 = vtanh.pop %v1086
        %v1101 = vxor.u32 %v1087, 2147483648
        %v1102 = vmul.f32 %v1101, 1.442695
        %v1103 = vpow.pop %v1102
        %v1104 = vadd.f32 %v1103, 1.0
        %v1105 = vrcp.pop %v1104
        %v1106 = vmul.f32 1.0, %v1105
        %v1107 = vmul.f32 %v1099, %v834
        %v1108 = vmul.f32 %v1093, %v1100
        %v1109 = vadd.f32 %v1107, %v1108
        %v1110 = vtanh.pop %v1109
        %v1111 = vmul.f32 %v1106, %v1110
        %v1112 = vpack.c.bf16 %v835, %v835
        %v1145 = vunpack.c.l.b16 %v779
        %v1146 = vunpack.c.h.b16 %v779
        %v1147 = vunpack.c.l.b16 %v780
        %v1148 = vunpack.c.h.b16 %v780
        %v1149 = vunpack.c.l.b16 %v781
        %v1150 = vunpack.c.h.b16 %v781
        %v1151 = vunpack.c.l.b16 %v782
        %v1152 = vunpack.c.h.b16 %v782
        %v1153 = vunpack.c.l.b16 %v783
        %v1154 = vunpack.c.h.b16 %v783
        %v1155 = vunpack.c.l.b16 %v784
        %v1156 = vunpack.c.h.b16 %v784
        %v1157 = vunpack.c.l.b16 %v785
        %v1158 = vunpack.c.h.b16 %v785
        %v1159 = vunpack.c.l.b16 %v786
        %v1160 = vunpack.c.h.b16 %v786
        %v1161 = vunpack.c.l.b16 %v787
        %v1162 = vunpack.c.h.b16 %v787
        %v1163 = vunpack.c.l.b16 %v788
        %v1164 = vunpack.c.h.b16 %v788
        %v1165 = vunpack.c.l.b16 %v789
        %v1166 = vunpack.c.h.b16 %v789
        %v1167 = vunpack.c.l.b16 %v790
        %v1168 = vunpack.c.h.b16 %v790
        %v1169 = vunpack.c.l.b16 %v791
        %v1170 = vunpack.c.h.b16 %v791
        %v1171 = vunpack.c.l.b16 %v792
        %v1172 = vunpack.c.h.b16 %v792
        %v1173 = vunpack.c.l.b16 %v793
        %v1174 = vunpack.c.h.b16 %v793
        %v1175 = vunpack.c.l.b16 %v794
        %v1176 = vunpack.c.h.b16 %v794
        %v1177 = vunpack.c.l.b16 %v795
        %v1178 = vunpack.c.h.b16 %v795
        %v1179 = vunpack.c.l.b16 %v796
        %v1180 = vunpack.c.h.b16 %v796
        %v1181 = vunpack.c.l.b16 %v797
        %v1182 = vunpack.c.h.b16 %v797
        %v1183 = vunpack.c.l.b16 %v798
        %v1184 = vunpack.c.h.b16 %v798
        %v1185 = vunpack.c.l.b16 %v799
        %v1186 = vunpack.c.h.b16 %v799
        %v1187 = vunpack.c.l.b16 %v800
        %v1188 = vunpack.c.h.b16 %v800
        %v1189 = vunpack.c.l.b16 %v801
        %v1190 = vunpack.c.h.b16 %v801
        %v1191 = vunpack.c.l.b16 %v802
        %v1192 = vunpack.c.h.b16 %v802
        %v1193 = vunpack.c.l.b16 %v803
        %v1194 = vunpack.c.h.b16 %v803
        %v1195 = vunpack.c.l.b16 %v804
        %v1196 = vunpack.c.h.b16 %v804
        %v1197 = vunpack.c.l.b16 %v805
        %v1198 = vunpack.c.h.b16 %v805
        %v1199 = vunpack.c.l.b16 %v806
        %v1200 = vunpack.c.h.b16 %v806
        %v1201 = vunpack.c.l.b16 %v807
        %v1202 = vunpack.c.h.b16 %v807
        %v1203 = vunpack.c.l.b16 %v808
        %v1204 = vunpack.c.h.b16 %v808
        %v1205 = vunpack.c.l.b16 %v809
        %v1206 = vunpack.c.h.b16 %v809
        %v1207 = vunpack.c.l.b16 %v810
        %v1208 = vunpack.c.h.b16 %v810
        %v1209 = vpack.c.b16 %v1149, %v1145
        %v1210 = vpack.c.b16 %v1150, %v1146
        %v1211 = vpack.c.b16 %v1151, %v1147
        %v1212 = vpack.c.b16 %v1152, %v1148
        %v1213 = vpack.c.b16 %v1157, %v1153
        %v1214 = vpack.c.b16 %v1158, %v1154
        %v1215 = vpack.c.b16 %v1159, %v1155
        %v1216 = vpack.c.b16 %v1160, %v1156
        %v1217 = vpack.c.b16 %v1165, %v1161
        %v1218 = vpack.c.b16 %v1166, %v1162
        %v1219 = vpack.c.b16 %v1167, %v1163
        %v1220 = vpack.c.b16 %v1168, %v1164
        %v1221 = vpack.c.b16 %v1173, %v1169
        %v1222 = vpack.c.b16 %v1174, %v1170
        %v1223 = vpack.c.b16 %v1175, %v1171
        %v1224 = vpack.c.b16 %v1176, %v1172
        %v1225 = vpack.c.b16 %v1181, %v1177
        %v1226 = vpack.c.b16 %v1182, %v1178
        %v1227 = vpack.c.b16 %v1183, %v1179
        %v1228 = vpack.c.b16 %v1184, %v1180
        %v1229 = vpack.c.b16 %v1189, %v1185
        %v1230 = vpack.c.b16 %v1190, %v1186
        %v1231 = vpack.c.b16 %v1191, %v1187
        %v1232 = vpack.c.b16 %v1192, %v1188
        %v1233 = vpack.c.b16 %v1197, %v1193
        %v1234 = vpack.c.b16 %v1198, %v1194
        %v1235 = vpack.c.b16 %v1199, %v1195
        %v1236 = vpack.c.b16 %v1200, %v1196
        %v1237 = vpack.c.b16 %v1205, %v1201
        %v1238 = vpack.c.b16 %v1206, %v1202
        %v1239 = vpack.c.b16 %v1207, %v1203
        %v1240 = vpack.c.b16 %v1208, %v1204
        %1273 = vmatprep.subr.bf16.mxu0 %v1238
        %1274 = vmatpush1.bf16.msra.mxu0 %v1237
        %1275 = vmatprep.subr.bf16.mxu0 %v1234
        %1276 = vmatpush1.bf16.msra.mxu0 %v1233
        %1277 = vmatprep.subr.bf16.mxu0 %v1230
        %1278 = vmatpush1.bf16.msra.mxu0 %v1229
        %1279 = vmatprep.subr.bf16.mxu0 %v1226
        %1280 = vmatpush1.bf16.msra.mxu0 %v1225
        %1281 = vmatprep.subr.bf16.mxu0 %v1222
        %1282 = vmatpush1.bf16.msra.mxu0 %v1221
        %1283 = vmatprep.subr.bf16.mxu0 %v1218
        %1284 = vmatpush1.bf16.msra.mxu0 %v1217
        %1285 = vmatprep.subr.bf16.mxu0 %v1214
        %1286 = vmatpush1.bf16.msra.mxu0 %v1213
        %1287 = vmatprep.subr.bf16.mxu0 %v1210
        %1288 = vmatpush1.bf16.msra.mxu0 %v1209
        %1289 = vmatprep.subr.bf16.mxu0 0
        %1290 = vmatpush2.bf16.msra.mxu0 0
        %1291 = vmatprep.subr.bf16.mxu0 0
        %1292 = vmatpush2.bf16.msra.mxu0 0
        %1293 = vmatprep.subr.bf16.mxu0 0
        %1294 = vmatpush2.bf16.msra.mxu0 0
        %1295 = vmatprep.subr.bf16.mxu0 0
        %1296 = vmatpush2.bf16.msra.mxu0 0
        %1297 = vmatprep.subr.bf16.mxu0 0
        %1298 = vmatpush2.bf16.msra.mxu0 0
        %1299 = vmatprep.subr.bf16.mxu0 0
        %1300 = vmatpush2.bf16.msra.mxu0 0
        %1301 = vmatprep.subr.bf16.mxu0 0
        %1302 = vmatpush2.bf16.msra.mxu0 0
        %1303 = vmatprep.subr.bf16.mxu0 0
        %1304 = vmatpush2.bf16.msra.mxu0 0
        %1305 = vmatprep.mubr.bf16.mxu0 0
        %1306 = vmatmul.mubr.bf16.gmra.mxu0 %v1112
        %v1307 = vpop.f32.mrf.mxu0
        %v1308 = vadd.f32 0.0, %v1307
        %v1309 = vpop.f32.mrf.mxu0
        %v1310 = vadd.f32 0.0, %v1309
        %v1311 = vpop.f32.mrf.mxu0
        %v1312 = vpop.f32.mrf.mxu0
        %1313 = vdwg.mxu0
        %1314 = vmatprep.subr.bf16.mxu0 %v1240
        %1315 = vmatpush1.bf16.msra.mxu0 %v1239
        %1316 = vmatprep.subr.bf16.mxu0 %v1236
        %1317 = vmatpush1.bf16.msra.mxu0 %v1235
        %1318 = vmatprep.subr.bf16.mxu0 %v1232
        %1319 = vmatpush1.bf16.msra.mxu0 %v1231
        %1320 = vmatprep.subr.bf16.mxu0 %v1228
        %1321 = vmatpush1.bf16.msra.mxu0 %v1227
        %1322 = vmatprep.subr.bf16.mxu0 %v1224
        %1323 = vmatpush1.bf16.msra.mxu0 %v1223
        %1324 = vmatprep.subr.bf16.mxu0 %v1220
        %1325 = vmatpush1.bf16.msra.mxu0 %v1219
        %1326 = vmatprep.subr.bf16.mxu0 %v1216
        %1327 = vmatpush1.bf16.msra.mxu0 %v1215
        %1328 = vmatprep.subr.bf16.mxu0 %v1212
        %1329 = vmatpush1.bf16.msra.mxu0 %v1211
        %1330 = vmatprep.subr.bf16.mxu0 0
        %1331 = vmatpush2.bf16.msra.mxu0 0
        %1332 = vmatprep.subr.bf16.mxu0 0
        %1333 = vmatpush2.bf16.msra.mxu0 0
        %1334 = vmatprep.subr.bf16.mxu0 0
        %1335 = vmatpush2.bf16.msra.mxu0 0
        %1336 = vmatprep.subr.bf16.mxu0 0
        %1337 = vmatpush2.bf16.msra.mxu0 0
        %1338 = vmatprep.subr.bf16.mxu0 0
        %1339 = vmatpush2.bf16.msra.mxu0 0
        %1340 = vmatprep.subr.bf16.mxu0 0
        %1341 = vmatpush2.bf16.msra.mxu0 0
        %1342 = vmatprep.subr.bf16.mxu0 0
        %1343 = vmatpush2.bf16.msra.mxu0 0
        %1344 = vmatprep.subr.bf16.mxu0 0
        %1345 = vmatpush2.bf16.msra.mxu0 0
        %1346 = vmatprep.mubr.bf16.mxu0 0
        %1347 = vmatmul.mubr.bf16.gmra.mxu0 %v1112
        %v1348 = vpop.f32.mrf.mxu0
        %v1349 = vadd.f32 0.0, %v1348
        %v1350 = vpop.f32.mrf.mxu0
        %v1351 = vadd.f32 0.0, %v1350
        %v1352 = vpop.f32.mrf.mxu0
        %v1353 = vpop.f32.mrf.mxu0
        %1354 = vdwg.mxu0
        %v1387 = vunpack.c.l.b16 %v747
        %v1388 = vunpack.c.h.b16 %v747
        %v1389 = vunpack.c.l.b16 %v748
        %v1390 = vunpack.c.h.b16 %v748
        %v1391 = vunpack.c.l.b16 %v749
        %v1392 = vunpack.c.h.b16 %v749
        %v1393 = vunpack.c.l.b16 %v750
        %v1394 = vunpack.c.h.b16 %v750
        %v1395 = vunpack.c.l.b16 %v751
        %v1396 = vunpack.c.h.b16 %v751
        %v1397 = vunpack.c.l.b16 %v752
        %v1398 = vunpack.c.h.b16 %v752
        %v1399 = vunpack.c.l.b16 %v753
        %v1400 = vunpack.c.h.b16 %v753
        %v1401 = vunpack.c.l.b16 %v754
        %v1402 = vunpack.c.h.b16 %v754
        %v1403 = vunpack.c.l.b16 %v755
        %v1404 = vunpack.c.h.b16 %v755
        %v1405 = vunpack.c.l.b16 %v756
        %v1406 = vunpack.c.h.b16 %v756
        %v1407 = vunpack.c.l.b16 %v757
        %v1408 = vunpack.c.h.b16 %v757
        %v1409 = vunpack.c.l.b16 %v758
        %v1410 = vunpack.c.h.b16 %v758
        %v1411 = vunpack.c.l.b16 %v759
        %v1412 = vunpack.c.h.b16 %v759
        %v1413 = vunpack.c.l.b16 %v760
        %v1414 = vunpack.c.h.b16 %v760
        %v1415 = vunpack.c.l.b16 %v761
        %v1416 = vunpack.c.h.b16 %v761
        %v1417 = vunpack.c.l.b16 %v762
        %v1418 = vunpack.c.h.b16 %v762
        %v1419 = vunpack.c.l.b16 %v763
        %v1420 = vunpack.c.h.b16 %v763
        %v1421 = vunpack.c.l.b16 %v764
        %v1422 = vunpack.c.h.b16 %v764
        %v1423 = vunpack.c.l.b16 %v765
        %v1424 = vunpack.c.h.b16 %v765
        %v1425 = vunpack.c.l.b16 %v766
        %v1426 = vunpack.c.h.b16 %v766
        %v1427 = vunpack.c.l.b16 %v767
        %v1428 = vunpack.c.h.b16 %v767
        %v1429 = vunpack.c.l.b16 %v768
        %v1430 = vunpack.c.h.b16 %v768
        %v1431 = vunpack.c.l.b16 %v769
        %v1432 = vunpack.c.h.b16 %v769
        %v1433 = vunpack.c.l.b16 %v770
        %v1434 = vunpack.c.h.b16 %v770
        %v1435 = vunpack.c.l.b16 %v771
        %v1436 = vunpack.c.h.b16 %v771
        %v1437 = vunpack.c.l.b16 %v772
        %v1438 = vunpack.c.h.b16 %v772
        %v1439 = vunpack.c.l.b16 %v773
        %v1440 = vunpack.c.h.b16 %v773
        %v1441 = vunpack.c.l.b16 %v774
        %v1442 = vunpack.c.h.b16 %v774
        %v1443 = vunpack.c.l.b16 %v775
        %v1444 = vunpack.c.h.b16 %v775
        %v1445 = vunpack.c.l.b16 %v776
        %v1446 = vunpack.c.h.b16 %v776
        %v1447 = vunpack.c.l.b16 %v777
        %v1448 = vunpack.c.h.b16 %v777
        %v1449 = vunpack.c.l.b16 %v778
        %v1450 = vunpack.c.h.b16 %v778
        %v1451 = vpack.c.b16 %v1391, %v1387
        %v1452 = vpack.c.b16 %v1392, %v1388
        %v1453 = vpack.c.b16 %v1393, %v1389
        %v1454 = vpack.c.b16 %v1394, %v1390
        %v1455 = vpack.c.b16 %v1399, %v1395
        %v1456 = vpack.c.b16 %v1400, %v1396
        %v1457 = vpack.c.b16 %v1401, %v1397
        %v1458 = vpack.c.b16 %v1402, %v1398
        %v1459 = vpack.c.b16 %v1407, %v1403
        %v1460 = vpack.c.b16 %v1408, %v1404
        %v1461 = vpack.c.b16 %v1409, %v1405
        %v1462 = vpack.c.b16 %v1410, %v1406
        %v1463 = vpack.c.b16 %v1415, %v1411
        %v1464 = vpack.c.b16 %v1416, %v1412
        %v1465 = vpack.c.b16 %v1417, %v1413
        %v1466 = vpack.c.b16 %v1418, %v1414
        %v1467 = vpack.c.b16 %v1423, %v1419
        %v1468 = vpack.c.b16 %v1424, %v1420
        %v1469 = vpack.c.b16 %v1425, %v1421
        %v1470 = vpack.c.b16 %v1426, %v1422
        %v1471 = vpack.c.b16 %v1431, %v1427
        %v1472 = vpack.c.b16 %v1432, %v1428
        %v1473 = vpack.c.b16 %v1433, %v1429
        %v1474 = vpack.c.b16 %v1434, %v1430
        %v1475 = vpack.c.b16 %v1439, %v1435
        %v1476 = vpack.c.b16 %v1440, %v1436
        %v1477 = vpack.c.b16 %v1441, %v1437
        %v1478 = vpack.c.b16 %v1442, %v1438
        %v1479 = vpack.c.b16 %v1447, %v1443
        %v1480 = vpack.c.b16 %v1448, %v1444
        %v1481 = vpack.c.b16 %v1449, %v1445
        %v1482 = vpack.c.b16 %v1450, %v1446
        %1515 = vmatprep.subr.bf16.mxu0 %v1480
        %1516 = vmatpush1.bf16.msra.mxu0 %v1479
        %1517 = vmatprep.subr.bf16.mxu0 %v1476
        %1518 = vmatpush1.bf16.msra.mxu0 %v1475
        %1519 = vmatprep.subr.bf16.mxu0 %v1472
        %1520 = vmatpush1.bf16.msra.mxu0 %v1471
        %1521 = vmatprep.subr.bf16.mxu0 %v1468
        %1522 = vmatpush1.bf16.msra.mxu0 %v1467
        %1523 = vmatprep.subr.bf16.mxu0 %v1464
        %1524 = vmatpush1.bf16.msra.mxu0 %v1463
        %1525 = vmatprep.subr.bf16.mxu0 %v1460
        %1526 = vmatpush1.bf16.msra.mxu0 %v1459
        %1527 = vmatprep.subr.bf16.mxu0 %v1456
        %1528 = vmatpush1.bf16.msra.mxu0 %v1455
        %1529 = vmatprep.subr.bf16.mxu0 %v1452
        %1530 = vmatpush1.bf16.msra.mxu0 %v1451
        %1531 = vmatprep.subr.bf16.mxu0 0
        %1532 = vmatpush2.bf16.msra.mxu0 0
        %1533 = vmatprep.subr.bf16.mxu0 0
        %1534 = vmatpush2.bf16.msra.mxu0 0
        %1535 = vmatprep.subr.bf16.mxu0 0
        %1536 = vmatpush2.bf16.msra.mxu0 0
        %1537 = vmatprep.subr.bf16.mxu0 0
        %1538 = vmatpush2.bf16.msra.mxu0 0
        %1539 = vmatprep.subr.bf16.mxu0 0
        %1540 = vmatpush2.bf16.msra.mxu0 0
        %1541 = vmatprep.subr.bf16.mxu0 0
        %1542 = vmatpush2.bf16.msra.mxu0 0
        %1543 = vmatprep.subr.bf16.mxu0 0
        %1544 = vmatpush2.bf16.msra.mxu0 0
        %1545 = vmatprep.subr.bf16.mxu0 0
        %1546 = vmatpush2.bf16.msra.mxu0 0
        %1547 = vmatprep.mubr.bf16.mxu0 0
        %1548 = vmatmul.mubr.bf16.gmra.mxu0 %v841
        %v1549 = vpop.f32.mrf.mxu0
        %v1550 = vadd.f32 %v1308, %v1549
        %v1551 = vpop.f32.mrf.mxu0
        %v1552 = vadd.f32 %v1310, %v1551
        %v1553 = vpop.f32.mrf.mxu0
        %v1554 = vpop.f32.mrf.mxu0
        %1555 = vdwg.mxu0
        %1556 = vmatprep.subr.bf16.mxu0 %v1482
        %1557 = vmatpush1.bf16.msra.mxu0 %v1481
        %1558 = vmatprep.subr.bf16.mxu0 %v1478
        %1559 = vmatpush1.bf16.msra.mxu0 %v1477
        %1560 = vmatprep.subr.bf16.mxu0 %v1474
        %1561 = vmatpush1.bf16.msra.mxu0 %v1473
        %1562 = vmatprep.subr.bf16.mxu0 %v1470
        %1563 = vmatpush1.bf16.msra.mxu0 %v1469
        %1564 = vmatprep.subr.bf16.mxu0 %v1466
        %1565 = vmatpush1.bf16.msra.mxu0 %v1465
        %1566 = vmatprep.subr.bf16.mxu0 %v1462
        %1567 = vmatpush1.bf16.msra.mxu0 %v1461
        %1568 = vmatprep.subr.bf16.mxu0 %v1458
        %1569 = vmatpush1.bf16.msra.mxu0 %v1457
        %1570 = vmatprep.subr.bf16.mxu0 %v1454
        %1571 = vmatpush1.bf16.msra.mxu0 %v1453
        %1572 = vmatprep.subr.bf16.mxu0 0
        %1573 = vmatpush2.bf16.msra.mxu0 0
        %1574 = vmatprep.subr.bf16.mxu0 0
        %1575 = vmatpush2.bf16.msra.mxu0 0
        %1576 = vmatprep.subr.bf16.mxu0 0
        %1577 = vmatpush2.bf16.msra.mxu0 0
        %1578 = vmatprep.subr.bf16.mxu0 0
        %1579 = vmatpush2.bf16.msra.mxu0 0
        %1580 = vmatprep.subr.bf16.mxu0 0
        %1581 = vmatpush2.bf16.msra.mxu0 0
        %1582 = vmatprep.subr.bf16.mxu0 0
        %1583 = vmatpush2.bf16.msra.mxu0 0
        %1584 = vmatprep.subr.bf16.mxu0 0
        %1585 = vmatpush2.bf16.msra.mxu0 0
        %1586 = vmatprep.subr.bf16.mxu0 0
        %1587 = vmatpush2.bf16.msra.mxu0 0
        %1588 = vmatprep.mubr.bf16.mxu0 0
        %1589 = vmatmul.mubr.bf16.gmra.mxu0 %v841
        %v1590 = vpop.f32.mrf.mxu0
        %v1591 = vadd.f32 %v1349, %v1590
        %v1592 = vpop.f32.mrf.mxu0
        %v1593 = vadd.f32 %v1351, %v1592
        %v1594 = vpop.f32.mrf.mxu0
        %v1595 = vpop.f32.mrf.mxu0
        %1596 = vdwg.mxu0
        %v1597 = vadd.f32 %v1550, %v816
        %v1598 = vadd.f32 %v1552, %v820
        %v1599 = vadd.f32 %v1591, %v824
        %v1600 = vadd.f32 %v1593, %v828
        %v1601 = vxor.u32 %v1597, 2147483648
        %v1602 = vmul.f32 %v1601, 1.442695
        %v1603 = vpow.pop %v1602
        %v1604 = vadd.f32 %v1603, 1.0
        %v1605 = vrcp.pop %v1604
        %v1606 = vmul.f32 1.0, %v1605
        %v1607 = vxor.u32 %v1598, 2147483648
        %v1608 = vmul.f32 %v1607, 1.442695
        %v1609 = vpow.pop %v1608
        %v1610 = vadd.f32 %v1609, 1.0
        %v1611 = vrcp.pop %v1610
        %v1612 = vmul.f32 1.0, %v1611
        %v1613 = vtanh.pop %v1599
        %v1614 = vxor.u32 %v1600, 2147483648
        %v1615 = vmul.f32 %v1614, 1.442695
        %v1616 = vpow.pop %v1615
        %v1617 = vadd.f32 %v1616, 1.0
        %v1618 = vrcp.pop %v1617
        %v1619 = vmul.f32 1.0, %v1618
        %v1620 = vmul.f32 %v1612, %v836
        %v1621 = vmul.f32 %v1606, %v1613
        %v1622 = vadd.f32 %v1620, %v1621
        %v1623 = vtanh.pop %v1622
        %v1624 = vmul.f32 %v1619, %v1623
        %s1625 = scalar_select %p502, 1, 0
        %v1626 = vstv %s1625
        %vm1627 = vcmp.eq.s32.totalorder %v1626, 1
        %v1628 = vsel %vm1627, %v835, %v1624
        %v1629 = vsel %vm1627, %v836, %v1622
        %s1630 = scalar_lea.vmem [#allocation6], 32
        %v1631 = vld [vmem:[%s1630] sm:$0xff]
        %v1632 = vld [vmem:[%s1630 + $0x8] sm:$0xff]
        %v1633 = vld [vmem:[%s1630 + $0x10] sm:$0xff]
        %v1634 = vld [vmem:[%s1630 + $0x18] sm:$0xff]
        %v1635 = vpack.c.bf16 %v1111, %v1111
        %1636 = vmatprep.subr.bf16.mxu0 %v967
        %1637 = vmatpush1.bf16.msra.mxu0 %v966
        %1638 = vmatprep.subr.bf16.mxu0 %v963
        %1639 = vmatpush1.bf16.msra.mxu0 %v962
        %1640 = vmatprep.subr.bf16.mxu0 %v959
        %1641 = vmatpush1.bf16.msra.mxu0 %v958
        %1642 = vmatprep.subr.bf16.mxu0 %v955
        %1643 = vmatpush1.bf16.msra.mxu0 %v954
        %1644 = vmatprep.subr.bf16.mxu0 %v951
        %1645 = vmatpush1.bf16.msra.mxu0 %v950
        %1646 = vmatprep.subr.bf16.mxu0 %v947
        %1647 = vmatpush1.bf16.msra.mxu0 %v946
        %1648 = vmatprep.subr.bf16.mxu0 %v943
        %1649 = vmatpush1.bf16.msra.mxu0 %v942
        %1650 = vmatprep.subr.bf16.mxu0 %v939
        %1651 = vmatpush1.bf16.msra.mxu0 %v938
        %1652 = vmatprep.subr.bf16.mxu0 0
        %1653 = vmatpush2.bf16.msra.mxu0 0
        %1654 = vmatprep.subr.bf16.mxu0 0
        %1655 = vmatpush2.bf16.msra.mxu0 0
        %1656 = vmatprep.subr.bf16.mxu0 0
        %1657 = vmatpush2.bf16.msra.mxu0 0
        %1658 = vmatprep.subr.bf16.mxu0 0
        %1659 = vmatpush2.bf16.msra.mxu0 0
        %1660 = vmatprep.subr.bf16.mxu0 0
        %1661 = vmatpush2.bf16.msra.mxu0 0
        %1662 = vmatprep.subr.bf16.mxu0 0
        %1663 = vmatpush2.bf16.msra.mxu0 0
        %1664 = vmatprep.subr.bf16.mxu0 0
        %1665 = vmatpush2.bf16.msra.mxu0 0
        %1666 = vmatprep.subr.bf16.mxu0 0
        %1667 = vmatpush2.bf16.msra.mxu0 0
        %1668 = vmatprep.mubr.bf16.mxu0 0
        %1669 = vmatmul.mubr.bf16.gmra.mxu0 %v1635
        %v1670 = vpop.f32.mrf.mxu0
        %v1671 = vadd.f32 0.0, %v1670
        %v1672 = vpop.f32.mrf.mxu0
        %v1673 = vadd.f32 0.0, %v1672
        %v1674 = vpop.f32.mrf.mxu0
        %v1675 = vpop.f32.mrf.mxu0
        %1676 = vdwg.mxu0
        %1677 = vmatprep.subr.bf16.mxu0 %v969
        %1678 = vmatpush1.bf16.msra.mxu0 %v968
        %1679 = vmatprep.subr.bf16.mxu0 %v965
        %1680 = vmatpush1.bf16.msra.mxu0 %v964
        %1681 = vmatprep.subr.bf16.mxu0 %v961
        %1682 = vmatpush1.bf16.msra.mxu0 %v960
        %1683 = vmatprep.subr.bf16.mxu0 %v957
        %1684 = vmatpush1.bf16.msra.mxu0 %v956
        %1685 = vmatprep.subr.bf16.mxu0 %v953
        %1686 = vmatpush1.bf16.msra.mxu0 %v952
        %1687 = vmatprep.subr.bf16.mxu0 %v949
        %1688 = vmatpush1.bf16.msra.mxu0 %v948
        %1689 = vmatprep.subr.bf16.mxu0 %v945
        %1690 = vmatpush1.bf16.msra.mxu0 %v944
        %1691 = vmatprep.subr.bf16.mxu0 %v941
        %1692 = vmatpush1.bf16.msra.mxu0 %v940
        %1693 = vmatprep.subr.bf16.mxu0 0
        %1694 = vmatpush2.bf16.msra.mxu0 0
        %1695 = vmatprep.subr.bf16.mxu0 0
        %1696 = vmatpush2.bf16.msra.mxu0 0
        %1697 = vmatprep.subr.bf16.mxu0 0
        %1698 = vmatpush2.bf16.msra.mxu0 0
        %1699 = vmatprep.subr.bf16.mxu0 0
        %1700 = vmatpush2.bf16.msra.mxu0 0
        %1701 = vmatprep.subr.bf16.mxu0 0
        %1702 = vmatpush2.bf16.msra.mxu0 0
        %1703 = vmatprep.subr.bf16.mxu0 0
        %1704 = vmatpush2.bf16.msra.mxu0 0
        %1705 = vmatprep.subr.bf16.mxu0 0
        %1706 = vmatpush2.bf16.msra.mxu0 0
        %1707 = vmatprep.subr.bf16.mxu0 0
        %1708 = vmatpush2.bf16.msra.mxu0 0
        %1709 = vmatprep.mubr.bf16.mxu0 0
        %1710 = vmatmul.mubr.bf16.gmra.mxu0 %v1635
        %v1711 = vpop.f32.mrf.mxu0
        %v1712 = vadd.f32 0.0, %v1711
        %v1713 = vpop.f32.mrf.mxu0
        %v1714 = vadd.f32 0.0, %v1713
        %v1715 = vpop.f32.mrf.mxu0
        %v1716 = vpop.f32.mrf.mxu0
        %1717 = vdwg.mxu0
        %v1718 = vadd.f32 %v1631, %v1671
        %v1719 = vadd.f32 %v1632, %v1673
        %v1720 = vadd.f32 %v1633, %v1712
        %v1721 = vadd.f32 %v1634, %v1714
        %v1722 = vxor.u32 %v1718, 2147483648
        %v1723 = vmul.f32 %v1722, 1.442695
        %v1724 = vpow.pop %v1723
        %v1725 = vadd.f32 %v1724, 1.0
        %v1726 = vrcp.pop %v1725
        %v1727 = vmul.f32 1.0, %v1726
        %v1728 = vxor.u32 %v1719, 2147483648
        %v1729 = vmul.f32 %v1728, 1.442695
        %v1730 = vpow.pop %v1729
        %v1731 = vadd.f32 %v1730, 1.0
        %v1732 = vrcp.pop %v1731
        %v1733 = vmul.f32 1.0, %v1732
        %v1734 = vtanh.pop %v1720
        %v1735 = vxor.u32 %v1721, 2147483648
        %v1736 = vmul.f32 %v1735, 1.442695
        %v1737 = vpow.pop %v1736
        %v1738 = vadd.f32 %v1737, 1.0
        %v1739 = vrcp.pop %v1738
        %v1740 = vmul.f32 1.0, %v1739
        %v1741 = vmul.f32 %v1733, %v1109
        %v1742 = vmul.f32 %v1727, %v1734
        %v1743 = vadd.f32 %v1741, %v1742
        %v1744 = vtanh.pop %v1743
        %v1745 = vmul.f32 %v1740, %v1744
        %v1746 = vpack.c.bf16 %v1628, %v1628
        %1747 = vmatprep.subr.bf16.mxu0 %v1238
        %1748 = vmatpush1.bf16.msra.mxu0 %v1237
        %1749 = vmatprep.subr.bf16.mxu0 %v1234
        %1750 = vmatpush1.bf16.msra.mxu0 %v1233
        %1751 = vmatprep.subr.bf16.mxu0 %v1230
        %1752 = vmatpush1.bf16.msra.mxu0 %v1229
        %1753 = vmatprep.subr.bf16.mxu0 %v1226
        %1754 = vmatpush1.bf16.msra.mxu0 %v1225
        %1755 = vmatprep.subr.bf16.mxu0 %v1222
        %1756 = vmatpush1.bf16.msra.mxu0 %v1221
        %1757 = vmatprep.subr.bf16.mxu0 %v1218
        %1758 = vmatpush1.bf16.msra.mxu0 %v1217
        %1759 = vmatprep.subr.bf16.mxu0 %v1214
        %1760 = vmatpush1.bf16.msra.mxu0 %v1213
        %1761 = vmatprep.subr.bf16.mxu0 %v1210
        %1762 = vmatpush1.bf16.msra.mxu0 %v1209
        %1763 = vmatprep.subr.bf16.mxu0 0
        %1764 = vmatpush2.bf16.msra.mxu0 0
        %1765 = vmatprep.subr.bf16.mxu0 0
        %1766 = vmatpush2.bf16.msra.mxu0 0
        %1767 = vmatprep.subr.bf16.mxu0 0
        %1768 = vmatpush2.bf16.msra.mxu0 0
        %1769 = vmatprep.subr.bf16.mxu0 0
        %1770 = vmatpush2.bf16.msra.mxu0 0
        %1771 = vmatprep.subr.bf16.mxu0 0
        %1772 = vmatpush2.bf16.msra.mxu0 0
        %1773 = vmatprep.subr.bf16.mxu0 0
        %1774 = vmatpush2.bf16.msra.mxu0 0
        %1775 = vmatprep.subr.bf16.mxu0 0
        %1776 = vmatpush2.bf16.msra.mxu0 0
        %1777 = vmatprep.subr.bf16.mxu0 0
        %1778 = vmatpush2.bf16.msra.mxu0 0
        %1779 = vmatprep.mubr.bf16.mxu0 0
        %1780 = vmatmul.mubr.bf16.gmra.mxu0 %v1746
        %v1781 = vpop.f32.mrf.mxu0
        %v1782 = vadd.f32 0.0, %v1781
        %v1783 = vpop.f32.mrf.mxu0
        %v1784 = vadd.f32 0.0, %v1783
        %v1785 = vpop.f32.mrf.mxu0
        %v1786 = vpop.f32.mrf.mxu0
        %1787 = vdwg.mxu0
        %1788 = vmatprep.subr.bf16.mxu0 %v1240
        %1789 = vmatpush1.bf16.msra.mxu0 %v1239
        %1790 = vmatprep.subr.bf16.mxu0 %v1236
        %1791 = vmatpush1.bf16.msra.mxu0 %v1235
        %1792 = vmatprep.subr.bf16.mxu0 %v1232
        %1793 = vmatpush1.bf16.msra.mxu0 %v1231
        %1794 = vmatprep.subr.bf16.mxu0 %v1228
        %1795 = vmatpush1.bf16.msra.mxu0 %v1227
        %1796 = vmatprep.subr.bf16.mxu0 %v1224
        %1797 = vmatpush1.bf16.msra.mxu0 %v1223
        %1798 = vmatprep.subr.bf16.mxu0 %v1220
        %1799 = vmatpush1.bf16.msra.mxu0 %v1219
        %1800 = vmatprep.subr.bf16.mxu0 %v1216
        %1801 = vmatpush1.bf16.msra.mxu0 %v1215
        %1802 = vmatprep.subr.bf16.mxu0 %v1212
        %1803 = vmatpush1.bf16.msra.mxu0 %v1211
        %1804 = vmatprep.subr.bf16.mxu0 0
        %1805 = vmatpush2.bf16.msra.mxu0 0
        %1806 = vmatprep.subr.bf16.mxu0 0
        %1807 = vmatpush2.bf16.msra.mxu0 0
        %1808 = vmatprep.subr.bf16.mxu0 0
        %1809 = vmatpush2.bf16.msra.mxu0 0
        %1810 = vmatprep.subr.bf16.mxu0 0
        %1811 = vmatpush2.bf16.msra.mxu0 0
        %1812 = vmatprep.subr.bf16.mxu0 0
        %1813 = vmatpush2.bf16.msra.mxu0 0
        %1814 = vmatprep.subr.bf16.mxu0 0
        %1815 = vmatpush2.bf16.msra.mxu0 0
        %1816 = vmatprep.subr.bf16.mxu0 0
        %1817 = vmatpush2.bf16.msra.mxu0 0
        %1818 = vmatprep.subr.bf16.mxu0 0
        %1819 = vmatpush2.bf16.msra.mxu0 0
        %1820 = vmatprep.mubr.bf16.mxu0 0
        %1821 = vmatmul.mubr.bf16.gmra.mxu0 %v1746
        %v1822 = vpop.f32.mrf.mxu0
        %v1823 = vadd.f32 0.0, %v1822
        %v1824 = vpop.f32.mrf.mxu0
        %v1825 = vadd.f32 0.0, %v1824
        %v1826 = vpop.f32.mrf.mxu0
        %v1827 = vpop.f32.mrf.mxu0
        %1828 = vdwg.mxu0
        %1829 = vmatprep.subr.bf16.mxu0 %v1480
        %1830 = vmatpush1.bf16.msra.mxu0 %v1479
        %1831 = vmatprep.subr.bf16.mxu0 %v1476
        %1832 = vmatpush1.bf16.msra.mxu0 %v1475
        %1833 = vmatprep.subr.bf16.mxu0 %v1472
        %1834 = vmatpush1.bf16.msra.mxu0 %v1471
        %1835 = vmatprep.subr.bf16.mxu0 %v1468
        %1836 = vmatpush1.bf16.msra.mxu0 %v1467
        %1837 = vmatprep.subr.bf16.mxu0 %v1464
        %1838 = vmatpush1.bf16.msra.mxu0 %v1463
        %1839 = vmatprep.subr.bf16.mxu0 %v1460
        %1840 = vmatpush1.bf16.msra.mxu0 %v1459
        %1841 = vmatprep.subr.bf16.mxu0 %v1456
        %1842 = vmatpush1.bf16.msra.mxu0 %v1455
        %1843 = vmatprep.subr.bf16.mxu0 %v1452
        %1844 = vmatpush1.bf16.msra.mxu0 %v1451
        %1845 = vmatprep.subr.bf16.mxu0 0
        %1846 = vmatpush2.bf16.msra.mxu0 0
        %1847 = vmatprep.subr.bf16.mxu0 0
        %1848 = vmatpush2.bf16.msra.mxu0 0
        %1849 = vmatprep.subr.bf16.mxu0 0
        %1850 = vmatpush2.bf16.msra.mxu0 0
        %1851 = vmatprep.subr.bf16.mxu0 0
        %1852 = vmatpush2.bf16.msra.mxu0 0
        %1853 = vmatprep.subr.bf16.mxu0 0
        %1854 = vmatpush2.bf16.msra.mxu0 0
        %1855 = vmatprep.subr.bf16.mxu0 0
        %1856 = vmatpush2.bf16.msra.mxu0 0
        %1857 = vmatprep.subr.bf16.mxu0 0
        %1858 = vmatpush2.bf16.msra.mxu0 0
        %1859 = vmatprep.subr.bf16.mxu0 0
        %1860 = vmatpush2.bf16.msra.mxu0 0
        %1861 = vmatprep.mubr.bf16.mxu0 0
        %1862 = vmatmul.mubr.bf16.gmra.mxu0 %v1635
        %v1863 = vpop.f32.mrf.mxu0
        %v1864 = vadd.f32 %v1782, %v1863
        %v1865 = vpop.f32.mrf.mxu0
        %v1866 = vadd.f32 %v1784, %v1865
        %v1867 = vpop.f32.mrf.mxu0
        %v1868 = vpop.f32.mrf.mxu0
        %1869 = vdwg.mxu0
        %1870 = vmatprep.subr.bf16.mxu0 %v1482
        %1871 = vmatpush1.bf16.msra.mxu0 %v1481
        %1872 = vmatprep.subr.bf16.mxu0 %v1478
        %1873 = vmatpush1.bf16.msra.mxu0 %v1477
        %1874 = vmatprep.subr.bf16.mxu0 %v1474
        %1875 = vmatpush1.bf16.msra.mxu0 %v1473
        %1876 = vmatprep.subr.bf16.mxu0 %v1470
        %1877 = vmatpush1.bf16.msra.mxu0 %v1469
        %1878 = vmatprep.subr.bf16.mxu0 %v1466
        %1879 = vmatpush1.bf16.msra.mxu0 %v1465
        %1880 = vmatprep.subr.bf16.mxu0 %v1462
        %1881 = vmatpush1.bf16.msra.mxu0 %v1461
        %1882 = vmatprep.subr.bf16.mxu0 %v1458
        %1883 = vmatpush1.bf16.msra.mxu0 %v1457
        %1884 = vmatprep.subr.bf16.mxu0 %v1454
        %1885 = vmatpush1.bf16.msra.mxu0 %v1453
        %1886 = vmatprep.subr.bf16.mxu0 0
        %1887 = vmatpush2.bf16.msra.mxu0 0
        %1888 = vmatprep.subr.bf16.mxu0 0
        %1889 = vmatpush2.bf16.msra.mxu0 0
        %1890 = vmatprep.subr.bf16.mxu0 0
        %1891 = vmatpush2.bf16.msra.mxu0 0
        %1892 = vmatprep.subr.bf16.mxu0 0
        %1893 = vmatpush2.bf16.msra.mxu0 0
        %1894 = vmatprep.subr.bf16.mxu0 0
        %1895 = vmatpush2.bf16.msra.mxu0 0
        %1896 = vmatprep.subr.bf16.mxu0 0
        %1897 = vmatpush2.bf16.msra.mxu0 0
        %1898 = vmatprep.subr.bf16.mxu0 0
        %1899 = vmatpush2.bf16.msra.mxu0 0
        %1900 = vmatprep.subr.bf16.mxu0 0
        %1901 = vmatpush2.bf16.msra.mxu0 0
        %1902 = vmatprep.mubr.bf16.mxu0 0
        %1903 = vmatmul.mubr.bf16.gmra.mxu0 %v1635
        %v1904 = vpop.f32.mrf.mxu0
        %v1905 = vadd.f32 %v1823, %v1904
        %v1906 = vpop.f32.mrf.mxu0
        %v1907 = vadd.f32 %v1825, %v1906
        %v1908 = vpop.f32.mrf.mxu0
        %v1909 = vpop.f32.mrf.mxu0
        %1910 = vdwg.mxu0
        %v1911 = vadd.f32 %v1864, %v816
        %v1912 = vadd.f32 %v1866, %v820
        %v1913 = vadd.f32 %v1905, %v824
        %v1914 = vadd.f32 %v1907, %v828
        %v1915 = vxor.u32 %v1911, 2147483648
        %v1916 = vmul.f32 %v1915, 1.442695
        %v1917 = vpow.pop %v1916
        %v1918 = vadd.f32 %v1917, 1.0
        %v1919 = vrcp.pop %v1918
        %v1920 = vmul.f32 1.0, %v1919
        %v1921 = vxor.u32 %v1912, 2147483648
        %v1922 = vmul.f32 %v1921, 1.442695
        %v1923 = vpow.pop %v1922
        %v1924 = vadd.f32 %v1923, 1.0
        %v1925 = vrcp.pop %v1924
        %v1926 = vmul.f32 1.0, %v1925
        %v1927 = vtanh.pop %v1913
        %v1928 = vxor.u32 %v1914, 2147483648
        %v1929 = vmul.f32 %v1928, 1.442695
        %v1930 = vpow.pop %v1929
        %v1931 = vadd.f32 %v1930, 1.0
        %v1932 = vrcp.pop %v1931
        %v1933 = vmul.f32 1.0, %v1932
        %v1934 = vmul.f32 %v1926, %v1629
        %v1935 = vmul.f32 %v1920, %v1927
        %v1936 = vadd.f32 %v1934, %v1935
        %v1937 = vtanh.pop %v1936
        %v1938 = vmul.f32 %v1933, %v1937
        %s1939 = scalar_lea.vmem [#allocation6], 64
        %v1940 = vld [vmem:[%s1939] sm:$0xff]
        %v1941 = vld [vmem:[%s1939 + $0x8] sm:$0xff]
        %v1942 = vld [vmem:[%s1939 + $0x10] sm:$0xff]
        %v1943 = vld [vmem:[%s1939 + $0x18] sm:$0xff]
        %v1944 = vpack.c.bf16 %v1745, %v1745
        %1945 = vmatprep.subr.bf16.mxu0 %v967
        %1946 = vmatpush1.bf16.msra.mxu0 %v966
        %1947 = vmatprep.subr.bf16.mxu0 %v963
        %1948 = vmatpush1.bf16.msra.mxu0 %v962
        %1949 = vmatprep.subr.bf16.mxu0 %v959
        %1950 = vmatpush1.bf16.msra.mxu0 %v958
        %1951 = vmatprep.subr.bf16.mxu0 %v955
        %1952 = vmatpush1.bf16.msra.mxu0 %v954
        %1953 = vmatprep.subr.bf16.mxu0 %v951
        %1954 = vmatpush1.bf16.msra.mxu0 %v950
        %1955 = vmatprep.subr.bf16.mxu0 %v947
        %1956 = vmatpush1.bf16.msra.mxu0 %v946
        %1957 = vmatprep.subr.bf16.mxu0 %v943
        %1958 = vmatpush1.bf16.msra.mxu0 %v942
        %1959 = vmatprep.subr.bf16.mxu0 %v939
        %1960 = vmatpush1.bf16.msra.mxu0 %v938
        %1961 = vmatprep.subr.bf16.mxu0 0
        %1962 = vmatpush2.bf16.msra.mxu0 0
        %1963 = vmatprep.subr.bf16.mxu0 0
        %1964 = vmatpush2.bf16.msra.mxu0 0
        %1965 = vmatprep.subr.bf16.mxu0 0
        %1966 = vmatpush2.bf16.msra.mxu0 0
        %1967 = vmatprep.subr.bf16.mxu0 0
        %1968 = vmatpush2.bf16.msra.mxu0 0
        %1969 = vmatprep.subr.bf16.mxu0 0
        %1970 = vmatpush2.bf16.msra.mxu0 0
        %1971 = vmatprep.subr.bf16.mxu0 0
        %1972 = vmatpush2.bf16.msra.mxu0 0
        %1973 = vmatprep.subr.bf16.mxu0 0
        %1974 = vmatpush2.bf16.msra.mxu0 0
        %1975 = vmatprep.subr.bf16.mxu0 0
        %1976 = vmatpush2.bf16.msra.mxu0 0
        %1977 = vmatprep.mubr.bf16.mxu0 0
        %1978 = vmatmul.mubr.bf16.gmra.mxu0 %v1944
        %v1979 = vpop.f32.mrf.mxu0
        %v1980 = vadd.f32 0.0, %v1979
        %v1981 = vpop.f32.mrf.mxu0
        %v1982 = vadd.f32 0.0, %v1981
        %v1983 = vpop.f32.mrf.mxu0
        %v1984 = vpop.f32.mrf.mxu0
        %1985 = vdwg.mxu0
        %1986 = vmatprep.subr.bf16.mxu0 %v969
        %1987 = vmatpush1.bf16.msra.mxu0 %v968
        %1988 = vmatprep.subr.bf16.mxu0 %v965
        %1989 = vmatpush1.bf16.msra.mxu0 %v964
        %1990 = vmatprep.subr.bf16.mxu0 %v961
        %1991 = vmatpush1.bf16.msra.mxu0 %v960
        %1992 = vmatprep.subr.bf16.mxu0 %v957
        %1993 = vmatpush1.bf16.msra.mxu0 %v956
        %1994 = vmatprep.subr.bf16.mxu0 %v953
        %1995 = vmatpush1.bf16.msra.mxu0 %v952
        %1996 = vmatprep.subr.bf16.mxu0 %v949
        %1997 = vmatpush1.bf16.msra.mxu0 %v948
        %1998 = vmatprep.subr.bf16.mxu0 %v945
        %1999 = vmatpush1.bf16.msra.mxu0 %v944
        %2000 = vmatprep.subr.bf16.mxu0 %v941
        %2001 = vmatpush1.bf16.msra.mxu0 %v940
        %2002 = vmatprep.subr.bf16.mxu0 0
        %2003 = vmatpush2.bf16.msra.mxu0 0
        %2004 = vmatprep.subr.bf16.mxu0 0
        %2005 = vmatpush2.bf16.msra.mxu0 0
        %2006 = vmatprep.subr.bf16.mxu0 0
        %2007 = vmatpush2.bf16.msra.mxu0 0
        %2008 = vmatprep.subr.bf16.mxu0 0
        %2009 = vmatpush2.bf16.msra.mxu0 0
        %2010 = vmatprep.subr.bf16.mxu0 0
        %2011 = vmatpush2.bf16.msra.mxu0 0
        %2012 = vmatprep.subr.bf16.mxu0 0
        %2013 = vmatpush2.bf16.msra.mxu0 0
        %2014 = vmatprep.subr.bf16.mxu0 0
        %2015 = vmatpush2.bf16.msra.mxu0 0
        %2016 = vmatprep.subr.bf16.mxu0 0
        %2017 = vmatpush2.bf16.msra.mxu0 0
        %2018 = vmatprep.mubr.bf16.mxu0 0
        %2019 = vmatmul.mubr.bf16.gmra.mxu0 %v1944
        %v2020 = vpop.f32.mrf.mxu0
        %v2021 = vadd.f32 0.0, %v2020
        %v2022 = vpop.f32.mrf.mxu0
        %v2023 = vadd.f32 0.0, %v2022
        %v2024 = vpop.f32.mrf.mxu0
        %v2025 = vpop.f32.mrf.mxu0
        %2026 = vdwg.mxu0
        %v2027 = vadd.f32 %v1940, %v1980
        %v2028 = vadd.f32 %v1941, %v1982
        %v2029 = vadd.f32 %v1942, %v2021
        %v2030 = vadd.f32 %v1943, %v2023
        %v2031 = vxor.u32 %v2027, 2147483648
        %v2032 = vmul.f32 %v2031, 1.442695
        %v2033 = vpow.pop %v2032
        %v2034 = vadd.f32 %v2033, 1.0
        %v2035 = vrcp.pop %v2034
        %v2036 = vmul.f32 1.0, %v2035
        %v2037 = vxor.u32 %v2028, 2147483648
        %v2038 = vmul.f32 %v2037, 1.442695
        %v2039 = vpow.pop %v2038
        %v2040 = vadd.f32 %v2039, 1.0
        %v2041 = vrcp.pop %v2040
        %v2042 = vmul.f32 1.0, %v2041
        %v2043 = vtanh.pop %v2029
        %v2044 = vxor.u32 %v2030, 2147483648
        %v2045 = vmul.f32 %v2044, 1.442695
        %v2046 = vpow.pop %v2045
        %v2047 = vadd.f32 %v2046, 1.0
        %v2048 = vrcp.pop %v2047
        %v2049 = vmul.f32 1.0, %v2048
        %v2050 = vmul.f32 %v2042, %v1743
        %v2051 = vmul.f32 %v2036, %v2043
        %v2052 = vadd.f32 %v2050, %v2051
        %v2053 = vtanh.pop %v2052
        %v2054 = vmul.f32 %v2049, %v2053
        %v2055 = vpack.c.bf16 %v1938, %v1938
        %2056 = vmatprep.subr.bf16.mxu0 %v1238
        %2057 = vmatpush1.bf16.msra.mxu0 %v1237
        %2058 = vmatprep.subr.bf16.mxu0 %v1234
        %2059 = vmatpush1.bf16.msra.mxu0 %v1233
        %2060 = vmatprep.subr.bf16.mxu0 %v1230
        %2061 = vmatpush1.bf16.msra.mxu0 %v1229
        %2062 = vmatprep.subr.bf16.mxu0 %v1226
        %2063 = vmatpush1.bf16.msra.mxu0 %v1225
        %2064 = vmatprep.subr.bf16.mxu0 %v1222
        %2065 = vmatpush1.bf16.msra.mxu0 %v1221
        %2066 = vmatprep.subr.bf16.mxu0 %v1218
        %2067 = vmatpush1.bf16.msra.mxu0 %v1217
        %2068 = vmatprep.subr.bf16.mxu0 %v1214
        %2069 = vmatpush1.bf16.msra.mxu0 %v1213
        %2070 = vmatprep.subr.bf16.mxu0 %v1210
        %2071 = vmatpush1.bf16.msra.mxu0 %v1209
        %2072 = vmatprep.subr.bf16.mxu0 0
        %2073 = vmatpush2.bf16.msra.mxu0 0
        %2074 = vmatprep.subr.bf16.mxu0 0
        %2075 = vmatpush2.bf16.msra.mxu0 0
        %2076 = vmatprep.subr.bf16.mxu0 0
        %2077 = vmatpush2.bf16.msra.mxu0 0
        %2078 = vmatprep.subr.bf16.mxu0 0
        %2079 = vmatpush2.bf16.msra.mxu0 0
        %2080 = vmatprep.subr.bf16.mxu0 0
        %2081 = vmatpush2.bf16.msra.mxu0 0
        %2082 = vmatprep.subr.bf16.mxu0 0
        %2083 = vmatpush2.bf16.msra.mxu0 0
        %2084 = vmatprep.subr.bf16.mxu0 0
        %2085 = vmatpush2.bf16.msra.mxu0 0
        %2086 = vmatprep.subr.bf16.mxu0 0
        %2087 = vmatpush2.bf16.msra.mxu0 0
        %2088 = vmatprep.mubr.bf16.mxu0 0
        %2089 = vmatmul.mubr.bf16.gmra.mxu0 %v2055
        %v2090 = vpop.f32.mrf.mxu0
        %v2091 = vadd.f32 0.0, %v2090
        %v2092 = vpop.f32.mrf.mxu0
        %v2093 = vadd.f32 0.0, %v2092
        %v2094 = vpop.f32.mrf.mxu0
        %v2095 = vpop.f32.mrf.mxu0
        %2096 = vdwg.mxu0
        %2097 = vmatprep.subr.bf16.mxu0 %v1240
        %2098 = vmatpush1.bf16.msra.mxu0 %v1239
        %2099 = vmatprep.subr.bf16.mxu0 %v1236
        %2100 = vmatpush1.bf16.msra.mxu0 %v1235
        %2101 = vmatprep.subr.bf16.mxu0 %v1232
        %2102 = vmatpush1.bf16.msra.mxu0 %v1231
        %2103 = vmatprep.subr.bf16.mxu0 %v1228
        %2104 = vmatpush1.bf16.msra.mxu0 %v1227
        %2105 = vmatprep.subr.bf16.mxu0 %v1224
        %2106 = vmatpush1.bf16.msra.mxu0 %v1223
        %2107 = vmatprep.subr.bf16.mxu0 %v1220
        %2108 = vmatpush1.bf16.msra.mxu0 %v1219
        %2109 = vmatprep.subr.bf16.mxu0 %v1216
        %2110 = vmatpush1.bf16.msra.mxu0 %v1215
        %2111 = vmatprep.subr.bf16.mxu0 %v1212
        %2112 = vmatpush1.bf16.msra.mxu0 %v1211
        %2113 = vmatprep.subr.bf16.mxu0 0
        %2114 = vmatpush2.bf16.msra.mxu0 0
        %2115 = vmatprep.subr.bf16.mxu0 0
        %2116 = vmatpush2.bf16.msra.mxu0 0
        %2117 = vmatprep.subr.bf16.mxu0 0
        %2118 = vmatpush2.bf16.msra.mxu0 0
        %2119 = vmatprep.subr.bf16.mxu0 0
        %2120 = vmatpush2.bf16.msra.mxu0 0
        %2121 = vmatprep.subr.bf16.mxu0 0
        %2122 = vmatpush2.bf16.msra.mxu0 0
        %2123 = vmatprep.subr.bf16.mxu0 0
        %2124 = vmatpush2.bf16.msra.mxu0 0
        %2125 = vmatprep.subr.bf16.mxu0 0
        %2126 = vmatpush2.bf16.msra.mxu0 0
        %2127 = vmatprep.subr.bf16.mxu0 0
        %2128 = vmatpush2.bf16.msra.mxu0 0
        %2129 = vmatprep.mubr.bf16.mxu0 0
        %2130 = vmatmul.mubr.bf16.gmra.mxu0 %v2055
        %v2131 = vpop.f32.mrf.mxu0
        %v2132 = vadd.f32 0.0, %v2131
        %v2133 = vpop.f32.mrf.mxu0
        %v2134 = vadd.f32 0.0, %v2133
        %v2135 = vpop.f32.mrf.mxu0
        %v2136 = vpop.f32.mrf.mxu0
        %2137 = vdwg.mxu0
        %2138 = vmatprep.subr.bf16.mxu0 %v1480
        %2139 = vmatpush1.bf16.msra.mxu0 %v1479
        %2140 = vmatprep.subr.bf16.mxu0 %v1476
        %2141 = vmatpush1.bf16.msra.mxu0 %v1475
        %2142 = vmatprep.subr.bf16.mxu0 %v1472
        %2143 = vmatpush1.bf16.msra.mxu0 %v1471
        %2144 = vmatprep.subr.bf16.mxu0 %v1468
        %2145 = vmatpush1.bf16.msra.mxu0 %v1467
        %2146 = vmatprep.subr.bf16.mxu0 %v1464
        %2147 = vmatpush1.bf16.msra.mxu0 %v1463
        %2148 = vmatprep.subr.bf16.mxu0 %v1460
        %2149 = vmatpush1.bf16.msra.mxu0 %v1459
        %2150 = vmatprep.subr.bf16.mxu0 %v1456
        %2151 = vmatpush1.bf16.msra.mxu0 %v1455
        %2152 = vmatprep.subr.bf16.mxu0 %v1452
        %2153 = vmatpush1.bf16.msra.mxu0 %v1451
        %2154 = vmatprep.subr.bf16.mxu0 0
        %2155 = vmatpush2.bf16.msra.mxu0 0
        %2156 = vmatprep.subr.bf16.mxu0 0
        %2157 = vmatpush2.bf16.msra.mxu0 0
        %2158 = vmatprep.subr.bf16.mxu0 0
        %2159 = vmatpush2.bf16.msra.mxu0 0
        %2160 = vmatprep.subr.bf16.mxu0 0
        %2161 = vmatpush2.bf16.msra.mxu0 0
        %2162 = vmatprep.subr.bf16.mxu0 0
        %2163 = vmatpush2.bf16.msra.mxu0 0
        %2164 = vmatprep.subr.bf16.mxu0 0
        %2165 = vmatpush2.bf16.msra.mxu0 0
        %2166 = vmatprep.subr.bf16.mxu0 0
        %2167 = vmatpush2.bf16.msra.mxu0 0
        %2168 = vmatprep.subr.bf16.mxu0 0
        %2169 = vmatpush2.bf16.msra.mxu0 0
        %2170 = vmatprep.mubr.bf16.mxu0 0
        %2171 = vmatmul.mubr.bf16.gmra.mxu0 %v1944
        %v2172 = vpop.f32.mrf.mxu0
        %v2173 = vadd.f32 %v2091, %v2172
        %v2174 = vpop.f32.mrf.mxu0
        %v2175 = vadd.f32 %v2093, %v2174
        %v2176 = vpop.f32.mrf.mxu0
        %v2177 = vpop.f32.mrf.mxu0
        %2178 = vdwg.mxu0
        %2179 = vmatprep.subr.bf16.mxu0 %v1482
        %2180 = vmatpush1.bf16.msra.mxu0 %v1481
        %2181 = vmatprep.subr.bf16.mxu0 %v1478
        %2182 = vmatpush1.bf16.msra.mxu0 %v1477
        %2183 = vmatprep.subr.bf16.mxu0 %v1474
        %2184 = vmatpush1.bf16.msra.mxu0 %v1473
        %2185 = vmatprep.subr.bf16.mxu0 %v1470
        %2186 = vmatpush1.bf16.msra.mxu0 %v1469
        %2187 = vmatprep.subr.bf16.mxu0 %v1466
        %2188 = vmatpush1.bf16.msra.mxu0 %v1465
        %2189 = vmatprep.subr.bf16.mxu0 %v1462
        %2190 = vmatpush1.bf16.msra.mxu0 %v1461
        %2191 = vmatprep.subr.bf16.mxu0 %v1458
        %2192 = vmatpush1.bf16.msra.mxu0 %v1457
        %2193 = vmatprep.subr.bf16.mxu0 %v1454
        %2194 = vmatpush1.bf16.msra.mxu0 %v1453
        %2195 = vmatprep.subr.bf16.mxu0 0
        %2196 = vmatpush2.bf16.msra.mxu0 0
        %2197 = vmatprep.subr.bf16.mxu0 0
        %2198 = vmatpush2.bf16.msra.mxu0 0
        %2199 = vmatprep.subr.bf16.mxu0 0
        %2200 = vmatpush2.bf16.msra.mxu0 0
        %2201 = vmatprep.subr.bf16.mxu0 0
        %2202 = vmatpush2.bf16.msra.mxu0 0
        %2203 = vmatprep.subr.bf16.mxu0 0
        %2204 = vmatpush2.bf16.msra.mxu0 0
        %2205 = vmatprep.subr.bf16.mxu0 0
        %2206 = vmatpush2.bf16.msra.mxu0 0
        %2207 = vmatprep.subr.bf16.mxu0 0
        %2208 = vmatpush2.bf16.msra.mxu0 0
        %2209 = vmatprep.subr.bf16.mxu0 0
        %2210 = vmatpush2.bf16.msra.mxu0 0
        %2211 = vmatprep.mubr.bf16.mxu0 0
        %2212 = vmatmul.mubr.bf16.gmra.mxu0 %v1944
        %v2213 = vpop.f32.mrf.mxu0
        %v2214 = vadd.f32 %v2132, %v2213
        %v2215 = vpop.f32.mrf.mxu0
        %v2216 = vadd.f32 %v2134, %v2215
        %v2217 = vpop.f32.mrf.mxu0
        %v2218 = vpop.f32.mrf.mxu0
        %2219 = vdwg.mxu0
        %v2220 = vadd.f32 %v2173, %v816
        %v2221 = vadd.f32 %v2175, %v820
        %v2222 = vadd.f32 %v2214, %v824
        %v2223 = vadd.f32 %v2216, %v828
        %v2224 = vxor.u32 %v2220, 2147483648
        %v2225 = vmul.f32 %v2224, 1.442695
        %v2226 = vpow.pop %v2225
        %v2227 = vadd.f32 %v2226, 1.0
        %v2228 = vrcp.pop %v2227
        %v2229 = vmul.f32 1.0, %v2228
        %v2230 = vxor.u32 %v2221, 2147483648
        %v2231 = vmul.f32 %v2230, 1.442695
        %v2232 = vpow.pop %v2231
        %v2233 = vadd.f32 %v2232, 1.0
        %v2234 = vrcp.pop %v2233
        %v2235 = vmul.f32 1.0, %v2234
        %v2236 = vtanh.pop %v2222
        %v2237 = vxor.u32 %v2223, 2147483648
        %v2238 = vmul.f32 %v2237, 1.442695
        %v2239 = vpow.pop %v2238
        %v2240 = vadd.f32 %v2239, 1.0
        %v2241 = vrcp.pop %v2240
        %v2242 = vmul.f32 1.0, %v2241
        %v2243 = vmul.f32 %v2235, %v1936
        %v2244 = vmul.f32 %v2229, %v2236
        %v2245 = vadd.f32 %v2243, %v2244
        %v2246 = vtanh.pop %v2245
        %v2247 = vmul.f32 %v2242, %v2246
        %s2248 = scalar_lea.vmem [#allocation6], 96
        %v2249 = vld [vmem:[%s2248] sm:$0xff]
        %v2250 = vld [vmem:[%s2248 + $0x8] sm:$0xff]
        %v2251 = vld [vmem:[%s2248 + $0x10] sm:$0xff]
        %v2252 = vld [vmem:[%s2248 + $0x18] sm:$0xff]
        %v2253 = vpack.c.bf16 %v2054, %v2054
        %2254 = vmatprep.subr.bf16.mxu0 %v967
        %2255 = vmatpush1.bf16.msra.mxu0 %v966
        %2256 = vmatprep.subr.bf16.mxu0 %v963
        %2257 = vmatpush1.bf16.msra.mxu0 %v962
        %2258 = vmatprep.subr.bf16.mxu0 %v959
        %2259 = vmatpush1.bf16.msra.mxu0 %v958
        %2260 = vmatprep.subr.bf16.mxu0 %v955
        %2261 = vmatpush1.bf16.msra.mxu0 %v954
        %2262 = vmatprep.subr.bf16.mxu0 %v951
        %2263 = vmatpush1.bf16.msra.mxu0 %v950
        %2264 = vmatprep.subr.bf16.mxu0 %v947
        %2265 = vmatpush1.bf16.msra.mxu0 %v946
        %2266 = vmatprep.subr.bf16.mxu0 %v943
        %2267 = vmatpush1.bf16.msra.mxu0 %v942
        %2268 = vmatprep.subr.bf16.mxu0 %v939
        %2269 = vmatpush1.bf16.msra.mxu0 %v938
        %2270 = vmatprep.subr.bf16.mxu0 0
        %2271 = vmatpush2.bf16.msra.mxu0 0
        %2272 = vmatprep.subr.bf16.mxu0 0
        %2273 = vmatpush2.bf16.msra.mxu0 0
        %2274 = vmatprep.subr.bf16.mxu0 0
        %2275 = vmatpush2.bf16.msra.mxu0 0
        %2276 = vmatprep.subr.bf16.mxu0 0
        %2277 = vmatpush2.bf16.msra.mxu0 0
        %2278 = vmatprep.subr.bf16.mxu0 0
        %2279 = vmatpush2.bf16.msra.mxu0 0
        %2280 = vmatprep.subr.bf16.mxu0 0
        %2281 = vmatpush2.bf16.msra.mxu0 0
        %2282 = vmatprep.subr.bf16.mxu0 0
        %2283 = vmatpush2.bf16.msra.mxu0 0
        %2284 = vmatprep.subr.bf16.mxu0 0
        %2285 = vmatpush2.bf16.msra.mxu0 0
        %2286 = vmatprep.mubr.bf16.mxu0 0
        %2287 = vmatmul.mubr.bf16.gmra.mxu0 %v2253
        %v2288 = vpop.f32.mrf.mxu0
        %v2289 = vadd.f32 0.0, %v2288
        %v2290 = vpop.f32.mrf.mxu0
        %v2291 = vadd.f32 0.0, %v2290
        %v2292 = vpop.f32.mrf.mxu0
        %v2293 = vpop.f32.mrf.mxu0
        %2294 = vdwg.mxu0
        %2295 = vmatprep.subr.bf16.mxu0 %v969
        %2296 = vmatpush1.bf16.msra.mxu0 %v968
        %2297 = vmatprep.subr.bf16.mxu0 %v965
        %2298 = vmatpush1.bf16.msra.mxu0 %v964
        %2299 = vmatprep.subr.bf16.mxu0 %v961
        %2300 = vmatpush1.bf16.msra.mxu0 %v960
        %2301 = vmatprep.subr.bf16.mxu0 %v957
        %2302 = vmatpush1.bf16.msra.mxu0 %v956
        %2303 = vmatprep.subr.bf16.mxu0 %v953
        %2304 = vmatpush1.bf16.msra.mxu0 %v952
        %2305 = vmatprep.subr.bf16.mxu0 %v949
        %2306 = vmatpush1.bf16.msra.mxu0 %v948
        %2307 = vmatprep.subr.bf16.mxu0 %v945
        %2308 = vmatpush1.bf16.msra.mxu0 %v944
        %2309 = vmatprep.subr.bf16.mxu0 %v941
        %2310 = vmatpush1.bf16.msra.mxu0 %v940
        %2311 = vmatprep.subr.bf16.mxu0 0
        %2312 = vmatpush2.bf16.msra.mxu0 0
        %2313 = vmatprep.subr.bf16.mxu0 0
        %2314 = vmatpush2.bf16.msra.mxu0 0
        %2315 = vmatprep.subr.bf16.mxu0 0
        %2316 = vmatpush2.bf16.msra.mxu0 0
        %2317 = vmatprep.subr.bf16.mxu0 0
        %2318 = vmatpush2.bf16.msra.mxu0 0
        %2319 = vmatprep.subr.bf16.mxu0 0
        %2320 = vmatpush2.bf16.msra.mxu0 0
        %2321 = vmatprep.subr.bf16.mxu0 0
        %2322 = vmatpush2.bf16.msra.mxu0 0
        %2323 = vmatprep.subr.bf16.mxu0 0
        %2324 = vmatpush2.bf16.msra.mxu0 0
        %2325 = vmatprep.subr.bf16.mxu0 0
        %2326 = vmatpush2.bf16.msra.mxu0 0
        %2327 = vmatprep.mubr.bf16.mxu0 0
        %2328 = vmatmul.mubr.bf16.gmra.mxu0 %v2253
        %v2329 = vpop.f32.mrf.mxu0
        %v2330 = vadd.f32 0.0, %v2329
        %v2331 = vpop.f32.mrf.mxu0
        %v2332 = vadd.f32 0.0, %v2331
        %v2333 = vpop.f32.mrf.mxu0
        %v2334 = vpop.f32.mrf.mxu0
        %2335 = vdwg.mxu0
        %v2336 = vadd.f32 %v2249, %v2289
        %v2337 = vadd.f32 %v2250, %v2291
        %v2338 = vadd.f32 %v2251, %v2330
        %v2339 = vadd.f32 %v2252, %v2332
        %v2340 = vxor.u32 %v2336, 2147483648
        %v2341 = vmul.f32 %v2340, 1.442695
        %v2342 = vpow.pop %v2341
        %v2343 = vadd.f32 %v2342, 1.0
        %v2344 = vrcp.pop %v2343
        %v2345 = vmul.f32 1.0, %v2344
        %v2346 = vxor.u32 %v2337, 2147483648
        %v2347 = vmul.f32 %v2346, 1.442695
        %v2348 = vpow.pop %v2347
        %v2349 = vadd.f32 %v2348, 1.0
        %v2350 = vrcp.pop %v2349
        %v2351 = vmul.f32 1.0, %v2350
        %v2352 = vtanh.pop %v2338
        %v2353 = vxor.u32 %v2339, 2147483648
        %v2354 = vmul.f32 %v2353, 1.442695
        %v2355 = vpow.pop %v2354
        %v2356 = vadd.f32 %v2355, 1.0
        %v2357 = vrcp.pop %v2356
        %v2358 = vmul.f32 1.0, %v2357
        %v2359 = vmul.f32 %v2351, %v2052
        %v2360 = vmul.f32 %v2345, %v2352
        %v2361 = vadd.f32 %v2359, %v2360
        %v2362 = vtanh.pop %v2361
        %v2363 = vmul.f32 %v2358, %v2362
        %v2364 = vpack.c.bf16 %v2247, %v2247
        %2365 = vmatprep.subr.bf16.mxu0 %v1238
        %2366 = vmatpush1.bf16.msra.mxu0 %v1237
        %2367 = vmatprep.subr.bf16.mxu0 %v1234
        %2368 = vmatpush1.bf16.msra.mxu0 %v1233
        %2369 = vmatprep.subr.bf16.mxu0 %v1230
        %2370 = vmatpush1.bf16.msra.mxu0 %v1229
        %2371 = vmatprep.subr.bf16.mxu0 %v1226
        %2372 = vmatpush1.bf16.msra.mxu0 %v1225
        %2373 = vmatprep.subr.bf16.mxu0 %v1222
        %2374 = vmatpush1.bf16.msra.mxu0 %v1221
        %2375 = vmatprep.subr.bf16.mxu0 %v1218
        %2376 = vmatpush1.bf16.msra.mxu0 %v1217
        %2377 = vmatprep.subr.bf16.mxu0 %v1214
        %2378 = vmatpush1.bf16.msra.mxu0 %v1213
        %2379 = vmatprep.subr.bf16.mxu0 %v1210
        %2380 = vmatpush1.bf16.msra.mxu0 %v1209
        %2381 = vmatprep.subr.bf16.mxu0 0
        %2382 = vmatpush2.bf16.msra.mxu0 0
        %2383 = vmatprep.subr.bf16.mxu0 0
        %2384 = vmatpush2.bf16.msra.mxu0 0
        %2385 = vmatprep.subr.bf16.mxu0 0
        %2386 = vmatpush2.bf16.msra.mxu0 0
        %2387 = vmatprep.subr.bf16.mxu0 0
        %2388 = vmatpush2.bf16.msra.mxu0 0
        %2389 = vmatprep.subr.bf16.mxu0 0
        %2390 = vmatpush2.bf16.msra.mxu0 0
        %2391 = vmatprep.subr.bf16.mxu0 0
        %2392 = vmatpush2.bf16.msra.mxu0 0
        %2393 = vmatprep.subr.bf16.mxu0 0
        %2394 = vmatpush2.bf16.msra.mxu0 0
        %2395 = vmatprep.subr.bf16.mxu0 0
        %2396 = vmatpush2.bf16.msra.mxu0 0
        %2397 = vmatprep.mubr.bf16.mxu0 0
        %2398 = vmatmul.mubr.bf16.gmra.mxu0 %v2364
        %v2399 = vpop.f32.mrf.mxu0
        %v2400 = vadd.f32 0.0, %v2399
        %v2401 = vpop.f32.mrf.mxu0
        %v2402 = vadd.f32 0.0, %v2401
        %v2403 = vpop.f32.mrf.mxu0
        %v2404 = vpop.f32.mrf.mxu0
        %2405 = vdwg.mxu0
        %2406 = vmatprep.subr.bf16.mxu0 %v1240
        %2407 = vmatpush1.bf16.msra.mxu0 %v1239
        %2408 = vmatprep.subr.bf16.mxu0 %v1236
        %2409 = vmatpush1.bf16.msra.mxu0 %v1235
        %2410 = vmatprep.subr.bf16.mxu0 %v1232
        %2411 = vmatpush1.bf16.msra.mxu0 %v1231
        %2412 = vmatprep.subr.bf16.mxu0 %v1228
        %2413 = vmatpush1.bf16.msra.mxu0 %v1227
        %2414 = vmatprep.subr.bf16.mxu0 %v1224
        %2415 = vmatpush1.bf16.msra.mxu0 %v1223
        %2416 = vmatprep.subr.bf16.mxu0 %v1220
        %2417 = vmatpush1.bf16.msra.mxu0 %v1219
        %2418 = vmatprep.subr.bf16.mxu0 %v1216
        %2419 = vmatpush1.bf16.msra.mxu0 %v1215
        %2420 = vmatprep.subr.bf16.mxu0 %v1212
        %2421 = vmatpush1.bf16.msra.mxu0 %v1211
        %2422 = vmatprep.subr.bf16.mxu0 0
        %2423 = vmatpush2.bf16.msra.mxu0 0
        %2424 = vmatprep.subr.bf16.mxu0 0
        %2425 = vmatpush2.bf16.msra.mxu0 0
        %2426 = vmatprep.subr.bf16.mxu0 0
        %2427 = vmatpush2.bf16.msra.mxu0 0
        %2428 = vmatprep.subr.bf16.mxu0 0
        %2429 = vmatpush2.bf16.msra.mxu0 0
        %2430 = vmatprep.subr.bf16.mxu0 0
        %2431 = vmatpush2.bf16.msra.mxu0 0
        %2432 = vmatprep.subr.bf16.mxu0 0
        %2433 = vmatpush2.bf16.msra.mxu0 0
        %2434 = vmatprep.subr.bf16.mxu0 0
        %2435 = vmatpush2.bf16.msra.mxu0 0
        %2436 = vmatprep.subr.bf16.mxu0 0
        %2437 = vmatpush2.bf16.msra.mxu0 0
        %2438 = vmatprep.mubr.bf16.mxu0 0
        %2439 = vmatmul.mubr.bf16.gmra.mxu0 %v2364
        %v2440 = vpop.f32.mrf.mxu0
        %v2441 = vadd.f32 0.0, %v2440
        %v2442 = vpop.f32.mrf.mxu0
        %v2443 = vadd.f32 0.0, %v2442
        %v2444 = vpop.f32.mrf.mxu0
        %v2445 = vpop.f32.mrf.mxu0
        %2446 = vdwg.mxu0
        %2447 = vmatprep.subr.bf16.mxu0 %v1480
        %2448 = vmatpush1.bf16.msra.mxu0 %v1479
        %2449 = vmatprep.subr.bf16.mxu0 %v1476
        %2450 = vmatpush1.bf16.msra.mxu0 %v1475
        %2451 = vmatprep.subr.bf16.mxu0 %v1472
        %2452 = vmatpush1.bf16.msra.mxu0 %v1471
        %2453 = vmatprep.subr.bf16.mxu0 %v1468
        %2454 = vmatpush1.bf16.msra.mxu0 %v1467
        %2455 = vmatprep.subr.bf16.mxu0 %v1464
        %2456 = vmatpush1.bf16.msra.mxu0 %v1463
        %2457 = vmatprep.subr.bf16.mxu0 %v1460
        %2458 = vmatpush1.bf16.msra.mxu0 %v1459
        %2459 = vmatprep.subr.bf16.mxu0 %v1456
        %2460 = vmatpush1.bf16.msra.mxu0 %v1455
        %2461 = vmatprep.subr.bf16.mxu0 %v1452
        %2462 = vmatpush1.bf16.msra.mxu0 %v1451
        %2463 = vmatprep.subr.bf16.mxu0 0
        %2464 = vmatpush2.bf16.msra.mxu0 0
        %2465 = vmatprep.subr.bf16.mxu0 0
        %2466 = vmatpush2.bf16.msra.mxu0 0
        %2467 = vmatprep.subr.bf16.mxu0 0
        %2468 = vmatpush2.bf16.msra.mxu0 0
        %2469 = vmatprep.subr.bf16.mxu0 0
        %2470 = vmatpush2.bf16.msra.mxu0 0
        %2471 = vmatprep.subr.bf16.mxu0 0
        %2472 = vmatpush2.bf16.msra.mxu0 0
        %2473 = vmatprep.subr.bf16.mxu0 0
        %2474 = vmatpush2.bf16.msra.mxu0 0
        %2475 = vmatprep.subr.bf16.mxu0 0
        %2476 = vmatpush2.bf16.msra.mxu0 0
        %2477 = vmatprep.subr.bf16.mxu0 0
        %2478 = vmatpush2.bf16.msra.mxu0 0
        %2479 = vmatprep.mubr.bf16.mxu0 0
        %2480 = vmatmul.mubr.bf16.gmra.mxu0 %v2253
        %v2481 = vpop.f32.mrf.mxu0
        %v2482 = vadd.f32 %v2400, %v2481
        %v2483 = vpop.f32.mrf.mxu0
        %v2484 = vadd.f32 %v2402, %v2483
        %v2485 = vpop.f32.mrf.mxu0
        %v2486 = vpop.f32.mrf.mxu0
        %2487 = vdwg.mxu0
        %2488 = vmatprep.subr.bf16.mxu0 %v1482
        %2489 = vmatpush1.bf16.msra.mxu0 %v1481
        %2490 = vmatprep.subr.bf16.mxu0 %v1478
        %2491 = vmatpush1.bf16.msra.mxu0 %v1477
        %2492 = vmatprep.subr.bf16.mxu0 %v1474
        %2493 = vmatpush1.bf16.msra.mxu0 %v1473
        %2494 = vmatprep.subr.bf16.mxu0 %v1470
        %2495 = vmatpush1.bf16.msra.mxu0 %v1469
        %2496 = vmatprep.subr.bf16.mxu0 %v1466
        %2497 = vmatpush1.bf16.msra.mxu0 %v1465
        %2498 = vmatprep.subr.bf16.mxu0 %v1462
        %2499 = vmatpush1.bf16.msra.mxu0 %v1461
        %2500 = vmatprep.subr.bf16.mxu0 %v1458
        %2501 = vmatpush1.bf16.msra.mxu0 %v1457
        %2502 = vmatprep.subr.bf16.mxu0 %v1454
        %2503 = vmatpush1.bf16.msra.mxu0 %v1453
        %2504 = vmatprep.subr.bf16.mxu0 0
        %2505 = vmatpush2.bf16.msra.mxu0 0
        %2506 = vmatprep.subr.bf16.mxu0 0
        %2507 = vmatpush2.bf16.msra.mxu0 0
        %2508 = vmatprep.subr.bf16.mxu0 0
        %2509 = vmatpush2.bf16.msra.mxu0 0
        %2510 = vmatprep.subr.bf16.mxu0 0
        %2511 = vmatpush2.bf16.msra.mxu0 0
        %2512 = vmatprep.subr.bf16.mxu0 0
        %2513 = vmatpush2.bf16.msra.mxu0 0
        %2514 = vmatprep.subr.bf16.mxu0 0
        %2515 = vmatpush2.bf16.msra.mxu0 0
        %2516 = vmatprep.subr.bf16.mxu0 0
        %2517 = vmatpush2.bf16.msra.mxu0 0
        %2518 = vmatprep.subr.bf16.mxu0 0
        %2519 = vmatpush2.bf16.msra.mxu0 0
        %2520 = vmatprep.mubr.bf16.mxu0 0
        %2521 = vmatmul.mubr.bf16.gmra.mxu0 %v2253
        %v2522 = vpop.f32.mrf.mxu0
        %v2523 = vadd.f32 %v2441, %v2522
        %v2524 = vpop.f32.mrf.mxu0
        %v2525 = vadd.f32 %v2443, %v2524
        %v2526 = vpop.f32.mrf.mxu0
        %v2527 = vpop.f32.mrf.mxu0
        %2528 = vdwg.mxu0
        %v2529 = vadd.f32 %v2482, %v816
        %v2530 = vadd.f32 %v2484, %v820
        %v2531 = vadd.f32 %v2523, %v824
        %v2532 = vadd.f32 %v2525, %v828
        %v2533 = vxor.u32 %v2529, 2147483648
        %v2534 = vmul.f32 %v2533, 1.442695
        %v2535 = vpow.pop %v2534
        %v2536 = vadd.f32 %v2535, 1.0
        %v2537 = vrcp.pop %v2536
        %v2538 = vmul.f32 1.0, %v2537
        %v2539 = vxor.u32 %v2530, 2147483648
        %v2540 = vmul.f32 %v2539, 1.442695
        %v2541 = vpow.pop %v2540
        %v2542 = vadd.f32 %v2541, 1.0
        %v2543 = vrcp.pop %v2542
        %v2544 = vmul.f32 1.0, %v2543
        %v2545 = vtanh.pop %v2531
        %v2546 = vxor.u32 %v2532, 2147483648
        %v2547 = vmul.f32 %v2546, 1.442695
        %v2548 = vpow.pop %v2547
        %v2549 = vadd.f32 %v2548, 1.0
        %v2550 = vrcp.pop %v2549
        %v2551 = vmul.f32 1.0, %v2550
        %v2552 = vmul.f32 %v2544, %v2245
        %v2553 = vmul.f32 %v2538, %v2545
        %v2554 = vadd.f32 %v2552, %v2553
        %v2555 = vtanh.pop %v2554
        %v2556 = vmul.f32 %v2551, %v2555
        %2557 = vst [vmem:[#allocation2] sm:$0xff] %v2363
        %2558 = vst [vmem:[#allocation3] sm:$0xff] %v2361
        %2559 = vst [vmem:[#allocation4] sm:$0xff] %v2556
        %2560 = vst [vmem:[#allocation5] sm:$0xff] %v2554
        %p2561 = scmp.eq.s32.totalorder %s34, 1
        // Predicated region
        $region97: #{tpu_custom_call.1} parent=63 // pred_check
          %p2562 = pneg %p2561
        $region98: #{tpu_custom_call.1} parent=63 // pred_check_branch
          %2564 = sbr.rel (%p2562) target = $region100
        $region99: #{tpu_custom_call.1} parent=63 // pred_region
          %v2565 = vpack.c.bf16 %v2363, %v2363
          %v2566 = vpack.c.bf16 %v2556, %v2556
          %2567 = vmatprep.subr.bf16.mxu0 %v1238
          %2568 = vmatpush1.bf16.msra.mxu0 %v1237
          %2569 = vmatprep.subr.bf16.mxu0 %v1234
          %2570 = vmatpush1.bf16.msra.mxu0 %v1233
          %2571 = vmatprep.subr.bf16.mxu0 %v1230
          %2572 = vmatpush1.bf16.msra.mxu0 %v1229
          %2573 = vmatprep.subr.bf16.mxu0 %v1226
          %2574 = vmatpush1.bf16.msra.mxu0 %v1225
          %2575 = vmatprep.subr.bf16.mxu0 %v1222
          %2576 = vmatpush1.bf16.msra.mxu0 %v1221
          %2577 = vmatprep.subr.bf16.mxu0 %v1218
          %2578 = vmatpush1.bf16.msra.mxu0 %v1217
          %2579 = vmatprep.subr.bf16.mxu0 %v1214
          %2580 = vmatpush1.bf16.msra.mxu0 %v1213
          %2581 = vmatprep.subr.bf16.mxu0 %v1210
          %2582 = vmatpush1.bf16.msra.mxu0 %v1209
          %2583 = vmatprep.subr.bf16.mxu0 0
          %2584 = vmatpush2.bf16.msra.mxu0 0
          %2585 = vmatprep.subr.bf16.mxu0 0
          %2586 = vmatpush2.bf16.msra.mxu0 0
          %2587 = vmatprep.subr.bf16.mxu0 0
          %2588 = vmatpush2.bf16.msra.mxu0 0
          %2589 = vmatprep.subr.bf16.mxu0 0
          %2590 = vmatpush2.bf16.msra.mxu0 0
          %2591 = vmatprep.subr.bf16.mxu0 0
          %2592 = vmatpush2.bf16.msra.mxu0 0
          %2593 = vmatprep.subr.bf16.mxu0 0
          %2594 = vmatpush2.bf16.msra.mxu0 0
          %2595 = vmatprep.subr.bf16.mxu0 0
          %2596 = vmatpush2.bf16.msra.mxu0 0
          %2597 = vmatprep.subr.bf16.mxu0 0
          %2598 = vmatpush2.bf16.msra.mxu0 0
          %2599 = vmatprep.mubr.bf16.mxu0 0
          %2600 = vmatmul.mubr.bf16.gmra.mxu0 %v2566
          %v2601 = vpop.f32.mrf.mxu0
          %v2602 = vadd.f32 0.0, %v2601
          %v2603 = vpop.f32.mrf.mxu0
          %v2604 = vadd.f32 0.0, %v2603
          %v2605 = vpop.f32.mrf.mxu0
          %v2606 = vpop.f32.mrf.mxu0
          %2607 = vdwg.mxu0
          %2608 = vmatprep.subr.bf16.mxu0 %v1240
          %2609 = vmatpush1.bf16.msra.mxu0 %v1239
          %2610 = vmatprep.subr.bf16.mxu0 %v1236
          %2611 = vmatpush1.bf16.msra.mxu0 %v1235
          %2612 = vmatprep.subr.bf16.mxu0 %v1232
          %2613 = vmatpush1.bf16.msra.mxu0 %v1231
          %2614 = vmatprep.subr.bf16.mxu0 %v1228
          %2615 = vmatpush1.bf16.msra.mxu0 %v1227
          %2616 = vmatprep.subr.bf16.mxu0 %v1224
          %2617 = vmatpush1.bf16.msra.mxu0 %v1223
          %2618 = vmatprep.subr.bf16.mxu0 %v1220
          %2619 = vmatpush1.bf16.msra.mxu0 %v1219
          %2620 = vmatprep.subr.bf16.mxu0 %v1216
          %2621 = vmatpush1.bf16.msra.mxu0 %v1215
          %2622 = vmatprep.subr.bf16.mxu0 %v1212
          %2623 = vmatpush1.bf16.msra.mxu0 %v1211
          %2624 = vmatprep.subr.bf16.mxu0 0
          %2625 = vmatpush2.bf16.msra.mxu0 0
          %2626 = vmatprep.subr.bf16.mxu0 0
          %2627 = vmatpush2.bf16.msra.mxu0 0
          %2628 = vmatprep.subr.bf16.mxu0 0
          %2629 = vmatpush2.bf16.msra.mxu0 0
          %2630 = vmatprep.subr.bf16.mxu0 0
          %2631 = vmatpush2.bf16.msra.mxu0 0
          %2632 = vmatprep.subr.bf16.mxu0 0
          %2633 = vmatpush2.bf16.msra.mxu0 0
          %2634 = vmatprep.subr.bf16.mxu0 0
          %2635 = vmatpush2.bf16.msra.mxu0 0
          %2636 = vmatprep.subr.bf16.mxu0 0
          %2637 = vmatpush2.bf16.msra.mxu0 0
          %2638 = vmatprep.subr.bf16.mxu0 0
          %2639 = vmatpush2.bf16.msra.mxu0 0
          %2640 = vmatprep.mubr.bf16.mxu0 0
          %2641 = vmatmul.mubr.bf16.gmra.mxu0 %v2566
          %v2642 = vpop.f32.mrf.mxu0
          %v2643 = vadd.f32 0.0, %v2642
          %v2644 = vpop.f32.mrf.mxu0
          %v2645 = vadd.f32 0.0, %v2644
          %v2646 = vpop.f32.mrf.mxu0
          %v2647 = vpop.f32.mrf.mxu0
          %2648 = vdwg.mxu0
          %2649 = vmatprep.subr.bf16.mxu0 %v1480
          %2650 = vmatpush1.bf16.msra.mxu0 %v1479
          %2651 = vmatprep.subr.bf16.mxu0 %v1476
          %2652 = vmatpush1.bf16.msra.mxu0 %v1475
          %2653 = vmatprep.subr.bf16.mxu0 %v1472
          %2654 = vmatpush1.bf16.msra.mxu0 %v1471
          %2655 = vmatprep.subr.bf16.mxu0 %v1468
          %2656 = vmatpush1.bf16.msra.mxu0 %v1467
          %2657 = vmatprep.subr.bf16.mxu0 %v1464
          %2658 = vmatpush1.bf16.msra.mxu0 %v1463
          %2659 = vmatprep.subr.bf16.mxu0 %v1460
          %2660 = vmatpush1.bf16.msra.mxu0 %v1459
          %2661 = vmatprep.subr.bf16.mxu0 %v1456
          %2662 = vmatpush1.bf16.msra.mxu0 %v1455
          %2663 = vmatprep.subr.bf16.mxu0 %v1452
          %2664 = vmatpush1.bf16.msra.mxu0 %v1451
          %2665 = vmatprep.subr.bf16.mxu0 0
          %2666 = vmatpush2.bf16.msra.mxu0 0
          %2667 = vmatprep.subr.bf16.mxu0 0
          %2668 = vmatpush2.bf16.msra.mxu0 0
          %2669 = vmatprep.subr.bf16.mxu0 0
          %2670 = vmatpush2.bf16.msra.mxu0 0
          %2671 = vmatprep.subr.bf16.mxu0 0
          %2672 = vmatpush2.bf16.msra.mxu0 0
          %2673 = vmatprep.subr.bf16.mxu0 0
          %2674 = vmatpush2.bf16.msra.mxu0 0
          %2675 = vmatprep.subr.bf16.mxu0 0
          %2676 = vmatpush2.bf16.msra.mxu0 0
          %2677 = vmatprep.subr.bf16.mxu0 0
          %2678 = vmatpush2.bf16.msra.mxu0 0
          %2679 = vmatprep.subr.bf16.mxu0 0
          %2680 = vmatpush2.bf16.msra.mxu0 0
          %2681 = vmatprep.mubr.bf16.mxu0 0
          %2682 = vmatmul.mubr.bf16.gmra.mxu0 %v2565
          %v2683 = vpop.f32.mrf.mxu0
          %v2684 = vadd.f32 %v2602, %v2683
          %v2685 = vpop.f32.mrf.mxu0
          %v2686 = vadd.f32 %v2604, %v2685
          %v2687 = vpop.f32.mrf.mxu0
          %v2688 = vpop.f32.mrf.mxu0
          %2689 = vdwg.mxu0
          %2690 = vmatprep.subr.bf16.mxu0 %v1482
          %2691 = vmatpush1.bf16.msra.mxu0 %v1481
          %2692 = vmatprep.subr.bf16.mxu0 %v1478
          %2693 = vmatpush1.bf16.msra.mxu0 %v1477
          %2694 = vmatprep.subr.bf16.mxu0 %v1474
          %2695 = vmatpush1.bf16.msra.mxu0 %v1473
          %2696 = vmatprep.subr.bf16.mxu0 %v1470
          %2697 = vmatpush1.bf16.msra.mxu0 %v1469
          %2698 = vmatprep.subr.bf16.mxu0 %v1466
          %2699 = vmatpush1.bf16.msra.mxu0 %v1465
          %2700 = vmatprep.subr.bf16.mxu0 %v1462
          %2701 = vmatpush1.bf16.msra.mxu0 %v1461
          %2702 = vmatprep.subr.bf16.mxu0 %v1458
          %2703 = vmatpush1.bf16.msra.mxu0 %v1457
          %2704 = vmatprep.subr.bf16.mxu0 %v1454
          %2705 = vmatpush1.bf16.msra.mxu0 %v1453
          %2706 = vmatprep.subr.bf16.mxu0 0
          %2707 = vmatpush2.bf16.msra.mxu0 0
          %2708 = vmatprep.subr.bf16.mxu0 0
          %2709 = vmatpush2.bf16.msra.mxu0 0
          %2710 = vmatprep.subr.bf16.mxu0 0
          %2711 = vmatpush2.bf16.msra.mxu0 0
          %2712 = vmatprep.subr.bf16.mxu0 0
          %2713 = vmatpush2.bf16.msra.mxu0 0
          %2714 = vmatprep.subr.bf16.mxu0 0
          %2715 = vmatpush2.bf16.msra.mxu0 0
          %2716 = vmatprep.subr.bf16.mxu0 0
          %2717 = vmatpush2.bf16.msra.mxu0 0
          %2718 = vmatprep.subr.bf16.mxu0 0
          %2719 = vmatpush2.bf16.msra.mxu0 0
          %2720 = vmatprep.subr.bf16.mxu0 0
          %2721 = vmatpush2.bf16.msra.mxu0 0
          %2722 = vmatprep.mubr.bf16.mxu0 0
          %2723 = vmatmul.mubr.bf16.gmra.mxu0 %v2565
          %v2724 = vpop.f32.mrf.mxu0
          %v2725 = vadd.f32 %v2643, %v2724
          %v2726 = vpop.f32.mrf.mxu0
          %v2727 = vadd.f32 %v2645, %v2726
          %v2728 = vpop.f32.mrf.mxu0
          %v2729 = vpop.f32.mrf.mxu0
          %2730 = vdwg.mxu0
          %v2731 = vadd.f32 %v2684, %v816
          %v2732 = vadd.f32 %v2686, %v820
          %v2733 = vadd.f32 %v2725, %v824
          %v2734 = vadd.f32 %v2727, %v828
          %v2735 = vxor.u32 %v2731, 2147483648
          %v2736 = vmul.f32 %v2735, 1.442695
          %v2737 = vpow.pop %v2736
          %v2738 = vadd.f32 %v2737, 1.0
          %v2739 = vrcp.pop %v2738
          %v2740 = vmul.f32 1.0, %v2739
          %v2741 = vxor.u32 %v2732, 2147483648
          %v2742 = vmul.f32 %v2741, 1.442695
          %v2743 = vpow.pop %v2742
          %v2744 = vadd.f32 %v2743, 1.0
          %v2745 = vrcp.pop %v2744
          %v2746 = vmul.f32 1.0, %v2745
          %v2747 = vtanh.pop %v2733
          %v2748 = vxor.u32 %v2734, 2147483648
          %v2749 = vmul.f32 %v2748, 1.442695
          %v2750 = vpow.pop %v2749
          %v2751 = vadd.f32 %v2750, 1.0
          %v2752 = vrcp.pop %v2751
          %v2753 = vmul.f32 1.0, %v2752
          %v2754 = vmul.f32 %v2746, %v2554
          %v2755 = vmul.f32 %v2740, %v2747
          %v2756 = vadd.f32 %v2754, %v2755
          %v2757 = vtanh.pop %v2756
          %v2758 = vmul.f32 %v2753, %v2757
          %v2759 = vld [vmem:[#allocation16] sm:$0xff]
          %v2760 = vld [vmem:[#allocation16 + $0x8] sm:$0xff]
          %v2761 = vld [vmem:[#allocation16 + $0x10] sm:$0xff]
          %v2762 = vld [vmem:[#allocation16 + $0x18] sm:$0xff]
          %v2763 = vld [vmem:[#allocation16 + $0x20] sm:$0xff]
          %v2764 = vld [vmem:[#allocation16 + $0x28] sm:$0xff]
          %v2765 = vld [vmem:[#allocation16 + $0x30] sm:$0xff]
          %v2766 = vld [vmem:[#allocation16 + $0x38] sm:$0xff]
          %v2767 = vld [vmem:[#allocation16 + $0x40] sm:$0xff]
          %v2768 = vld [vmem:[#allocation16 + $0x48] sm:$0xff]
          %v2769 = vld [vmem:[#allocation16 + $0x50] sm:$0xff]
          %v2770 = vld [vmem:[#allocation16 + $0x58] sm:$0xff]
          %v2771 = vld [vmem:[#allocation16 + $0x60] sm:$0xff]
          %v2772 = vld [vmem:[#allocation16 + $0x68] sm:$0xff]
          %v2773 = vld [vmem:[#allocation16 + $0x70] sm:$0xff]
          %v2774 = vld [vmem:[#allocation16 + $0x78] sm:$0xff]
          %v2775 = vld [vmem:[%s8] sm:$0x1]
          %v2777 = vlaneseq
          %v2778 = vshrl.u32 %v2777, 7
          %v2779 = vsub.s32 0, %v2778
          %v2780 = vrot.slane %v2775, %v2779
          %2782 = vmatprep.subr.mxu0 0.0
          %2783 = vmatpush1.msra.mxu0 %v2774
          %2784 = vmatprep.subr.mxu0 0.0
          %2785 = vmatpush1.msra.mxu0 %v2773
          %2786 = vmatprep.subr.mxu0 0.0
          %2787 = vmatpush1.msra.mxu0 %v2772
          %2788 = vmatprep.subr.mxu0 0.0
          %2789 = vmatpush1.msra.mxu0 %v2771
          %2790 = vmatprep.subr.mxu0 0.0
          %2791 = vmatpush1.msra.mxu0 %v2770
          %2792 = vmatprep.subr.mxu0 0.0
          %2793 = vmatpush1.msra.mxu0 %v2769
          %2794 = vmatprep.subr.mxu0 0.0
          %2795 = vmatpush1.msra.mxu0 %v2768
          %2796 = vmatprep.subr.mxu0 0.0
          %2797 = vmatpush1.msra.mxu0 %v2767
          %2798 = vmatprep.subr.mxu0 0.0
          %2799 = vmatpush1.msra.mxu0 %v2766
          %2800 = vmatprep.subr.mxu0 0.0
          %2801 = vmatpush1.msra.mxu0 %v2765
          %2802 = vmatprep.subr.mxu0 0.0
          %2803 = vmatpush1.msra.mxu0 %v2764
          %2804 = vmatprep.subr.mxu0 0.0
          %2805 = vmatpush1.msra.mxu0 %v2763
          %2806 = vmatprep.subr.mxu0 0.0
          %2807 = vmatpush1.msra.mxu0 %v2762
          %2808 = vmatprep.subr.mxu0 0.0
          %2809 = vmatpush1.msra.mxu0 %v2761
          %2810 = vmatprep.subr.mxu0 0.0
          %2811 = vmatpush1.msra.mxu0 %v2760
          %2812 = vmatprep.subr.mxu0 0.0
          %2813 = vmatpush1.msra.mxu0 %v2759
          %2814 = vmatprep.subr.mxu0 0.0
          %2815 = vmatpush2.msra.mxu0 0.0
          %2816 = vmatprep.subr.mxu0 0.0
          %2817 = vmatpush2.msra.mxu0 0.0
          %2818 = vmatprep.subr.mxu0 0.0
          %2819 = vmatpush2.msra.mxu0 0.0
          %2820 = vmatprep.subr.mxu0 0.0
          %2821 = vmatpush2.msra.mxu0 0.0
          %2822 = vmatprep.subr.mxu0 0.0
          %2823 = vmatpush2.msra.mxu0 0.0
          %2824 = vmatprep.subr.mxu0 0.0
          %2825 = vmatpush2.msra.mxu0 0.0
          %2826 = vmatprep.subr.mxu0 0.0
          %2827 = vmatpush2.msra.mxu0 0.0
          %2828 = vmatprep.subr.mxu0 0.0
          %2829 = vmatpush2.msra.mxu0 0.0
          %2830 = vmatprep.subr.mxu0 0.0
          %2831 = vmatpush2.msra.mxu0 0.0
          %2832 = vmatprep.subr.mxu0 0.0
          %2833 = vmatpush2.msra.mxu0 0.0
          %2834 = vmatprep.subr.mxu0 0.0
          %2835 = vmatpush2.msra.mxu0 0.0
          %2836 = vmatprep.subr.mxu0 0.0
          %2837 = vmatpush2.msra.mxu0 0.0
          %2838 = vmatprep.subr.mxu0 0.0
          %2839 = vmatpush2.msra.mxu0 0.0
          %2840 = vmatprep.subr.mxu0 0.0
          %2841 = vmatpush2.msra.mxu0 0.0
          %2842 = vmatprep.subr.mxu0 0.0
          %2843 = vmatpush2.msra.mxu0 0.0
          %2844 = vmatprep.subr.mxu0 0.0
          %2845 = vmatpush2.msra.mxu0 0.0
          %2846 = vmatprep.mubr.f32.mxu0 0.0
          %2847 = vmatmul.mubr.f32.gmra.mxu0 %v2758
          %v2848 = vpop.f32.mrf.mxu0
          %v2849 = vadd.f32 %v2780, %v2848
          %v2850 = vpop.f32.mrf.mxu0
          %2851 = vdwg.mxu0
          %v2852 = vmax.f32 %v2849, 0.0
          %v2853 = vld [vmem:[#allocation18] sm:$0xff]
          %v2854 = vld [vmem:[#allocation18 + $0x8] sm:$0xff]
          %v2855 = vld [vmem:[#allocation18 + $0x10] sm:$0xff]
          %v2856 = vld [vmem:[#allocation18 + $0x18] sm:$0xff]
          %v2857 = vld [vmem:[#allocation18 + $0x20] sm:$0xff]
          %v2858 = vld [vmem:[#allocation18 + $0x28] sm:$0xff]
          %v2859 = vld [vmem:[#allocation18 + $0x30] sm:$0xff]
          %v2860 = vld [vmem:[#allocation18 + $0x38] sm:$0xff]
          %v2861 = vld [vmem:[#allocation18 + $0x40] sm:$0xff]
          %v2862 = vld [vmem:[#allocation18 + $0x48] sm:$0xff]
          %v2863 = vld [vmem:[#allocation18 + $0x50] sm:$0xff]
          %v2864 = vld [vmem:[#allocation18 + $0x58] sm:$0xff]
          %v2865 = vld [vmem:[#allocation18 + $0x60] sm:$0xff]
          %v2866 = vld [vmem:[#allocation18 + $0x68] sm:$0xff]
          %v2867 = vld [vmem:[#allocation18 + $0x70] sm:$0xff]
          %v2868 = vld [vmem:[#allocation18 + $0x78] sm:$0xff]
          %v2869 = vld [vmem:[%s10] sm:$0x1]
          %v2871 = vlaneseq
          %v2872 = vshrl.u32 %v2871, 7
          %v2873 = vsub.s32 0, %v2872
          %v2874 = vrot.slane %v2869, %v2873
          %2876 = vmatprep.subr.mxu0 0.0
          %2877 = vmatpush1.msra.mxu0 %v2868
          %2878 = vmatprep.subr.mxu0 0.0
          %2879 = vmatpush1.msra.mxu0 %v2867
          %2880 = vmatprep.subr.mxu0 0.0
          %2881 = vmatpush1.msra.mxu0 %v2866
          %2882 = vmatprep.subr.mxu0 0.0
          %2883 = vmatpush1.msra.mxu0 %v2865
          %2884 = vmatprep.subr.mxu0 0.0
          %2885 = vmatpush1.msra.mxu0 %v2864
          %2886 = vmatprep.subr.mxu0 0.0
          %2887 = vmatpush1.msra.mxu0 %v2863
          %2888 = vmatprep.subr.mxu0 0.0
          %2889 = vmatpush1.msra.mxu0 %v2862
          %2890 = vmatprep.subr.mxu0 0.0
          %2891 = vmatpush1.msra.mxu0 %v2861
          %2892 = vmatprep.subr.mxu0 0.0
          %2893 = vmatpush1.msra.mxu0 %v2860
          %2894 = vmatprep.subr.mxu0 0.0
          %2895 = vmatpush1.msra.mxu0 %v2859
          %2896 = vmatprep.subr.mxu0 0.0
          %2897 = vmatpush1.msra.mxu0 %v2858
          %2898 = vmatprep.subr.mxu0 0.0
          %2899 = vmatpush1.msra.mxu0 %v2857
          %2900 = vmatprep.subr.mxu0 0.0
          %2901 = vmatpush1.msra.mxu0 %v2856
          %2902 = vmatprep.subr.mxu0 0.0
          %2903 = vmatpush1.msra.mxu0 %v2855
          %2904 = vmatprep.subr.mxu0 0.0
          %2905 = vmatpush1.msra.mxu0 %v2854
          %2906 = vmatprep.subr.mxu0 0.0
          %2907 = vmatpush1.msra.mxu0 %v2853
          %2908 = vmatprep.subr.mxu0 0.0
          %2909 = vmatpush2.msra.mxu0 0.0
          %2910 = vmatprep.subr.mxu0 0.0
          %2911 = vmatpush2.msra.mxu0 0.0
          %2912 = vmatprep.subr.mxu0 0.0
          %2913 = vmatpush2.msra.mxu0 0.0
          %2914 = vmatprep.subr.mxu0 0.0
          %2915 = vmatpush2.msra.mxu0 0.0
          %2916 = vmatprep.subr.mxu0 0.0
          %2917 = vmatpush2.msra.mxu0 0.0
          %2918 = vmatprep.subr.mxu0 0.0
          %2919 = vmatpush2.msra.mxu0 0.0
          %2920 = vmatprep.subr.mxu0 0.0
          %2921 = vmatpush2.msra.mxu0 0.0
          %2922 = vmatprep.subr.mxu0 0.0
          %2923 = vmatpush2.msra.mxu0 0.0
          %2924 = vmatprep.subr.mxu0 0.0
          %2925 = vmatpush2.msra.mxu0 0.0
          %2926 = vmatprep.subr.mxu0 0.0
          %2927 = vmatpush2.msra.mxu0 0.0
          %2928 = vmatprep.subr.mxu0 0.0
          %2929 = vmatpush2.msra.mxu0 0.0
          %2930 = vmatprep.subr.mxu0 0.0
          %2931 = vmatpush2.msra.mxu0 0.0
          %2932 = vmatprep.subr.mxu0 0.0
          %2933 = vmatpush2.msra.mxu0 0.0
          %2934 = vmatprep.subr.mxu0 0.0
          %2935 = vmatpush2.msra.mxu0 0.0
          %2936 = vmatprep.subr.mxu0 0.0
          %2937 = vmatpush2.msra.mxu0 0.0
          %2938 = vmatprep.subr.mxu0 0.0
          %2939 = vmatpush2.msra.mxu0 0.0
          %2940 = vmatprep.mubr.f32.mxu0 0.0
          %2941 = vmatmul.mubr.f32.gmra.mxu0 %v2852
          %v2942 = vpop.f32.mrf.mxu0
          %v2943 = vadd.f32 %v2874, %v2942
          %v2944 = vpop.f32.mrf.mxu0
          %2945 = vdwg.mxu0
          %2946 = vst [vmem:[#allocation19] sm:$0xff] %v2943
        $region100: #{tpu_custom_call.1} parent=63 // pred_fallthru
          _
        // Predicated region
        $region101: #{tpu_custom_call.1} parent=63 // pred_check
          %p2947 = pneg %p297
        $region102: #{tpu_custom_call.1} parent=63 // pred_check_branch
          %2949 = sbr.rel (%p2947) target = $region104
        $region103: #{tpu_custom_call.1} parent=63 // pred_region
          %s2951 = ssub.s32 128, 128
          %2952 = vsyncadd [#allocation9], %s2951
          %s2953 = smul.addr %s33, 128
          %s2954 = scalar_lea.hbm %s11, %s2953
          %s2956 = sshll.u32 [#allocation19], 4
          %s2957 = int_to_ptr.vmem [resolvable:$true] %s2956
          %2959 = dma.vmem_to_hbm [thread:$0]  %s2957, 128, %s2954, [#allocation9]
        $region104: #{tpu_custom_call.1} parent=63 // pred_fallthru
          _
        // Predicated region
        $region105: #{tpu_custom_call.1} parent=63 // pred_check
          %p2960 = pneg %p297
        $region106: #{tpu_custom_call.1} parent=63 // pred_check_branch
          %2962 = sbr.rel (%p2960) target = $region108
        $region107: #{tpu_custom_call.1} parent=63 // pred_region
          %2963 = dma.done [#allocation9], 128
        $region108: #{tpu_custom_call.1} parent=63 // pred_fallthru
          _
      $region64: #{tpu_custom_call.1} parent=5 // pred_fallthru
        _
      %p2964 = scmp.le.s32.totalorder 2, %s24
      // Predicated region
      $region109: #{tpu_custom_call.1} parent=5 // pred_check
        %p2965 = pneg %p2964
      $region110: #{tpu_custom_call.1} parent=5 // pred_check_branch
        %2967 = sbr.rel (%p2965) target = $region112
      $region111: #{tpu_custom_call.1} parent=5 // pred_region
        %s2968 = ssub.s32 %s24, 2
      $region112: #{tpu_custom_call.1} parent=5 // pred_fallthru
        _
    $region6: #{tpu_custom_call.1} parent=1 // loop_footer
      %s28 = sadd.s32 1, %s24
    $region7: #{tpu_custom_call.1} parent=1 // loop_footer_branch
      %23 = sbr.rel target = $region3
    $region8: #{tpu_custom_call.1} parent=1 // loop_exit
      _
    %2969 = vsyncpa [#allocation8], 1
    %s2970 = scalar_lea.sflag [#allocation8], 1
    %2971 = vsyncpa %s2970, 1
    %2972 = vsyncpa [#allocation11], 1
    %2973 = vsyncpa [#allocation14], 1
    %2974 = vsyncpa [#allocation17], 1
    %2975 = vsyncpa [#allocation9], 1
    %s2976 = scalar_lea.sflag [#allocation9], 1
    %2977 = vsyncpa %s2976, 1

</llo_original>
